<compile_context>
chip_gen: v7x
topology: tpu7x:2x2x1
jax: 0.10.0
libtpu: 0.0.40
codegen_flags: <defaults>
</compile_context>

<pallas_src>
import functools

import jax
import jax.numpy as jnp
import numpy as np
from jax.experimental import pallas as pl
from jax.experimental.pallas import tpu as pltpu

LANE = 128                      # lane width / channel tile
MXU_DTYPE = jnp.bfloat16        # MXU operand dtype (f32 accumulation everywhere)


def _round_up(x, m):
    return (x + m - 1) // m * m


def _pad_to(x, target, axis):
    pad = [(0, 0)] * x.ndim
    pad[axis] = (0, target - x.shape[axis])
    return jnp.pad(x, pad)


def _compiler_params(n_axes):
    # Tiles here are tiny (<1 MiB double-buffered); 32 MiB scoped VMEM leaves ample
    # headroom even on v7x (64 MiB physical).
    return pltpu.CompilerParams(
        dimension_semantics=("parallel",) * n_axes,
        vmem_limit_bytes=32 * 1024 * 1024,
    )


def fold_bn(gamma, beta, mean, var, eps=1e-5):
    scale = gamma / jnp.sqrt(var + eps)
    bias = beta - mean * scale
    return scale, bias


# ------------------------- kernel 1: bn1 + relu + spatial pad -------------------------

def _bn_relu_pad_kernel(x_ref, scale_ref, bias_ref, o_ref):
    # x: (1, H, W, C) f32 ; scale/bias: (1, C) f32 ; out: (1, H+2, W+2, C) bf16
    H, W = x_ref.shape[1], x_ref.shape[2]
    y = jnp.maximum(x_ref[0] * scale_ref[...] + bias_ref[...], 0.0)
    o_ref[...] = jnp.zeros(o_ref.shape, o_ref.dtype)          # zero halo for the conv
    o_ref[0, 1:H + 1, 1:W + 1, :] = y.astype(o_ref.dtype)


def bn_relu_pad(x_p, scale, bias):
    N, H, W, C = x_p.shape
    return pl.pallas_call(
        _bn_relu_pad_kernel,
        out_shape=jax.ShapeDtypeStruct((N, H + 2, W + 2, C), MXU_DTYPE),
        grid=(N,),
        in_specs=[
            pl.BlockSpec((1, H, W, C), lambda n: (n, 0, 0, 0)),
            pl.BlockSpec((1, C), lambda n: (0, 0)),
            pl.BlockSpec((1, C), lambda n: (0, 0)),
        ],
        out_specs=pl.BlockSpec((1, H + 2, W + 2, C), lambda n: (n, 0, 0, 0)),
        compiler_params=_compiler_params(1),
    )(x_p, scale.reshape(1, C), bias.reshape(1, C))


# ------------------------- phase folding (wrapper-side, cheap) -------------------------

def fold_phases(act_p, stride, Ho, Wo):
    """Repack a spatially padded NHWC activation so every 3x3/stride tap becomes a
    contiguous slice.  Phase (a, b) (row/col parity) is stacked along H; each phase
    has eh = Ho + 2//stride rows and ew = Wo + 2//stride cols.  ~1x repack for
    stride=2, a no-op for stride=1 (vs. a 9x materialized im2col)."""
    if stride == 1:
        return act_p
    s = stride
    eh, ew = Ho + 2 // s, Wo + 2 // s
    parts = []
    for a in range(s):
        for b in range(s):
            parts.append(act_p[:, a:a + s * eh:s, b:b + s * ew:s, :])
    return jnp.concatenate(parts, axis=1)


# ------------------------- kernel 2: conv1 (3x3/stride) + bn2 + relu -------------------------

def conv3x3_bn_relu_pad(phases, w, scale, bias, *, N, Ho, Wo, stride, tn=LANE):
    """out[n, 1+ho, 1+wo, co] = relu(bn2(conv3x3_stride(act1)))  with a zero spatial
    halo (so conv2 needs no extra padding pass).  9 taps = 9 MXU dots per grid step."""
    _, PH, PW, Cin_p = phases.shape
    Cout_p = w.shape[-1]
    s = stride
    eh = Ho + 2 // s

    def kernel(ph_ref, w_ref, sc_ref, bi_ref, o_ref):
        acc = jnp.zeros((Ho * Wo, tn), jnp.float32)
        for dy in range(3):
            for dx in range(3):
                pi = (dy % s) * s + (dx % s)         # which phase (row/col parity)
                r0 = pi * eh + dy // s
                c0 = dx // s
                a = ph_ref[0, r0:r0 + Ho, c0:c0 + Wo, :].reshape(Ho * Wo, Cin_p)
                acc = acc + jnp.dot(a, w_ref[dy, dx],
                                    preferred_element_type=jnp.float32)
        y = jnp.maximum(acc * sc_ref[...] + bi_ref[...], 0.0)   # f32 epilogue
        o_ref[...] = jnp.zeros(o_ref.shape, o_ref.dtype)
        o_ref[0, 1:Ho + 1, 1:Wo + 1, :] = y.reshape(Ho, Wo, tn).astype(o_ref.dtype)

    return pl.pallas_call(
        kernel,
        out_shape=jax.ShapeDtypeStruct((N, Ho + 2, Wo + 2, Cout_p), MXU_DTYPE),
        grid=(N, Cout_p // tn),
        in_specs=[
            pl.BlockSpec((1, PH, PW, Cin_p), lambda n, j: (n, 0, 0, 0)),
            pl.BlockSpec((3, 3, Cin_p, tn), lambda n, j: (0, 0, 0, j)),
            pl.BlockSpec((1, tn), lambda n, j: (0, j)),
            pl.BlockSpec((1, tn), lambda n, j: (0, j)),
        ],
        out_specs=pl.BlockSpec((1, Ho + 2, Wo + 2, tn), lambda n, j: (n, 0, 0, j)),
        compiler_params=_compiler_params(2),
    )(phases, w, scale.reshape(1, Cout_p), bias.reshape(1, Cout_p))


# ------------------------- kernel 3: conv2 (3x3/1) + shortcut + residual add -------------------------

def conv3x3_residual(a2_p, w2, res_in, w_sc, *, N, Ho, Wo, res_stride, projection,
                     tn=LANE):
    """Final conv of the block.  Epilogue fuses the shortcut:
       - projection: 1x1/stride conv of act1 (read from the already-built phase tensor
         at the centre tap) with w_sc, added on the MXU accumulator.
       - identity:   pre-BN x tile added directly."""
    C2p = a2_p.shape[-1]
    Cout_p = w2.shape[-1]

    if projection:
        s1 = res_stride
        eh1 = Ho + 2 // s1
        Cin_p = res_in.shape[-1]
        PH1, PW1 = res_in.shape[1], res_in.shape[2]
        pi_c = (1 % s1) * s1 + (1 % s1)              # centre tap (dy=dx=1) phase
        r0_c = pi_c * eh1 + 1 // s1
        c0_c = 1 // s1

        def kernel(a2_ref, w2_ref, ph1_ref, wsc_ref, o_ref):
            acc = jnp.zeros((Ho * Wo, tn), jnp.float32)
            for dy in range(3):
                for dx in range(3):
                    a = a2_ref[0, dy:dy + Ho, dx:dx + Wo, :].reshape(Ho * Wo, C2p)
                    acc = acc + jnp.dot(a, w2_ref[dy, dx],
                                        preferred_element_type=jnp.float32)
            sc = ph1_ref[0, r0_c:r0_c + Ho, c0_c:c0_c + Wo, :].reshape(Ho * Wo, Cin_p)
            acc = acc + jnp.dot(sc, wsc_ref[...], preferred_element_type=jnp.float32)
            o_ref[0] = acc.reshape(Ho, Wo, tn).astype(o_ref.dtype)

        in_specs = [
            pl.BlockSpec((1, Ho + 2, Wo + 2, C2p), lambda n, j: (n, 0, 0, 0)),
            pl.BlockSpec((3, 3, C2p, tn), lambda n, j: (0, 0, 0, j)),
            pl.BlockSpec((1, PH1, PW1, Cin_p), lambda n, j: (n, 0, 0, 0)),
            pl.BlockSpec((Cin_p, tn), lambda n, j: (0, j)),
        ]
        operands = (a2_p, w2, res_in, w_sc)
    else:
        def kernel(a2_ref, w2_ref, x_ref, o_ref):
            acc = jnp.zeros((Ho * Wo, tn), jnp.float32)
            for dy in range(3):
                for dx in range(3):
                    a = a2_ref[0, dy:dy + Ho, dx:dx + Wo, :].reshape(Ho * Wo, C2p)
                    acc = acc + jnp.dot(a, w2_ref[dy, dx],
                                        preferred_element_type=jnp.float32)
            out = acc.reshape(Ho, Wo, tn) + x_ref[0].astype(jnp.float32)
            o_ref[0] = out.astype(o_ref.dtype)

        in_specs = [
            pl.BlockSpec((1, Ho + 2, Wo + 2, C2p), lambda n, j: (n, 0, 0, 0)),
            pl.BlockSpec((3, 3, C2p, tn), lambda n, j: (0, 0, 0, j)),
            pl.BlockSpec((1, Ho, Wo, tn), lambda n, j: (n, 0, 0, j)),
        ]
        operands = (a2_p, w2, res_in)

    return pl.pallas_call(
        kernel,
        out_shape=jax.ShapeDtypeStruct((N, Ho, Wo, Cout_p), jnp.float32),
        grid=(N, Cout_p // tn),
        in_specs=in_specs,
        out_specs=pl.BlockSpec((1, Ho, Wo, tn), lambda n, j: (n, 0, 0, j)),
        compiler_params=_compiler_params(2),
    )(*operands)


# ------------------------- block forward -------------------------

@functools.partial(jax.jit, static_argnums=(2,))
def preact_block_forward(x_nchw, params, stride):
    x = jnp.transpose(x_nchw, (0, 2, 3, 1)).astype(jnp.float32)   # -> NHWC
    N, H, W, Cin = x.shape
    Cout = params["w1"].shape[0]
    assert H % stride == 0 and W % stride == 0
    Ho, Wo = H // stride, W // stride

    Cin_p = max(LANE, _round_up(Cin, LANE))
    Cout_p = max(LANE, _round_up(Cout, LANE))

    # fold BN (eval mode: running stats), zero-pad channels to the 128-lane width
    s1, b1 = fold_bn(params["bn1_gamma"], params["bn1_beta"],
                     params["bn1_mean"], params["bn1_var"])
    s2, b2 = fold_bn(params["bn2_gamma"], params["bn2_beta"],
                     params["bn2_mean"], params["bn2_var"])
    s1, b1 = _pad_to(s1, Cin_p, 0), _pad_to(b1, Cin_p, 0)
    s2, b2 = _pad_to(s2, Cout_p, 0), _pad_to(b2, Cout_p, 0)

    # weights: OIHW -> (kh, kw, Cin_p, Cout_p), zero-padded channels, bf16 MXU operands
    w1 = jnp.transpose(params["w1"], (2, 3, 1, 0))
    w1 = _pad_to(_pad_to(w1, Cin_p, 2), Cout_p, 3).astype(MXU_DTYPE)
    w2 = jnp.transpose(params["w2"], (2, 3, 1, 0))
    w2 = _pad_to(_pad_to(w2, Cout_p, 2), Cout_p, 3).astype(MXU_DTYPE)

    x_p = _pad_to(x, Cin_p, 3)                                    # (N,H,W,Cin_p) f32

    # act1 = relu(bn1(x)), written once (bf16) with its zero conv halo
    act1_p = bn_relu_pad(x_p, s1, b1)                             # (N,H+2,W+2,Cin_p)

    # conv1 (3x3, stride) with bn2+relu epilogue; emits act2 already spatially padded
    ph1 = fold_phases(act1_p, stride, Ho, Wo)
    act2_p = conv3x3_bn_relu_pad(ph1, w1, s2, b2,
                                 N=N, Ho=Ho, Wo=Wo, stride=stride)

    # conv2 (3x3, stride 1) with the shortcut + residual add fused into the epilogue
    projection = (stride != 1) or (Cin != Cout)
    if projection:
        w_sc = params["w_sc"][:, :, 0, 0].T                       # (Cin, Cout)
        w_sc = _pad_to(_pad_to(w_sc, Cin_p, 0), Cout_p, 1).astype(MXU_DTYPE)
        out = conv3x3_residual(act2_p, w2, ph1, w_sc, N=N, Ho=Ho, Wo=Wo,
                               res_stride=stride, projection=True)
    else:
        x_res = _pad_to(x, Cout_p, 3)                             # identity uses pre-BN x
        out = conv3x3_residual(act2_p, w2, x_res, None, N=N, Ho=Ho, Wo=Wo,
                               res_stride=1, projection=False)
    # TODO(synk): DropPath_ is training-only stochastic depth; eval forward is a no-op.

    out = out[..., :Cout]
    return jnp.transpose(out, (0, 3, 1, 2))                       # back to NCHW


# ------------------------- pure-JAX reference -------------------------

def _conv_ref(x_nhwc, w_oihw, stride, pad):
    return jax.lax.conv_general_dilated(
        x_nhwc, jnp.transpose(w_oihw, (2, 3, 1, 0)),
        window_strides=(stride, stride), padding=((pad, pad), (pad, pad)),
        dimension_numbers=("NHWC", "HWIO", "NHWC"),
        precision=jax.lax.Precision.HIGHEST)


def preact_block_reference(x_nchw, params, stride):
    x = jnp.transpose(x_nchw, (0, 2, 3, 1)).astype(jnp.float32)
    Cin = x.shape[-1]
    Cout = params["w1"].shape[0]
    s1, b1 = fold_bn(params["bn1_gamma"], params["bn1_beta"],
                     params["bn1_mean"], params["bn1_var"])
    act1 = jnp.maximum(x * s1 + b1, 0.0)
    if stride != 1 or Cin != Cout:
        shortcut = _conv_ref(act1, params["w_sc"], stride, 0)
    else:
        shortcut = x
    out = _conv_ref(act1, params["w1"], stride, 1)
    s2, b2 = fold_bn(params["bn2_gamma"], params["bn2_beta"],
                     params["bn2_mean"], params["bn2_var"])
    out = _conv_ref(jnp.maximum(out * s2 + b2, 0.0), params["w2"], 1, 1)
    return jnp.transpose(out + shortcut, (0, 3, 1, 2))


# ------------------------- main -------------------------

def _make_params(key, in_planes, planes):
    ks = jax.random.split(key, 11)
    return {
        "w1":  0.1 * jax.random.normal(ks[0], (planes, in_planes, 3, 3), jnp.float32),
        "w2":  0.1 * jax.random.normal(ks[1], (planes, planes, 3, 3), jnp.float32),
        "w_sc": 0.1 * jax.random.normal(ks[2], (planes, in_planes, 1, 1), jnp.float32),
        "bn1_gamma": jax.random.uniform(ks[3], (in_planes,), jnp.float32, 0.5, 1.5),
        "bn1_beta":  0.1 * jax.random.normal(ks[4], (in_planes,), jnp.float32),
        "bn1_mean":  0.1 * jax.random.normal(ks[5], (in_planes,), jnp.float32),
        "bn1_var":   jax.random.uniform(ks[6], (in_planes,), jnp.float32, 0.5, 1.5),
        "bn2_gamma": jax.random.uniform(ks[7], (planes,), jnp.float32, 0.5, 1.5),
        "bn2_beta":  0.1 * jax.random.normal(ks[8], (planes,), jnp.float32),
        "bn2_mean":  0.1 * jax.random.normal(ks[9], (planes,), jnp.float32),
        "bn2_var":   jax.random.uniform(ks[10], (planes,), jnp.float32, 0.5, 1.5),
    }


def _run_case(key, N, in_planes, planes, stride, H, W):
    kp, kx = jax.random.split(key)
    params = _make_params(kp, in_planes, planes)
    x = jax.random.normal(kx, (N, in_planes, H, W), jnp.float32)   # NCHW like PyTorch
    out = jax.block_until_ready(preact_block_forward(x, params, stride))
    ref = jax.block_until_ready(preact_block_reference(x, params, stride))
    assert out.shape == (N, planes, H // stride, W // stride), out.shape
    np.testing.assert_allclose(np.asarray(out), np.asarray(ref), rtol=1e-2, atol=1e-2)


if __name__ == "__main__":
    key = jax.random.PRNGKey(0)
    k1, k2 = jax.random.split(key)
    # main case: downsampling block with 1x1 projection shortcut
    _run_case(k1, N=2, in_planes=4, planes=8, stride=2, H=16, W=16)
    # identity-shortcut case (stride 1, in_planes == planes)
    _run_case(k2, N=2, in_planes=8, planes=8, stride=1, H=16, W=16)
    print("KERNEL_OK")
</pallas_src>

<mosaic_0001>
module attributes {stable_mosaic.version = 11 : i64} {
  func.func @_bn_relu_pad_kernel(%arg0: i32, %arg1: memref<1x16x16x128xf32, #tpu.memory_space<vmem>>, %arg2: memref<1x128xf32, #tpu.memory_space<vmem>>, %arg3: memref<1x128xf32, #tpu.memory_space<vmem>>, %arg4: memref<1x18x18x128xbf16, #tpu.memory_space<vmem>>) attributes {dimension_semantics = [#tpu.dimension_semantics<parallel>], iteration_bounds = array<i64: 2>, scalar_prefetch = 0 : i64, scratch_operands = 0 : i64, tpu.core_type = #tpu.core_type<tc>, window_params = [{transform_indices = @transform_0, window_bounds = array<i64: 1, 16, 16, 128>}, {pipeline_mode = #tpu.pipeline_mode<synchronous>, transform_indices = @transform_1, window_bounds = array<i64: 1, 128>}, {pipeline_mode = #tpu.pipeline_mode<synchronous>, transform_indices = @transform_2, window_bounds = array<i64: 1, 128>}, {transform_indices = @transform_3, window_bounds = array<i64: 1, 18, 18, 128>}]} {
    %c0 = arith.constant 0 : index
    %c0_0 = arith.constant 0 : index
    %c0_1 = arith.constant 0 : index
    %c0_2 = arith.constant 0 : index
    %0 = vector.load %arg1[%c0, %c0_0, %c0_1, %c0_2] : memref<1x16x16x128xf32, #tpu.memory_space<vmem>>, vector<1x16x16x128xf32>
    %1 = vector.shape_cast %0 : vector<1x16x16x128xf32> to vector<16x16x128xf32>
    %c0_3 = arith.constant 0 : index
    %c0_4 = arith.constant 0 : index
    %2 = vector.load %arg2[%c0_3, %c0_4] : memref<1x128xf32, #tpu.memory_space<vmem>>, vector<1x128xf32>
    %3 = vector.shape_cast %2 : vector<1x128xf32> to vector<1x1x128xf32>
    %4 = vector.broadcast %3 : vector<1x1x128xf32> to vector<16x16x128xf32>
    %5 = arith.mulf %1, %4 : vector<16x16x128xf32>
    %c0_5 = arith.constant 0 : index
    %c0_6 = arith.constant 0 : index
    %6 = vector.load %arg3[%c0_5, %c0_6] : memref<1x128xf32, #tpu.memory_space<vmem>>, vector<1x128xf32>
    %7 = vector.shape_cast %6 : vector<1x128xf32> to vector<1x1x128xf32>
    %8 = vector.broadcast %7 : vector<1x1x128xf32> to vector<16x16x128xf32>
    %9 = arith.addf %5, %8 : vector<16x16x128xf32>
    %cst = arith.constant 0.000000e+00 : f32
    %10 = vector.broadcast %cst : f32 to vector<16x16x128xf32>
    %11 = arith.maximumf %9, %10 : vector<16x16x128xf32>
    %cst_7 = arith.constant 0.000000e+00 : bf16
    %12 = vector.broadcast %cst_7 : bf16 to vector<1x18x18x128xbf16>
    %c0_8 = arith.constant 0 : index
    %c0_9 = arith.constant 0 : index
    %c0_10 = arith.constant 0 : index
    %c0_11 = arith.constant 0 : index
    %13 = vector.load %arg4[%c0_8, %c0_9, %c0_10, %c0_11] : memref<1x18x18x128xbf16, #tpu.memory_space<vmem>>, vector<1x18x18x128xbf16>
    tpu.vector_store %arg4[%c0_8, %c0_9, %c0_10, %c0_11], %12 {strides = array<i32>} : memref<1x18x18x128xbf16, #tpu.memory_space<vmem>>, vector<1x18x18x128xbf16>,
    %14 = arith.truncf %11 : vector<16x16x128xf32> to vector<16x16x128xbf16>
    %c0_12 = arith.constant 0 : index
    %c1 = arith.constant 1 : index
    %c1_13 = arith.constant 1 : index
    %c0_14 = arith.constant 0 : index
    %15 = vector.load %arg4[%c0_12, %c1, %c1_13, %c0_14] : memref<1x18x18x128xbf16, #tpu.memory_space<vmem>>, vector<1x16x16x128xbf16>
    %16 = vector.shape_cast %15 : vector<1x16x16x128xbf16> to vector<16x16x128xbf16>
    %17 = vector.shape_cast %14 : vector<16x16x128xbf16> to vector<1x16x16x128xbf16>
    tpu.vector_store %arg4[%c0_12, %c1, %c1_13, %c0_14], %17 {strides = array<i32>} : memref<1x18x18x128xbf16, #tpu.memory_space<vmem>>, vector<1x16x16x128xbf16>,
    return
  }
  func.func @transform_0(%arg0: i32) -> (i32, i32, i32, i32) {
    %c0_i32 = arith.constant 0 : i32
    %c0_i32_0 = arith.constant 0 : i32
    %c0_i32_1 = arith.constant 0 : i32
    %c0_i32_2 = arith.constant 0 : i32
    return %arg0, %c0_i32, %c0_i32_0, %c0_i32_1 : i32, i32, i32, i32
  }
  func.func @transform_1(%arg0: i32) -> (i32, i32) {
    %c0_i32 = arith.constant 0 : i32
    %c0_i32_0 = arith.constant 0 : i32
    %c0_i32_1 = arith.constant 0 : i32
    return %c0_i32, %c0_i32_0 : i32, i32
  }
  func.func @transform_2(%arg0: i32) -> (i32, i32) {
    %c0_i32 = arith.constant 0 : i32
    %c0_i32_0 = arith.constant 0 : i32
    %c0_i32_1 = arith.constant 0 : i32
    return %c0_i32, %c0_i32_0 : i32, i32
  }
  func.func @transform_3(%arg0: i32) -> (i32, i32, i32, i32) {
    %c0_i32 = arith.constant 0 : i32
    %c0_i32_0 = arith.constant 0 : i32
    %c0_i32_1 = arith.constant 0 : i32
    %c0_i32_2 = arith.constant 0 : i32
    return %arg0, %c0_i32, %c0_i32_0, %c0_i32_1 : i32, i32, i32, i32
  }
}

module attributes {stable_mosaic.version = 11 : i64} {
  func.func @kernel(%arg0: i32, %arg1: i32, %arg2: memref<1x36x9x128xbf16, #tpu.memory_space<vmem>>, %arg3: memref<3x3x128x128xbf16, #tpu.memory_space<vmem>>, %arg4: memref<1x128xf32, #tpu.memory_space<vmem>>, %arg5: memref<1x128xf32, #tpu.memory_space<vmem>>, %arg6: memref<1x10x10x128xbf16, #tpu.memory_space<vmem>>) attributes {dimension_semantics = [#tpu.dimension_semantics<parallel>, #tpu.dimension_semantics<parallel>], iteration_bounds = array<i64: 2, 1>, scalar_prefetch = 0 : i64, scratch_operands = 0 : i64, tpu.core_type = #tpu.core_type<tc>, window_params = [{transform_indices = @transform_0, window_bounds = array<i64: 1, 36, 9, 128>}, {transform_indices = @transform_1, window_bounds = array<i64: 3, 3, 128, 128>}, {transform_indices = @transform_2, window_bounds = array<i64: 1, 128>}, {transform_indices = @transform_3, window_bounds = array<i64: 1, 128>}, {transform_indices = @transform_4, window_bounds = array<i64: 1, 10, 10, 128>}]} {
    %cst = arith.constant 0.000000e+00 : f32
    %0 = vector.broadcast %cst : f32 to vector<64x128xf32>
    %c0 = arith.constant 0 : index
    %c0_0 = arith.constant 0 : index
    %c0_1 = arith.constant 0 : index
    %c0_2 = arith.constant 0 : index
    %1 = vector.load %arg2[%c0, %c0_0, %c0_1, %c0_2] : memref<1x36x9x128xbf16, #tpu.memory_space<vmem>>, vector<1x8x8x128xbf16>
    %2 = vector.shape_cast %1 : vector<1x8x8x128xbf16> to vector<8x8x128xbf16>
    %3 = vector.shape_cast %2 : vector<8x8x128xbf16> to vector<64x128xbf16>
    %c0_3 = arith.constant 0 : index
    %c0_4 = arith.constant 0 : index
    %c0_5 = arith.constant 0 : index
    %c0_6 = arith.constant 0 : index
    %4 = vector.load %arg3[%c0_3, %c0_4, %c0_5, %c0_6] : memref<3x3x128x128xbf16, #tpu.memory_space<vmem>>, vector<1x1x128x128xbf16>
    %5 = vector.shape_cast %4 : vector<1x1x128x128xbf16> to vector<128x128xbf16>
    %cst_7 = arith.constant dense<0.000000e+00> : vector<64x128xf32>
    %6 = tpu.matmul %3, %5, %cst_7 {dimension_numbers = #tpu.dot_dimension_numbers<[1], [0], [0], [1], [0, 0, 1, 1], [], []>} : vector<64x128xbf16>, vector<128x128xbf16>, vector<64x128xf32> -> vector<64x128xf32>
    %7 = arith.addf %0, %6 : vector<64x128xf32>
    %c0_8 = arith.constant 0 : index
    %c9 = arith.constant 9 : index
    %c0_9 = arith.constant 0 : index
    %c0_10 = arith.constant 0 : index
    %8 = vector.load %arg2[%c0_8, %c9, %c0_9, %c0_10] : memref<1x36x9x128xbf16, #tpu.memory_space<vmem>>, vector<1x8x8x128xbf16>
    %9 = vector.shape_cast %8 : vector<1x8x8x128xbf16> to vector<8x8x128xbf16>
    %10 = vector.shape_cast %9 : vector<8x8x128xbf16> to vector<64x128xbf16>
    %c0_11 = arith.constant 0 : index
    %c1 = arith.constant 1 : index
    %c0_12 = arith.constant 0 : index
    %c0_13 = arith.constant 0 : index
    %11 = vector.load %arg3[%c0_11, %c1, %c0_12, %c0_13] : memref<3x3x128x128xbf16, #tpu.memory_space<vmem>>, vector<1x1x128x128xbf16>
    %12 = vector.shape_cast %11 : vector<1x1x128x128xbf16> to vector<128x128xbf16>
    %cst_14 = arith.constant dense<0.000000e+00> : vector<64x128xf32>
    %13 = tpu.matmul %10, %12, %cst_14 {dimension_numbers = #tpu.dot_dimension_numbers<[1], [0], [0], [1], [0, 0, 1, 1], [], []>} : vector<64x128xbf16>, vector<128x128xbf16>, vector<64x128xf32> -> vector<64x128xf32>
    %14 = arith.addf %7, %13 : vector<64x128xf32>
    %c0_15 = arith.constant 0 : index
    %c0_16 = arith.constant 0 : index
    %c1_17 = arith.constant 1 : index
    %c0_18 = arith.constant 0 : index
    %15 = vector.load %arg2[%c0_15, %c0_16, %c1_17, %c0_18] : memref<1x36x9x128xbf16, #tpu.memory_space<vmem>>, vector<1x8x8x128xbf16>
    %16 = vector.shape_cast %15 : vector<1x8x8x128xbf16> to vector<8x8x128xbf16>
    %17 = vector.shape_cast %16 : vector<8x8x128xbf16> to vector<64x128xbf16>
    %c0_19 = arith.constant 0 : index
    %c2 = arith.constant 2 : index
    %c0_20 = arith.constant 0 : index
    %c0_21 = arith.constant 0 : index
    %18 = vector.load %arg3[%c0_19, %c2, %c0_20, %c0_21] : memref<3x3x128x128xbf16, #tpu.memory_space<vmem>>, vector<1x1x128x128xbf16>
    %19 = vector.shape_cast %18 : vector<1x1x128x128xbf16> to vector<128x128xbf16>
    %cst_22 = arith.constant dense<0.000000e+00> : vector<64x128xf32>
    %20 = tpu.matmul %17, %19, %cst_22 {dimension_numbers = #tpu.dot_dimension_numbers<[1], [0], [0], [1], [0, 0, 1, 1], [], []>} : vector<64x128xbf16>, vector<128x128xbf16>, vector<64x128xf32> -> vector<64x128xf32>
    %21 = arith.addf %14, %20 : vector<64x128xf32>
    %c0_23 = arith.constant 0 : index
    %c18 = arith.constant 18 : index
    %c0_24 = arith.constant 0 : index
    %c0_25 = arith.constant 0 : index
    %22 = vector.load %arg2[%c0_23, %c18, %c0_24, %c0_25] : memref<1x36x9x128xbf16, #tpu.memory_space<vmem>>, vector<1x8x8x128xbf16>
    %23 = vector.shape_cast %22 : vector<1x8x8x128xbf16> to vector<8x8x128xbf16>
    %24 = vector.shape_cast %23 : vector<8x8x128xbf16> to vector<64x128xbf16>
    %c1_26 = arith.constant 1 : index
    %c0_27 = arith.constant 0 : index
    %c0_28 = arith.constant 0 : index
    %c0_29 = arith.constant 0 : index
    %25 = vector.load %arg3[%c1_26, %c0_27, %c0_28, %c0_29] : memref<3x3x128x128xbf16, #tpu.memory_space<vmem>>, vector<1x1x128x128xbf16>
    %26 = vector.shape_cast %25 : vector<1x1x128x128xbf16> to vector<128x128xbf16>
    %cst_30 = arith.constant dense<0.000000e+00> : vector<64x128xf32>
    %27 = tpu.matmul %24, %26, %cst_30 {dimension_numbers = #tpu.dot_dimension_numbers<[1], [0], [0], [1], [0, 0, 1, 1], [], []>} : vector<64x128xbf16>, vector<128x128xbf16>, vector<64x128xf32> -> vector<64x128xf32>
    %28 = arith.addf %21, %27 : vector<64x128xf32>
    %c0_31 = arith.constant 0 : index
    %c27 = arith.constant 27 : index
    %c0_32 = arith.constant 0 : index
    %c0_33 = arith.constant 0 : index
    %29 = vector.load %arg2[%c0_31, %c27, %c0_32, %c0_33] : memref<1x36x9x128xbf16, #tpu.memory_space<vmem>>, vector<1x8x8x128xbf16>
    %30 = vector.shape_cast %29 : vector<1x8x8x128xbf16> to vector<8x8x128xbf16>
    %31 = vector.shape_cast %30 : vector<8x8x128xbf16> to vector<64x128xbf16>
    %c1_34 = arith.constant 1 : index
    %c1_35 = arith.constant 1 : index
    %c0_36 = arith.constant 0 : index
    %c0_37 = arith.constant 0 : index
    %32 = vector.load %arg3[%c1_34, %c1_35, %c0_36, %c0_37] : memref<3x3x128x128xbf16, #tpu.memory_space<vmem>>, vector<1x1x128x128xbf16>
    %33 = vector.shape_cast %32 : vector<1x1x128x128xbf16> to vector<128x128xbf16>
    %cst_38 = arith.constant dense<0.000000e+00> : vector<64x128xf32>
    %34 = tpu.matmul %31, %33, %cst_38 {dimension_numbers = #tpu.dot_dimension_numbers<[1], [0], [0], [1], [0, 0, 1, 1], [], []>} : vector<64x128xbf16>, vector<128x128xbf16>, vector<64x128xf32> -> vector<64x128xf32>
    %35 = arith.addf %28, %34 : vector<64x128xf32>
    %c0_39 = arith.constant 0 : index
    %c18_40 = arith.constant 18 : index
    %c1_41 = arith.constant 1 : index
    %c0_42 = arith.constant 0 : index
    %36 = vector.load %arg2[%c0_39, %c18_40, %c1_41, %c0_42] : memref<1x36x9x128xbf16, #tpu.memory_space<vmem>>, vector<1x8x8x128xbf16>
    %37 = vector.shape_cast %36 : vector<1x8x8x128xbf16> to vector<8x8x128xbf16>
    %38 = vector.shape_cast %37 : vector<8x8x128xbf16> to vector<64x128xbf16>
    %c1_43 = arith.constant 1 : index
    %c2_44 = arith.constant 2 : index
    %c0_45 = arith.constant 0 : index
    %c0_46 = arith.constant 0 : index
    %39 = vector.load %arg3[%c1_43, %c2_44, %c0_45, %c0_46] : memref<3x3x128x128xbf16, #tpu.memory_space<vmem>>, vector<1x1x128x128xbf16>
    %40 = vector.shape_cast %39 : vector<1x1x128x128xbf16> to vector<128x128xbf16>
    %cst_47 = arith.constant dense<0.000000e+00> : vector<64x128xf32>
    %41 = tpu.matmul %38, %40, %cst_47 {dimension_numbers = #tpu.dot_dimension_numbers<[1], [0], [0], [1], [0, 0, 1, 1], [], []>} : vector<64x128xbf16>, vector<128x128xbf16>, vector<64x128xf32> -> vector<64x128xf32>
    %42 = arith.addf %35, %41 : vector<64x128xf32>
    %c0_48 = arith.constant 0 : index
    %c1_49 = arith.constant 1 : index
    %c0_50 = arith.constant 0 : index
    %c0_51 = arith.constant 0 : index
    %43 = vector.load %arg2[%c0_48, %c1_49, %c0_50, %c0_51] : memref<1x36x9x128xbf16, #tpu.memory_space<vmem>>, vector<1x8x8x128xbf16>
    %44 = vector.shape_cast %43 : vector<1x8x8x128xbf16> to vector<8x8x128xbf16>
    %45 = vector.shape_cast %44 : vector<8x8x128xbf16> to vector<64x128xbf16>
    %c2_52 = arith.constant 2 : index
    %c0_53 = arith.constant 0 : index
    %c0_54 = arith.constant 0 : index
    %c0_55 = arith.constant 0 : index
    %46 = vector.load %arg3[%c2_52, %c0_53, %c0_54, %c0_55] : memref<3x3x128x128xbf16, #tpu.memory_space<vmem>>, vector<1x1x128x128xbf16>
    %47 = vector.shape_cast %46 : vector<1x1x128x128xbf16> to vector<128x128xbf16>
    %cst_56 = arith.constant dense<0.000000e+00> : vector<64x128xf32>
    %48 = tpu.matmul %45, %47, %cst_56 {dimension_numbers = #tpu.dot_dimension_numbers<[1], [0], [0], [1], [0, 0, 1, 1], [], []>} : vector<64x128xbf16>, vector<128x128xbf16>, vector<64x128xf32> -> vector<64x128xf32>
    %49 = arith.addf %42, %48 : vector<64x128xf32>
    %c0_57 = arith.constant 0 : index
    %c10 = arith.constant 10 : index
    %c0_58 = arith.constant 0 : index
    %c0_59 = arith.constant 0 : index
    %50 = vector.load %arg2[%c0_57, %c10, %c0_58, %c0_59] : memref<1x36x9x128xbf16, #tpu.memory_space<vmem>>, vector<1x8x8x128xbf16>
    %51 = vector.shape_cast %50 : vector<1x8x8x128xbf16> to vector<8x8x128xbf16>
    %52 = vector.shape_cast %51 : vector<8x8x128xbf16> to vector<64x128xbf16>
    %c2_60 = arith.constant 2 : index
    %c1_61 = arith.constant 1 : index
    %c0_62 = arith.constant 0 : index
    %c0_63 = arith.constant 0 : index
    %53 = vector.load %arg3[%c2_60, %c1_61, %c0_62, %c0_63] : memref<3x3x128x128xbf16, #tpu.memory_space<vmem>>, vector<1x1x128x128xbf16>
    %54 = vector.shape_cast %53 : vector<1x1x128x128xbf16> to vector<128x128xbf16>
    %cst_64 = arith.constant dense<0.000000e+00> : vector<64x128xf32>
    %55 = tpu.matmul %52, %54, %cst_64 {dimension_numbers = #tpu.dot_dimension_numbers<[1], [0], [0], [1], [0, 0, 1, 1], [], []>} : vector<64x128xbf16>, vector<128x128xbf16>, vector<64x128xf32> -> vector<64x128xf32>
    %56 = arith.addf %49, %55 : vector<64x128xf32>
    %c0_65 = arith.constant 0 : index
    %c1_66 = arith.constant 1 : index
    %c1_67 = arith.constant 1 : index
    %c0_68 = arith.constant 0 : index
    %57 = vector.load %arg2[%c0_65, %c1_66, %c1_67, %c0_68] : memref<1x36x9x128xbf16, #tpu.memory_space<vmem>>, vector<1x8x8x128xbf16>
    %58 = vector.shape_cast %57 : vector<1x8x8x128xbf16> to vector<8x8x128xbf16>
    %59 = vector.shape_cast %58 : vector<8x8x128xbf16> to vector<64x128xbf16>
    %c2_69 = arith.constant 2 : index
    %c2_70 = arith.constant 2 : index
    %c0_71 = arith.constant 0 : index
    %c0_72 = arith.constant 0 : index
    %60 = vector.load %arg3[%c2_69, %c2_70, %c0_71, %c0_72] : memref<3x3x128x128xbf16, #tpu.memory_space<vmem>>, vector<1x1x128x128xbf16>
    %61 = vector.shape_cast %60 : vector<1x1x128x128xbf16> to vector<128x128xbf16>
    %cst_73 = arith.constant dense<0.000000e+00> : vector<64x128xf32>
    %62 = tpu.matmul %59, %61, %cst_73 {dimension_numbers = #tpu.dot_dimension_numbers<[1], [0], [0], [1], [0, 0, 1, 1], [], []>} : vector<64x128xbf16>, vector<128x128xbf16>, vector<64x128xf32> -> vector<64x128xf32>
    %63 = arith.addf %56, %62 : vector<64x128xf32>
    %c0_74 = arith.constant 0 : index
    %c0_75 = arith.constant 0 : index
    %64 = vector.load %arg4[%c0_74, %c0_75] : memref<1x128xf32, #tpu.memory_space<vmem>>, vector<1x128xf32>
    %65 = vector.broadcast %64 : vector<1x128xf32> to vector<64x128xf32>
    %66 = arith.mulf %63, %65 : vector<64x128xf32>
    %c0_76 = arith.constant 0 : index
    %c0_77 = arith.constant 0 : index
    %67 = vector.load %arg5[%c0_76, %c0_77] : memref<1x128xf32, #tpu.memory_space<vmem>>, vector<1x128xf32>
    %68 = vector.broadcast %67 : vector<1x128xf32> to vector<64x128xf32>
    %69 = arith.addf %66, %68 : vector<64x128xf32>
    %cst_78 = arith.constant 0.000000e+00 : f32
    %70 = vector.broadcast %cst_78 : f32 to vector<64x128xf32>
    %71 = arith.maximumf %69, %70 : vector<64x128xf32>
    %cst_79 = arith.constant 0.000000e+00 : bf16
    %72 = vector.broadcast %cst_79 : bf16 to vector<1x10x10x128xbf16>
    %c0_80 = arith.constant 0 : index
    %c0_81 = arith.constant 0 : index
    %c0_82 = arith.constant 0 : index
    %c0_83 = arith.constant 0 : index
    %73 = vector.load %arg6[%c0_80, %c0_81, %c0_82, %c0_83] : memref<1x10x10x128xbf16, #tpu.memory_space<vmem>>, vector<1x10x10x128xbf16>
    tpu.vector_store %arg6[%c0_80, %c0_81, %c0_82, %c0_83], %72 {strides = array<i32>} : memref<1x10x10x128xbf16, #tpu.memory_space<vmem>>, vector<1x10x10x128xbf16>,
    %74 = vector.shape_cast %71 : vector<64x128xf32> to vector<8x8x128xf32>
    %75 = arith.truncf %74 : vector<8x8x128xf32> to vector<8x8x128xbf16>
    %c0_84 = arith.constant 0 : index
    %c1_85 = arith.constant 1 : index
    %c1_86 = arith.constant 1 : index
    %c0_87 = arith.constant 0 : index
    %76 = vector.load %arg6[%c0_84, %c1_85, %c1_86, %c0_87] : memref<1x10x10x128xbf16, #tpu.memory_space<vmem>>, vector<1x8x8x128xbf16>
    %77 = vector.shape_cast %76 : vector<1x8x8x128xbf16> to vector<8x8x128xbf16>
    %78 = vector.shape_cast %75 : vector<8x8x128xbf16> to vector<1x8x8x128xbf16>
    tpu.vector_store %arg6[%c0_84, %c1_85, %c1_86, %c0_87], %78 {strides = array<i32>} : memref<1x10x10x128xbf16, #tpu.memory_space<vmem>>, vector<1x8x8x128xbf16>,
    return
  }
  func.func @transform_0(%arg0: i32, %arg1: i32) -> (i32, i32, i32, i32) {
    %c0_i32 = arith.constant 0 : i32
    %c0_i32_0 = arith.constant 0 : i32
    %c0_i32_1 = arith.constant 0 : i32
    %c0_i32_2 = arith.constant 0 : i32
    return %arg0, %c0_i32, %c0_i32_0, %c0_i32_1 : i32, i32, i32, i32
  }
  func.func @transform_1(%arg0: i32, %arg1: i32) -> (i32, i32, i32, i32) {
    %c0_i32 = arith.constant 0 : i32
    %c0_i32_0 = arith.constant 0 : i32
    %c0_i32_1 = arith.constant 0 : i32
    %c0_i32_2 = arith.constant 0 : i32
    return %c0_i32, %c0_i32_0, %c0_i32_1, %arg1 : i32, i32, i32, i32
  }
  func.func @transform_2(%arg0: i32, %arg1: i32) -> (i32, i32) {
    %c0_i32 = arith.constant 0 : i32
    %c0_i32_0 = arith.constant 0 : i32
    return %c0_i32, %arg1 : i32, i32
  }
  func.func @transform_3(%arg0: i32, %arg1: i32) -> (i32, i32) {
    %c0_i32 = arith.constant 0 : i32
    %c0_i32_0 = arith.constant 0 : i32
    return %c0_i32, %arg1 : i32, i32
  }
  func.func @transform_4(%arg0: i32, %arg1: i32) -> (i32, i32, i32, i32) {
    %c0_i32 = arith.constant 0 : i32
    %c0_i32_0 = arith.constant 0 : i32
    %c0_i32_1 = arith.constant 0 : i32
    return %arg0, %c0_i32, %c0_i32_0, %arg1 : i32, i32, i32, i32
  }
}

module attributes {stable_mosaic.version = 11 : i64} {
  func.func @kernel(%arg0: i32, %arg1: i32, %arg2: memref<1x10x10x128xbf16, #tpu.memory_space<vmem>>, %arg3: memref<3x3x128x128xbf16, #tpu.memory_space<vmem>>, %arg4: memref<1x36x9x128xbf16, #tpu.memory_space<vmem>>, %arg5: memref<128x128xbf16, #tpu.memory_space<vmem>>, %arg6: memref<1x8x8x128xf32, #tpu.memory_space<vmem>>) attributes {dimension_semantics = [#tpu.dimension_semantics<parallel>, #tpu.dimension_semantics<parallel>], iteration_bounds = array<i64: 2, 1>, scalar_prefetch = 0 : i64, scratch_operands = 0 : i64, tpu.core_type = #tpu.core_type<tc>, window_params = [{transform_indices = @transform_0, window_bounds = array<i64: 1, 10, 10, 128>}, {transform_indices = @transform_1, window_bounds = array<i64: 3, 3, 128, 128>}, {transform_indices = @transform_2, window_bounds = array<i64: 1, 36, 9, 128>}, {transform_indices = @transform_3, window_bounds = array<i64: 128, 128>}, {transform_indices = @transform_4, window_bounds = array<i64: 1, 8, 8, 128>}]} {
    %cst = arith.constant 0.000000e+00 : f32
    %0 = vector.broadcast %cst : f32 to vector<64x128xf32>
    %c0 = arith.constant 0 : index
    %c0_0 = arith.constant 0 : index
    %c0_1 = arith.constant 0 : index
    %c0_2 = arith.constant 0 : index
    %1 = vector.load %arg2[%c0, %c0_0, %c0_1, %c0_2] : memref<1x10x10x128xbf16, #tpu.memory_space<vmem>>, vector<1x8x8x128xbf16>
    %2 = vector.shape_cast %1 : vector<1x8x8x128xbf16> to vector<8x8x128xbf16>
    %3 = vector.shape_cast %2 : vector<8x8x128xbf16> to vector<64x128xbf16>
    %c0_3 = arith.constant 0 : index
    %c0_4 = arith.constant 0 : index
    %c0_5 = arith.constant 0 : index
    %c0_6 = arith.constant 0 : index
    %4 = vector.load %arg3[%c0_3, %c0_4, %c0_5, %c0_6] : memref<3x3x128x128xbf16, #tpu.memory_space<vmem>>, vector<1x1x128x128xbf16>
    %5 = vector.shape_cast %4 : vector<1x1x128x128xbf16> to vector<128x128xbf16>
    %cst_7 = arith.constant dense<0.000000e+00> : vector<64x128xf32>
    %6 = tpu.matmul %3, %5, %cst_7 {dimension_numbers = #tpu.dot_dimension_numbers<[1], [0], [0], [1], [0, 0, 1, 1], [], []>} : vector<64x128xbf16>, vector<128x128xbf16>, vector<64x128xf32> -> vector<64x128xf32>
    %7 = arith.addf %0, %6 : vector<64x128xf32>
    %c0_8 = arith.constant 0 : index
    %c0_9 = arith.constant 0 : index
    %c1 = arith.constant 1 : index
    %c0_10 = arith.constant 0 : index
    %8 = vector.load %arg2[%c0_8, %c0_9, %c1, %c0_10] : memref<1x10x10x128xbf16, #tpu.memory_space<vmem>>, vector<1x8x8x128xbf16>
    %9 = vector.shape_cast %8 : vector<1x8x8x128xbf16> to vector<8x8x128xbf16>
    %10 = vector.shape_cast %9 : vector<8x8x128xbf16> to vector<64x128xbf16>
    %c0_11 = arith.constant 0 : index
    %c1_12 = arith.constant 1 : index
    %c0_13 = arith.constant 0 : index
    %c0_14 = arith.constant 0 : index
    %11 = vector.load %arg3[%c0_11, %c1_12, %c0_13, %c0_14] : memref<3x3x128x128xbf16, #tpu.memory_space<vmem>>, vector<1x1x128x128xbf16>
    %12 = vector.shape_cast %11 : vector<1x1x128x128xbf16> to vector<128x128xbf16>
    %cst_15 = arith.constant dense<0.000000e+00> : vector<64x128xf32>
    %13 = tpu.matmul %10, %12, %cst_15 {dimension_numbers = #tpu.dot_dimension_numbers<[1], [0], [0], [1], [0, 0, 1, 1], [], []>} : vector<64x128xbf16>, vector<128x128xbf16>, vector<64x128xf32> -> vector<64x128xf32>
    %14 = arith.addf %7, %13 : vector<64x128xf32>
    %c0_16 = arith.constant 0 : index
    %c0_17 = arith.constant 0 : index
    %c2 = arith.constant 2 : index
    %c0_18 = arith.constant 0 : index
    %15 = vector.load %arg2[%c0_16, %c0_17, %c2, %c0_18] : memref<1x10x10x128xbf16, #tpu.memory_space<vmem>>, vector<1x8x8x128xbf16>
    %16 = vector.shape_cast %15 : vector<1x8x8x128xbf16> to vector<8x8x128xbf16>
    %17 = vector.shape_cast %16 : vector<8x8x128xbf16> to vector<64x128xbf16>
    %c0_19 = arith.constant 0 : index
    %c2_20 = arith.constant 2 : index
    %c0_21 = arith.constant 0 : index
    %c0_22 = arith.constant 0 : index
    %18 = vector.load %arg3[%c0_19, %c2_20, %c0_21, %c0_22] : memref<3x3x128x128xbf16, #tpu.memory_space<vmem>>, vector<1x1x128x128xbf16>
    %19 = vector.shape_cast %18 : vector<1x1x128x128xbf16> to vector<128x128xbf16>
    %cst_23 = arith.constant dense<0.000000e+00> : vector<64x128xf32>
    %20 = tpu.matmul %17, %19, %cst_23 {dimension_numbers = #tpu.dot_dimension_numbers<[1], [0], [0], [1], [0, 0, 1, 1], [], []>} : vector<64x128xbf16>, vector<128x128xbf16>, vector<64x128xf32> -> vector<64x128xf32>
    %21 = arith.addf %14, %20 : vector<64x128xf32>
    %c0_24 = arith.constant 0 : index
    %c1_25 = arith.constant 1 : index
    %c0_26 = arith.constant 0 : index
    %c0_27 = arith.constant 0 : index
    %22 = vector.load %arg2[%c0_24, %c1_25, %c0_26, %c0_27] : memref<1x10x10x128xbf16, #tpu.memory_space<vmem>>, vector<1x8x8x128xbf16>
    %23 = vector.shape_cast %22 : vector<1x8x8x128xbf16> to vector<8x8x128xbf16>
    %24 = vector.shape_cast %23 : vector<8x8x128xbf16> to vector<64x128xbf16>
    %c1_28 = arith.constant 1 : index
    %c0_29 = arith.constant 0 : index
    %c0_30 = arith.constant 0 : index
    %c0_31 = arith.constant 0 : index
    %25 = vector.load %arg3[%c1_28, %c0_29, %c0_30, %c0_31] : memref<3x3x128x128xbf16, #tpu.memory_space<vmem>>, vector<1x1x128x128xbf16>
    %26 = vector.shape_cast %25 : vector<1x1x128x128xbf16> to vector<128x128xbf16>
    %cst_32 = arith.constant dense<0.000000e+00> : vector<64x128xf32>
    %27 = tpu.matmul %24, %26, %cst_32 {dimension_numbers = #tpu.dot_dimension_numbers<[1], [0], [0], [1], [0, 0, 1, 1], [], []>} : vector<64x128xbf16>, vector<128x128xbf16>, vector<64x128xf32> -> vector<64x128xf32>
    %28 = arith.addf %21, %27 : vector<64x128xf32>
    %c0_33 = arith.constant 0 : index
    %c1_34 = arith.constant 1 : index
    %c1_35 = arith.constant 1 : index
    %c0_36 = arith.constant 0 : index
    %29 = vector.load %arg2[%c0_33, %c1_34, %c1_35, %c0_36] : memref<1x10x10x128xbf16, #tpu.memory_space<vmem>>, vector<1x8x8x128xbf16>
    %30 = vector.shape_cast %29 : vector<1x8x8x128xbf16> to vector<8x8x128xbf16>
    %31 = vector.shape_cast %30 : vector<8x8x128xbf16> to vector<64x128xbf16>
    %c1_37 = arith.constant 1 : index
    %c1_38 = arith.constant 1 : index
    %c0_39 = arith.constant 0 : index
    %c0_40 = arith.constant 0 : index
    %32 = vector.load %arg3[%c1_37, %c1_38, %c0_39, %c0_40] : memref<3x3x128x128xbf16, #tpu.memory_space<vmem>>, vector<1x1x128x128xbf16>
    %33 = vector.shape_cast %32 : vector<1x1x128x128xbf16> to vector<128x128xbf16>
    %cst_41 = arith.constant dense<0.000000e+00> : vector<64x128xf32>
    %34 = tpu.matmul %31, %33, %cst_41 {dimension_numbers = #tpu.dot_dimension_numbers<[1], [0], [0], [1], [0, 0, 1, 1], [], []>} : vector<64x128xbf16>, vector<128x128xbf16>, vector<64x128xf32> -> vector<64x128xf32>
    %35 = arith.addf %28, %34 : vector<64x128xf32>
    %c0_42 = arith.constant 0 : index
    %c1_43 = arith.constant 1 : index
    %c2_44 = arith.constant 2 : index
    %c0_45 = arith.constant 0 : index
    %36 = vector.load %arg2[%c0_42, %c1_43, %c2_44, %c0_45] : memref<1x10x10x128xbf16, #tpu.memory_space<vmem>>, vector<1x8x8x128xbf16>
    %37 = vector.shape_cast %36 : vector<1x8x8x128xbf16> to vector<8x8x128xbf16>
    %38 = vector.shape_cast %37 : vector<8x8x128xbf16> to vector<64x128xbf16>
    %c1_46 = arith.constant 1 : index
    %c2_47 = arith.constant 2 : index
    %c0_48 = arith.constant 0 : index
    %c0_49 = arith.constant 0 : index
    %39 = vector.load %arg3[%c1_46, %c2_47, %c0_48, %c0_49] : memref<3x3x128x128xbf16, #tpu.memory_space<vmem>>, vector<1x1x128x128xbf16>
    %40 = vector.shape_cast %39 : vector<1x1x128x128xbf16> to vector<128x128xbf16>
    %cst_50 = arith.constant dense<0.000000e+00> : vector<64x128xf32>
    %41 = tpu.matmul %38, %40, %cst_50 {dimension_numbers = #tpu.dot_dimension_numbers<[1], [0], [0], [1], [0, 0, 1, 1], [], []>} : vector<64x128xbf16>, vector<128x128xbf16>, vector<64x128xf32> -> vector<64x128xf32>
    %42 = arith.addf %35, %41 : vector<64x128xf32>
    %c0_51 = arith.constant 0 : index
    %c2_52 = arith.constant 2 : index
    %c0_53 = arith.constant 0 : index
    %c0_54 = arith.constant 0 : index
    %43 = vector.load %arg2[%c0_51, %c2_52, %c0_53, %c0_54] : memref<1x10x10x128xbf16, #tpu.memory_space<vmem>>, vector<1x8x8x128xbf16>
    %44 = vector.shape_cast %43 : vector<1x8x8x128xbf16> to vector<8x8x128xbf16>
    %45 = vector.shape_cast %44 : vector<8x8x128xbf16> to vector<64x128xbf16>
    %c2_55 = arith.constant 2 : index
    %c0_56 = arith.constant 0 : index
    %c0_57 = arith.constant 0 : index
    %c0_58 = arith.constant 0 : index
    %46 = vector.load %arg3[%c2_55, %c0_56, %c0_57, %c0_58] : memref<3x3x128x128xbf16, #tpu.memory_space<vmem>>, vector<1x1x128x128xbf16>
    %47 = vector.shape_cast %46 : vector<1x1x128x128xbf16> to vector<128x128xbf16>
    %cst_59 = arith.constant dense<0.000000e+00> : vector<64x128xf32>
    %48 = tpu.matmul %45, %47, %cst_59 {dimension_numbers = #tpu.dot_dimension_numbers<[1], [0], [0], [1], [0, 0, 1, 1], [], []>} : vector<64x128xbf16>, vector<128x128xbf16>, vector<64x128xf32> -> vector<64x128xf32>
    %49 = arith.addf %42, %48 : vector<64x128xf32>
    %c0_60 = arith.constant 0 : index
    %c2_61 = arith.constant 2 : index
    %c1_62 = arith.constant 1 : index
    %c0_63 = arith.constant 0 : index
    %50 = vector.load %arg2[%c0_60, %c2_61, %c1_62, %c0_63] : memref<1x10x10x128xbf16, #tpu.memory_space<vmem>>, vector<1x8x8x128xbf16>
    %51 = vector.shape_cast %50 : vector<1x8x8x128xbf16> to vector<8x8x128xbf16>
    %52 = vector.shape_cast %51 : vector<8x8x128xbf16> to vector<64x128xbf16>
    %c2_64 = arith.constant 2 : index
    %c1_65 = arith.constant 1 : index
    %c0_66 = arith.constant 0 : index
    %c0_67 = arith.constant 0 : index
    %53 = vector.load %arg3[%c2_64, %c1_65, %c0_66, %c0_67] : memref<3x3x128x128xbf16, #tpu.memory_space<vmem>>, vector<1x1x128x128xbf16>
    %54 = vector.shape_cast %53 : vector<1x1x128x128xbf16> to vector<128x128xbf16>
    %cst_68 = arith.constant dense<0.000000e+00> : vector<64x128xf32>
    %55 = tpu.matmul %52, %54, %cst_68 {dimension_numbers = #tpu.dot_dimension_numbers<[1], [0], [0], [1], [0, 0, 1, 1], [], []>} : vector<64x128xbf16>, vector<128x128xbf16>, vector<64x128xf32> -> vector<64x128xf32>
    %56 = arith.addf %49, %55 : vector<64x128xf32>
    %c0_69 = arith.constant 0 : index
    %c2_70 = arith.constant 2 : index
    %c2_71 = arith.constant 2 : index
    %c0_72 = arith.constant 0 : index
    %57 = vector.load %arg2[%c0_69, %c2_70, %c2_71, %c0_72] : memref<1x10x10x128xbf16, #tpu.memory_space<vmem>>, vector<1x8x8x128xbf16>
    %58 = vector.shape_cast %57 : vector<1x8x8x128xbf16> to vector<8x8x128xbf16>
    %59 = vector.shape_cast %58 : vector<8x8x128xbf16> to vector<64x128xbf16>
    %c2_73 = arith.constant 2 : index
    %c2_74 = arith.constant 2 : index
    %c0_75 = arith.constant 0 : index
    %c0_76 = arith.constant 0 : index
    %60 = vector.load %arg3[%c2_73, %c2_74, %c0_75, %c0_76] : memref<3x3x128x128xbf16, #tpu.memory_space<vmem>>, vector<1x1x128x128xbf16>
    %61 = vector.shape_cast %60 : vector<1x1x128x128xbf16> to vector<128x128xbf16>
    %cst_77 = arith.constant dense<0.000000e+00> : vector<64x128xf32>
    %62 = tpu.matmul %59, %61, %cst_77 {dimension_numbers = #tpu.dot_dimension_numbers<[1], [0], [0], [1], [0, 0, 1, 1], [], []>} : vector<64x128xbf16>, vector<128x128xbf16>, vector<64x128xf32> -> vector<64x128xf32>
    %63 = arith.addf %56, %62 : vector<64x128xf32>
    %c0_78 = arith.constant 0 : index
    %c27 = arith.constant 27 : index
    %c0_79 = arith.constant 0 : index
    %c0_80 = arith.constant 0 : index
    %64 = vector.load %arg4[%c0_78, %c27, %c0_79, %c0_80] : memref<1x36x9x128xbf16, #tpu.memory_space<vmem>>, vector<1x8x8x128xbf16>
    %65 = vector.shape_cast %64 : vector<1x8x8x128xbf16> to vector<8x8x128xbf16>
    %66 = vector.shape_cast %65 : vector<8x8x128xbf16> to vector<64x128xbf16>
    %c0_81 = arith.constant 0 : index
    %c0_82 = arith.constant 0 : index
    %67 = vector.load %arg5[%c0_81, %c0_82] : memref<128x128xbf16, #tpu.memory_space<vmem>>, vector<128x128xbf16>
    %cst_83 = arith.constant dense<0.000000e+00> : vector<64x128xf32>
    %68 = tpu.matmul %66, %67, %cst_83 {dimension_numbers = #tpu.dot_dimension_numbers<[1], [0], [0], [1], [0, 0, 1, 1], [], []>} : vector<64x128xbf16>, vector<128x128xbf16>, vector<64x128xf32> -> vector<64x128xf32>
    %69 = arith.addf %63, %68 : vector<64x128xf32>
    %70 = vector.shape_cast %69 : vector<64x128xf32> to vector<8x8x128xf32>
    %c0_84 = arith.constant 0 : index
    %c0_85 = arith.constant 0 : index
    %c0_86 = arith.constant 0 : index
    %c0_87 = arith.constant 0 : index
    %71 = vector.load %arg6[%c0_84, %c0_85, %c0_86, %c0_87] : memref<1x8x8x128xf32, #tpu.memory_space<vmem>>, vector<1x8x8x128xf32>
    %72 = vector.shape_cast %71 : vector<1x8x8x128xf32> to vector<8x8x128xf32>
    %73 = vector.shape_cast %70 : vector<8x8x128xf32> to vector<1x8x8x128xf32>
    tpu.vector_store %arg6[%c0_84, %c0_85, %c0_86, %c0_87], %73 {strides = array<i32>} : memref<1x8x8x128xf32, #tpu.memory_space<vmem>>, vector<1x8x8x128xf32>,
    return
  }
  func.func @transform_0(%arg0: i32, %arg1: i32) -> (i32, i32, i32, i32) {
    %c0_i32 = arith.constant 0 : i32
    %c0_i32_0 = arith.constant 0 : i32
    %c0_i32_1 = arith.constant 0 : i32
    %c0_i32_2 = arith.constant 0 : i32
    return %arg0, %c0_i32, %c0_i32_0, %c0_i32_1 : i32, i32, i32, i32
  }
  func.func @transform_1(%arg0: i32, %arg1: i32) -> (i32, i32, i32, i32) {
    %c0_i32 = arith.constant 0 : i32
    %c0_i32_0 = arith.constant 0 : i32
    %c0_i32_1 = arith.constant 0 : i32
    %c0_i32_2 = arith.constant 0 : i32
    return %c0_i32, %c0_i32_0, %c0_i32_1, %arg1 : i32, i32, i32, i32
  }
  func.func @transform_2(%arg0: i32, %arg1: i32) -> (i32, i32, i32, i32) {
    %c0_i32 = arith.constant 0 : i32
    %c0_i32_0 = arith.constant 0 : i32
    %c0_i32_1 = arith.constant 0 : i32
    %c0_i32_2 = arith.constant 0 : i32
    return %arg0, %c0_i32, %c0_i32_0, %c0_i32_1 : i32, i32, i32, i32
  }
  func.func @transform_3(%arg0: i32, %arg1: i32) -> (i32, i32) {
    %c0_i32 = arith.constant 0 : i32
    %c0_i32_0 = arith.constant 0 : i32
    return %c0_i32, %arg1 : i32, i32
  }
  func.func @transform_4(%arg0: i32, %arg1: i32) -> (i32, i32, i32, i32) {
    %c0_i32 = arith.constant 0 : i32
    %c0_i32_0 = arith.constant 0 : i32
    %c0_i32_1 = arith.constant 0 : i32
    return %arg0, %c0_i32, %c0_i32_0, %arg1 : i32, i32, i32, i32
  }
}

</mosaic_0001>

<llo_original>
// kernel: preact_block_forward.3
$region0: #{preact_block_forward.3}
  #allocation0 [shape = 'u32[]', space=smem, size = 0x4, offset = 0x4, fixed_abs, tag = 'smem constant byte address 0x4 - core index']
  #allocation1 [shape = 'u32[144,128]{1,0:T(1,128)}', space=vmem, size = 0x12000, scoped, tag = 'internal scratch']
  %s0 = inlined_call_operand.vmem [shape: f32[2,16,16,128], index: 0, kind: input, shape index: {}]
  %s1 = inlined_call_operand.vmem [shape: f32[1,128], index: 1, kind: input, shape index: {}]
  %s2 = inlined_call_operand.vmem [shape: f32[1,128], index: 2, kind: input, shape index: {}]
  %s3 = inlined_call_operand.vmem [shape: bf16[2,18,18,128], index: 3, kind: output, shape index: {}]
  %s4 = sld [smem:[#allocation0]]
  $region45: #{preact_block_forward.3} parent=0
    _
  %s6 = ssub.s32 1, %s4
  %s7 = scalar_select 0, %s6, %s4
  loop: start=0, step=1, limit=4
  $region2: #{preact_block_forward.3} parent=0 // loop_pre_header
    _
  $region3: #{preact_block_forward.3} parent=0 // loop_header
    %s9 = sphi 0, %s13
    %p10 = scmp.ge.s32.totalorder %s9, 4
    %s19 = sphi 0, %s21
    %s22 = sphi 0, %s19
    %s23 = sphi 0, %s22
    %s39 = sphi 0, %s23
    %s43 = sphi 0, %s43
    %s45 = sphi 0, %s43
    %s46 = sphi 0, %s45
    %s60 = sphi 0, %s46
    %s64 = sphi 0, %s64
    %s66 = sphi 0, %s64
    %s67 = sphi 0, %s66
    %s81 = sphi 0, %s67
    %s87 = sphi 0, %s89
    %s90 = sphi 0, %s87
    %s91 = sphi 0, %s90
    %s107 = sphi 0, %s91
  $region4: #{preact_block_forward.3} parent=0 // loop_header_branch
    %12 = sbr.rel (%p10) target = $region8
  $region5: #{preact_block_forward.3} parent=0 // loop_body
    %s14 = ssub.s32 %s9, 1
    %s15 = ssub.s32 %s9, 2
    %s16 = sadd.s32 %s9, 1
    %s17 = ssub.s32 %s9, %s16
    %p18 = scmp.eq.s32.totalorder %s17, 0
    %s20 = sadd.s32 %s19, 1
    %s21 = scalar_select %p18, %s19, %s20
    %p24 = pneg %p18
    %p25 = scmp.eq.s32.totalorder %s9, 1
    %p26 = por %p24, %p25
    %p27 = scmp.ne.s32.totalorder %s19, %s22
    %p28 = scmp.eq.s32.totalorder %s9, 0
    %p29 = por %p27, %p28
    %p30 = scmp.ne.s32.totalorder %s19, %s22
    %p31 = scmp.eq.s32.totalorder %s14, 1
    %p32 = por %p30, %p31
    %p33 = scmp.ne.s32.totalorder %s22, %s23
    %p34 = scmp.eq.s32.totalorder %s14, 0
    %p35 = por %p33, %p34
    %p36 = scmp.ne.s32.totalorder %s22, %s23
    %p37 = scmp.eq.s32.totalorder %s15, 1
    %p38 = por %p36, %p37
    %p40 = scmp.ne.s32.totalorder %s23, %s39
    %p41 = scmp.eq.s32.totalorder %s15, 0
    %p42 = por %p40, %p41
    %s44 = sadd.s32 %s43, 1
    %p47 = scmp.eq.s32.totalorder %s9, 1
    %p48 = scmp.ne.s32.totalorder %s43, %s45
    %p49 = scmp.eq.s32.totalorder %s9, 0
    %p50 = por %p48, %p49
    %p51 = scmp.ne.s32.totalorder %s43, %s45
    %p52 = scmp.eq.s32.totalorder %s14, 1
    %p53 = por %p51, %p52
    %p54 = scmp.ne.s32.totalorder %s45, %s46
    %p55 = scmp.eq.s32.totalorder %s14, 0
    %p56 = por %p54, %p55
    %p57 = scmp.ne.s32.totalorder %s45, %s46
    %p58 = scmp.eq.s32.totalorder %s15, 1
    %p59 = por %p57, %p58
    %p61 = scmp.ne.s32.totalorder %s46, %s60
    %p62 = scmp.eq.s32.totalorder %s15, 0
    %p63 = por %p61, %p62
    %s65 = sadd.s32 %s64, 1
    %p68 = scmp.eq.s32.totalorder %s9, 1
    %p69 = scmp.ne.s32.totalorder %s64, %s66
    %p70 = scmp.eq.s32.totalorder %s9, 0
    %p71 = por %p69, %p70
    %p72 = scmp.ne.s32.totalorder %s64, %s66
    %p73 = scmp.eq.s32.totalorder %s14, 1
    %p74 = por %p72, %p73
    %p75 = scmp.ne.s32.totalorder %s66, %s67
    %p76 = scmp.eq.s32.totalorder %s14, 0
    %p77 = por %p75, %p76
    %p78 = scmp.ne.s32.totalorder %s66, %s67
    %p79 = scmp.eq.s32.totalorder %s15, 1
    %p80 = por %p78, %p79
    %p82 = scmp.ne.s32.totalorder %s67, %s81
    %p83 = scmp.eq.s32.totalorder %s15, 0
    %p84 = por %p82, %p83
    %s85 = ssub.s32 %s9, %s16
    %p86 = scmp.eq.s32.totalorder %s85, 0
    %s88 = sadd.s32 %s87, 1
    %s89 = scalar_select %p86, %s87, %s88
    %p92 = pneg %p86
    %p93 = scmp.eq.s32.totalorder %s9, 1
    %p94 = por %p92, %p93
    %p95 = scmp.ne.s32.totalorder %s87, %s90
    %p96 = scmp.eq.s32.totalorder %s9, 0
    %p97 = por %p95, %p96
    %p98 = scmp.ne.s32.totalorder %s87, %s90
    %p99 = scmp.eq.s32.totalorder %s14, 1
    %p100 = por %p98, %p99
    %p101 = scmp.ne.s32.totalorder %s90, %s91
    %p102 = scmp.eq.s32.totalorder %s14, 0
    %p103 = por %p101, %p102
    %p104 = scmp.ne.s32.totalorder %s90, %s91
    %p105 = scmp.eq.s32.totalorder %s15, 1
    %p106 = por %p104, %p105
    %p108 = scmp.ne.s32.totalorder %s91, %s107
    %p109 = scmp.eq.s32.totalorder %s15, 0
    %p110 = por %p108, %p109
    %p111 = scmp.le.s32.totalorder 1, %s9
    %p112 = scmp.lt.s32.totalorder %s9, 3
    %p113 = pnand %p111, %p112
    %p114 = pneg %p113
    // Predicated region
    $region9: #{preact_block_forward.3} parent=5 // pred_check
      _
    $region10: #{preact_block_forward.3} parent=5 // pred_check_branch
      %116 = sbr.rel (%p113) target = $region12
    $region11: #{preact_block_forward.3} parent=5 // pred_region
      %s117 = ssub.s32 %s9, 1
      // Predicated region
      $region13: #{preact_block_forward.3} parent=11 // pred_check
        %p118 = pneg %p56
      $region14: #{preact_block_forward.3} parent=11 // pred_check_branch
        %120 = sbr.rel (%p118) target = $region16
      $region15: #{preact_block_forward.3} parent=11 // pred_region
        _
      $region16: #{preact_block_forward.3} parent=11 // pred_fallthru
        _
      // Predicated region
      $region17: #{preact_block_forward.3} parent=11 // pred_check
        %p121 = pneg %p77
      $region18: #{preact_block_forward.3} parent=11 // pred_check_branch
        %123 = sbr.rel (%p121) target = $region20
      $region19: #{preact_block_forward.3} parent=11 // pred_region
        _
      $region20: #{preact_block_forward.3} parent=11 // pred_fallthru
        _
    $region12: #{preact_block_forward.3} parent=5 // pred_fallthru
      _
    %p124 = scmp.lt.s32.totalorder %s9, 2
    // Predicated region
    $region21: #{preact_block_forward.3} parent=5 // pred_check
      %p125 = pneg %p124
    $region22: #{preact_block_forward.3} parent=5 // pred_check_branch
      %127 = sbr.rel (%p125) target = $region24
    $region23: #{preact_block_forward.3} parent=5 // pred_region
      // Predicated region
      $region25: #{preact_block_forward.3} parent=23 // pred_check
        %p128 = pneg %p29
      $region26: #{preact_block_forward.3} parent=23 // pred_check_branch
        %130 = sbr.rel (%p128) target = $region28
      $region27: #{preact_block_forward.3} parent=23 // pred_region
        %p131 = scmp.lt.s32.totalorder %s9, 1
        %s132 = scalar_select %p131, %s9, 1
        %s133 = smul.addr %s132, 32
        %s134 = smul.addr %s133, 8
        %s135 = scalar_lea.vmem %s0, %s134
      $region28: #{preact_block_forward.3} parent=23 // pred_fallthru
        _
    $region24: #{preact_block_forward.3} parent=5 // pred_fallthru
      _
    %p136 = scmp.le.s32.totalorder 1, %s9
    %p137 = scmp.lt.s32.totalorder %s9, 3
    %p138 = pnand %p136, %p137
    %p139 = pneg %p138
    // Predicated region
    $region29: #{preact_block_forward.3} parent=5 // pred_check
      _
    $region30: #{preact_block_forward.3} parent=5 // pred_check_branch
      %141 = sbr.rel (%p138) target = $region32
    $region31: #{preact_block_forward.3} parent=5 // pred_region
      %s142 = ssub.s32 %s9, 1
      %p143 = scmp.lt.s32.totalorder %s14, 1
      %s144 = scalar_select %p143, %s14, 1
      %s145 = smul.addr %s144, 32
      %s146 = smul.addr %s145, 8
      %s147 = scalar_lea.vmem %s0, %s146
      %p148 = pneg %p35
      %p149 = pneg %p32
      %p150 = pneg %p56
      %p151 = pneg %p53
      %p152 = pneg %p77
      %p153 = pneg %p74
      %p154 = pneg %p103
      %p155 = pneg %p100
      %p156 = scmp.lt.s32.totalorder %s14, 1
      %s157 = scalar_select %p156, %s14, 1
      %s158 = smul.addr %s157, 54
      %s159 = smul.addr %s158, 4
      %s160 = scalar_lea.vmem %s3, %s159
      %p161 = scmp.lt.s32.totalorder %s14, 1
      %s162 = scalar_select %p161, %s14, 1
      %s163 = smul.addr %s162, 32
      %s164 = smul.addr %s163, 8
      %s165 = scalar_lea.vmem %s0, %s164
      %p166 = scmp.lt.s32.totalorder %s14, 1
      %s167 = scalar_select %p166, %s14, 1
      %s168 = smul.addr %s167, 54
      %s169 = smul.addr %s168, 4
      %s170 = scalar_lea.vmem %s3, %s169
      %v172 = vld [vmem:[%s165] sm:$0xff]
      %v173 = vld [vmem:[%s165 + $0x8] sm:$0xff]
      %v174 = vld [vmem:[%s165 + $0x10] sm:$0xff]
      %v175 = vld [vmem:[%s165 + $0x18] sm:$0xff]
      %v176 = vld [vmem:[%s165 + $0x20] sm:$0xff]
      %v177 = vld [vmem:[%s165 + $0x28] sm:$0xff]
      %v178 = vld [vmem:[%s165 + $0x30] sm:$0xff]
      %v179 = vld [vmem:[%s165 + $0x38] sm:$0xff]
      %v180 = vld [vmem:[%s165 + $0x40] sm:$0xff]
      %v181 = vld [vmem:[%s165 + $0x48] sm:$0xff]
      %v182 = vld [vmem:[%s165 + $0x50] sm:$0xff]
      %v183 = vld [vmem:[%s165 + $0x58] sm:$0xff]
      %v184 = vld [vmem:[%s165 + $0x60] sm:$0xff]
      %v185 = vld [vmem:[%s165 + $0x68] sm:$0xff]
      %v186 = vld [vmem:[%s165 + $0x70] sm:$0xff]
      %v187 = vld [vmem:[%s165 + $0x78] sm:$0xff]
      %v188 = vld [vmem:[%s165 + $0x80] sm:$0xff]
      %v189 = vld [vmem:[%s165 + $0x88] sm:$0xff]
      %v190 = vld [vmem:[%s165 + $0x90] sm:$0xff]
      %v191 = vld [vmem:[%s165 + $0x98] sm:$0xff]
      %v192 = vld [vmem:[%s165 + $0xa0] sm:$0xff]
      %v193 = vld [vmem:[%s165 + $0xa8] sm:$0xff]
      %v194 = vld [vmem:[%s165 + $0xb0] sm:$0xff]
      %v195 = vld [vmem:[%s165 + $0xb8] sm:$0xff]
      %v196 = vld [vmem:[%s165 + $0xc0] sm:$0xff]
      %v197 = vld [vmem:[%s165 + $0xc8] sm:$0xff]
      %v198 = vld [vmem:[%s165 + $0xd0] sm:$0xff]
      %v199 = vld [vmem:[%s165 + $0xd8] sm:$0xff]
      %v200 = vld [vmem:[%s165 + $0xe0] sm:$0xff]
      %v201 = vld [vmem:[%s165 + $0xe8] sm:$0xff]
      %v202 = vld [vmem:[%s165 + $0xf0] sm:$0xff]
      %v203 = vld [vmem:[%s165 + $0xf8] sm:$0xff]
      %v204 = vld [vmem:[%s1] sm:$0x1]
      %v206 = vlaneseq
      %v207 = vshrl.u32 %v206, 7
      %v208 = vsub.s32 0, %v207
      %v209 = vrot.slane %v204, %v208
      %v211 = vmul.f32 %v172, %v209
      %v212 = vmul.f32 %v173, %v209
      %v213 = vmul.f32 %v174, %v209
      %v214 = vmul.f32 %v175, %v209
      %v215 = vmul.f32 %v176, %v209
      %v216 = vmul.f32 %v177, %v209
      %v217 = vmul.f32 %v178, %v209
      %v218 = vmul.f32 %v179, %v209
      %v219 = vmul.f32 %v180, %v209
      %v220 = vmul.f32 %v181, %v209
      %v221 = vmul.f32 %v182, %v209
      %v222 = vmul.f32 %v183, %v209
      %v223 = vmul.f32 %v184, %v209
      %v224 = vmul.f32 %v185, %v209
      %v225 = vmul.f32 %v186, %v209
      %v226 = vmul.f32 %v187, %v209
      %v227 = vmul.f32 %v188, %v209
      %v228 = vmul.f32 %v189, %v209
      %v229 = vmul.f32 %v190, %v209
      %v230 = vmul.f32 %v191, %v209
      %v231 = vmul.f32 %v192, %v209
      %v232 = vmul.f32 %v193, %v209
      %v233 = vmul.f32 %v194, %v209
      %v234 = vmul.f32 %v195, %v209
      %v235 = vmul.f32 %v196, %v209
      %v236 = vmul.f32 %v197, %v209
      %v237 = vmul.f32 %v198, %v209
      %v238 = vmul.f32 %v199, %v209
      %v239 = vmul.f32 %v200, %v209
      %v240 = vmul.f32 %v201, %v209
      %v241 = vmul.f32 %v202, %v209
      %v242 = vmul.f32 %v203, %v209
      %v243 = vld [vmem:[%s2] sm:$0x1]
      %v245 = vlaneseq
      %v246 = vshrl.u32 %v245, 7
      %v247 = vsub.s32 0, %v246
      %v248 = vrot.slane %v243, %v247
      %v250 = vadd.f32 %v211, %v248
      %v251 = vadd.f32 %v212, %v248
      %v252 = vadd.f32 %v213, %v248
      %v253 = vadd.f32 %v214, %v248
      %v254 = vadd.f32 %v215, %v248
      %v255 = vadd.f32 %v216, %v248
      %v256 = vadd.f32 %v217, %v248
      %v257 = vadd.f32 %v218, %v248
      %v258 = vadd.f32 %v219, %v248
      %v259 = vadd.f32 %v220, %v248
      %v260 = vadd.f32 %v221, %v248
      %v261 = vadd.f32 %v222, %v248
      %v262 = vadd.f32 %v223, %v248
      %v263 = vadd.f32 %v224, %v248
      %v264 = vadd.f32 %v225, %v248
      %v265 = vadd.f32 %v226, %v248
      %v266 = vadd.f32 %v227, %v248
      %v267 = vadd.f32 %v228, %v248
      %v268 = vadd.f32 %v229, %v248
      %v269 = vadd.f32 %v230, %v248
      %v270 = vadd.f32 %v231, %v248
      %v271 = vadd.f32 %v232, %v248
      %v272 = vadd.f32 %v233, %v248
      %v273 = vadd.f32 %v234, %v248
      %v274 = vadd.f32 %v235, %v248
      %v275 = vadd.f32 %v236, %v248
      %v276 = vadd.f32 %v237, %v248
      %v277 = vadd.f32 %v238, %v248
      %v278 = vadd.f32 %v239, %v248
      %v279 = vadd.f32 %v240, %v248
      %v280 = vadd.f32 %v241, %v248
      %v281 = vadd.f32 %v242, %v248
      %v282 = vmax.f32 %v250, 0.0
      %v283 = vmax.f32 %v251, 0.0
      %v284 = vmax.f32 %v252, 0.0
      %v285 = vmax.f32 %v253, 0.0
      %v286 = vmax.f32 %v254, 0.0
      %v287 = vmax.f32 %v255, 0.0
      %v288 = vmax.f32 %v256, 0.0
      %v289 = vmax.f32 %v257, 0.0
      %v290 = vmax.f32 %v258, 0.0
      %v291 = vmax.f32 %v259, 0.0
      %v292 = vmax.f32 %v260, 0.0
      %v293 = vmax.f32 %v261, 0.0
      %v294 = vmax.f32 %v262, 0.0
      %v295 = vmax.f32 %v263, 0.0
      %v296 = vmax.f32 %v264, 0.0
      %v297 = vmax.f32 %v265, 0.0
      %v298 = vmax.f32 %v266, 0.0
      %v299 = vmax.f32 %v267, 0.0
      %v300 = vmax.f32 %v268, 0.0
      %v301 = vmax.f32 %v269, 0.0
      %v302 = vmax.f32 %v270, 0.0
      %v303 = vmax.f32 %v271, 0.0
      %v304 = vmax.f32 %v272, 0.0
      %v305 = vmax.f32 %v273, 0.0
      %v306 = vmax.f32 %v274, 0.0
      %v307 = vmax.f32 %v275, 0.0
      %v308 = vmax.f32 %v276, 0.0
      %v309 = vmax.f32 %v277, 0.0
      %v310 = vmax.f32 %v278, 0.0
      %v311 = vmax.f32 %v279, 0.0
      %v312 = vmax.f32 %v280, 0.0
      %v313 = vmax.f32 %v281, 0.0
      %314 = vst [vmem:[%s170] sm:$0xf] 0
      %315 = vst [vmem:[%s170 + $0x4] sm:$0xf] 0
      %316 = vst [vmem:[%s170 + $0x8] sm:$0x1] 0
      %317 = vst [vmem:[%s170 + $0xc] sm:$0xf] 0
      %318 = vst [vmem:[%s170 + $0x10] sm:$0xf] 0
      %319 = vst [vmem:[%s170 + $0x14] sm:$0x1] 0
      %320 = vst [vmem:[%s170 + $0x18] sm:$0xf] 0
      %321 = vst [vmem:[%s170 + $0x1c] sm:$0xf] 0
      %322 = vst [vmem:[%s170 + $0x20] sm:$0x1] 0
      %323 = vst [vmem:[%s170 + $0x24] sm:$0xf] 0
      %324 = vst [vmem:[%s170 + $0x28] sm:$0xf] 0
      %325 = vst [vmem:[%s170 + $0x2c] sm:$0x1] 0
      %326 = vst [vmem:[%s170 + $0x30] sm:$0xf] 0
      %327 = vst [vmem:[%s170 + $0x34] sm:$0xf] 0
      %328 = vst [vmem:[%s170 + $0x38] sm:$0x1] 0
      %329 = vst [vmem:[%s170 + $0x3c] sm:$0xf] 0
      %330 = vst [vmem:[%s170 + $0x40] sm:$0xf] 0
      %331 = vst [vmem:[%s170 + $0x44] sm:$0x1] 0
      %332 = vst [vmem:[%s170 + $0x48] sm:$0xf] 0
      %333 = vst [vmem:[%s170 + $0x4c] sm:$0xf] 0
      %334 = vst [vmem:[%s170 + $0x50] sm:$0x1] 0
      %335 = vst [vmem:[%s170 + $0x54] sm:$0xf] 0
      %336 = vst [vmem:[%s170 + $0x58] sm:$0xf] 0
      %337 = vst [vmem:[%s170 + $0x5c] sm:$0x1] 0
      %338 = vst [vmem:[%s170 + $0x60] sm:$0xf] 0
      %339 = vst [vmem:[%s170 + $0x64] sm:$0xf] 0
      %340 = vst [vmem:[%s170 + $0x68] sm:$0x1] 0
      %341 = vst [vmem:[%s170 + $0x6c] sm:$0xf] 0
      %342 = vst [vmem:[%s170 + $0x70] sm:$0xf] 0
      %343 = vst [vmem:[%s170 + $0x74] sm:$0x1] 0
      %344 = vst [vmem:[%s170 + $0x78] sm:$0xf] 0
      %345 = vst [vmem:[%s170 + $0x7c] sm:$0xf] 0
      %346 = vst [vmem:[%s170 + $0x80] sm:$0x1] 0
      %347 = vst [vmem:[%s170 + $0x84] sm:$0xf] 0
      %348 = vst [vmem:[%s170 + $0x88] sm:$0xf] 0
      %349 = vst [vmem:[%s170 + $0x8c] sm:$0x1] 0
      %350 = vst [vmem:[%s170 + $0x90] sm:$0xf] 0
      %351 = vst [vmem:[%s170 + $0x94] sm:$0xf] 0
      %352 = vst [vmem:[%s170 + $0x98] sm:$0x1] 0
      %353 = vst [vmem:[%s170 + $0x9c] sm:$0xf] 0
      %354 = vst [vmem:[%s170 + $0xa0] sm:$0xf] 0
      %355 = vst [vmem:[%s170 + $0xa4] sm:$0x1] 0
      %356 = vst [vmem:[%s170 + $0xa8] sm:$0xf] 0
      %357 = vst [vmem:[%s170 + $0xac] sm:$0xf] 0
      %358 = vst [vmem:[%s170 + $0xb0] sm:$0x1] 0
      %359 = vst [vmem:[%s170 + $0xb4] sm:$0xf] 0
      %360 = vst [vmem:[%s170 + $0xb8] sm:$0xf] 0
      %361 = vst [vmem:[%s170 + $0xbc] sm:$0x1] 0
      %362 = vst [vmem:[%s170 + $0xc0] sm:$0xf] 0
      %363 = vst [vmem:[%s170 + $0xc4] sm:$0xf] 0
      %364 = vst [vmem:[%s170 + $0xc8] sm:$0x1] 0
      %365 = vst [vmem:[%s170 + $0xcc] sm:$0xf] 0
      %366 = vst [vmem:[%s170 + $0xd0] sm:$0xf] 0
      %367 = vst [vmem:[%s170 + $0xd4] sm:$0x1] 0
      %v368 = vpack.c.bf16 %v283, %v282
      %v369 = vpack.c.bf16 %v285, %v284
      %v370 = vpack.c.bf16 %v287, %v286
      %v371 = vpack.c.bf16 %v289, %v288
      %v372 = vpack.c.bf16 %v291, %v290
      %v373 = vpack.c.bf16 %v293, %v292
      %v374 = vpack.c.bf16 %v295, %v294
      %v375 = vpack.c.bf16 %v297, %v296
      %v376 = vpack.c.bf16 %v299, %v298
      %v377 = vpack.c.bf16 %v301, %v300
      %v378 = vpack.c.bf16 %v303, %v302
      %v379 = vpack.c.bf16 %v305, %v304
      %v380 = vpack.c.bf16 %v307, %v306
      %v381 = vpack.c.bf16 %v309, %v308
      %v382 = vpack.c.bf16 %v311, %v310
      %v383 = vpack.c.bf16 %v313, %v312
      %v400 = vunpack.c.l.b16 %v368
      %v401 = vunpack.c.h.b16 %v368
      %v402 = vunpack.c.l.b16 %v369
      %v403 = vunpack.c.h.b16 %v369
      %v404 = vunpack.c.l.b16 %v370
      %v405 = vunpack.c.h.b16 %v370
      %v406 = vunpack.c.l.b16 %v371
      %v407 = vunpack.c.h.b16 %v371
      %v408 = vunpack.c.l.b16 %v372
      %v409 = vunpack.c.h.b16 %v372
      %v410 = vunpack.c.l.b16 %v373
      %v411 = vunpack.c.h.b16 %v373
      %v412 = vunpack.c.l.b16 %v374
      %v413 = vunpack.c.h.b16 %v374
      %v414 = vunpack.c.l.b16 %v375
      %v415 = vunpack.c.h.b16 %v375
      %v416 = vunpack.c.l.b16 %v376
      %v417 = vunpack.c.h.b16 %v376
      %v418 = vunpack.c.l.b16 %v377
      %v419 = vunpack.c.h.b16 %v377
      %v420 = vunpack.c.l.b16 %v378
      %v421 = vunpack.c.h.b16 %v378
      %v422 = vunpack.c.l.b16 %v379
      %v423 = vunpack.c.h.b16 %v379
      %v424 = vunpack.c.l.b16 %v380
      %v425 = vunpack.c.h.b16 %v380
      %v426 = vunpack.c.l.b16 %v381
      %v427 = vunpack.c.h.b16 %v381
      %v428 = vunpack.c.l.b16 %v382
      %v429 = vunpack.c.h.b16 %v382
      %v430 = vunpack.c.l.b16 %v383
      %v431 = vunpack.c.h.b16 %v383
      %v432 = vpack.c.b16 %v400, %v400
      %v433 = vpack.c.b16 %v401, %v401
      %v434 = vpack.c.b16 %v402, %v402
      %v435 = vpack.c.b16 %v403, %v403
      %v436 = vpack.c.b16 %v404, %v404
      %v437 = vpack.c.b16 %v405, %v405
      %v438 = vpack.c.b16 %v406, %v406
      %v439 = vpack.c.b16 %v407, %v407
      %v440 = vpack.c.b16 %v408, %v408
      %v441 = vpack.c.b16 %v409, %v409
      %v442 = vpack.c.b16 %v410, %v410
      %v443 = vpack.c.b16 %v411, %v411
      %v444 = vpack.c.b16 %v412, %v412
      %v445 = vpack.c.b16 %v413, %v413
      %v446 = vpack.c.b16 %v414, %v414
      %v447 = vpack.c.b16 %v415, %v415
      %v448 = vpack.c.b16 %v416, %v416
      %v449 = vpack.c.b16 %v417, %v417
      %v450 = vpack.c.b16 %v418, %v418
      %v451 = vpack.c.b16 %v419, %v419
      %v452 = vpack.c.b16 %v420, %v420
      %v453 = vpack.c.b16 %v421, %v421
      %v454 = vpack.c.b16 %v422, %v422
      %v455 = vpack.c.b16 %v423, %v423
      %v456 = vpack.c.b16 %v424, %v424
      %v457 = vpack.c.b16 %v425, %v425
      %v458 = vpack.c.b16 %v426, %v426
      %v459 = vpack.c.b16 %v427, %v427
      %v460 = vpack.c.b16 %v428, %v428
      %v461 = vpack.c.b16 %v429, %v429
      %v462 = vpack.c.b16 %v430, %v430
      %v463 = vpack.c.b16 %v431, %v431
      %vm464 = vsmask.f32 256
      %vm465 = vsmask.f32 4368
      %vm466 = vmor %vm464, %vm465
      %v468 = vshrl.u32 %v432, 16
      %v470 = vrot.slane %v468, 7
      %v471 = vshll.u32 %v432, 16
      %v473 = vor.u32 %v470, %v471
      %v474 = vrot.slane %v470, 4
      %v476 = vshrl.u32 %v433, 16
      %v478 = vrot.slane %v476, 7
      %v479 = vshll.u32 %v433, 16
      %v481 = vor.u32 %v478, %v479
      %v482 = vsel %vm466, %v474, %v481
      %v483 = vrot.slane %v478, 4
      %v485 = vshrl.u32 %v434, 16
      %v487 = vrot.slane %v485, 7
      %v488 = vshll.u32 %v434, 16
      %v490 = vor.u32 %v487, %v488
      %v491 = vrot.slane %v487, 4
      %v493 = vshrl.u32 %v435, 16
      %v495 = vrot.slane %v493, 7
      %v496 = vshll.u32 %v435, 16
      %v498 = vor.u32 %v495, %v496
      %v499 = vsel %vm466, %v491, %v498
      %v500 = vrot.slane %v495, 4
      %v502 = vshrl.u32 %v436, 16
      %v504 = vrot.slane %v502, 7
      %v505 = vshll.u32 %v436, 16
      %v507 = vor.u32 %v504, %v505
      %v508 = vrot.slane %v504, 4
      %v510 = vshrl.u32 %v437, 16
      %v512 = vrot.slane %v510, 7
      %v513 = vshll.u32 %v437, 16
      %v515 = vor.u32 %v512, %v513
      %v516 = vsel %vm466, %v508, %v515
      %v517 = vrot.slane %v512, 4
      %v519 = vshrl.u32 %v438, 16
      %v521 = vrot.slane %v519, 7
      %v522 = vshll.u32 %v438, 16
      %v524 = vor.u32 %v521, %v522
      %v525 = vrot.slane %v521, 4
      %v527 = vshrl.u32 %v439, 16
      %v529 = vrot.slane %v527, 7
      %v530 = vshll.u32 %v439, 16
      %v532 = vor.u32 %v529, %v530
      %v533 = vsel %vm466, %v525, %v532
      %v534 = vrot.slane %v529, 4
      %v536 = vshrl.u32 %v440, 16
      %v538 = vrot.slane %v536, 7
      %v539 = vshll.u32 %v440, 16
      %v541 = vor.u32 %v538, %v539
      %v542 = vrot.slane %v538, 4
      %v544 = vshrl.u32 %v441, 16
      %v546 = vrot.slane %v544, 7
      %v547 = vshll.u32 %v441, 16
      %v549 = vor.u32 %v546, %v547
      %v550 = vsel %vm466, %v542, %v549
      %v551 = vrot.slane %v546, 4
      %v553 = vshrl.u32 %v442, 16
      %v555 = vrot.slane %v553, 7
      %v556 = vshll.u32 %v442, 16
      %v558 = vor.u32 %v555, %v556
      %v559 = vrot.slane %v555, 4
      %v561 = vshrl.u32 %v443, 16
      %v563 = vrot.slane %v561, 7
      %v564 = vshll.u32 %v443, 16
      %v566 = vor.u32 %v563, %v564
      %v567 = vsel %vm466, %v559, %v566
      %v568 = vrot.slane %v563, 4
      %v570 = vshrl.u32 %v444, 16
      %v572 = vrot.slane %v570, 7
      %v573 = vshll.u32 %v444, 16
      %v575 = vor.u32 %v572, %v573
      %v576 = vrot.slane %v572, 4
      %v578 = vshrl.u32 %v445, 16
      %v580 = vrot.slane %v578, 7
      %v581 = vshll.u32 %v445, 16
      %v583 = vor.u32 %v580, %v581
      %v584 = vsel %vm466, %v576, %v583
      %v585 = vrot.slane %v580, 4
      %v587 = vshrl.u32 %v446, 16
      %v589 = vrot.slane %v587, 7
      %v590 = vshll.u32 %v446, 16
      %v592 = vor.u32 %v589, %v590
      %v593 = vrot.slane %v589, 4
      %v595 = vshrl.u32 %v447, 16
      %v597 = vrot.slane %v595, 7
      %v598 = vshll.u32 %v447, 16
      %v600 = vor.u32 %v597, %v598
      %v601 = vsel %vm466, %v593, %v600
      %v602 = vrot.slane %v597, 4
      %v604 = vshrl.u32 %v448, 16
      %v606 = vrot.slane %v604, 7
      %v607 = vshll.u32 %v448, 16
      %v609 = vor.u32 %v606, %v607
      %v610 = vrot.slane %v606, 4
      %v612 = vshrl.u32 %v449, 16
      %v614 = vrot.slane %v612, 7
      %v615 = vshll.u32 %v449, 16
      %v617 = vor.u32 %v614, %v615
      %v618 = vsel %vm466, %v610, %v617
      %v619 = vrot.slane %v614, 4
      %v621 = vshrl.u32 %v450, 16
      %v623 = vrot.slane %v621, 7
      %v624 = vshll.u32 %v450, 16
      %v626 = vor.u32 %v623, %v624
      %v627 = vrot.slane %v623, 4
      %v629 = vshrl.u32 %v451, 16
      %v631 = vrot.slane %v629, 7
      %v632 = vshll.u32 %v451, 16
      %v634 = vor.u32 %v631, %v632
      %v635 = vsel %vm466, %v627, %v634
      %v636 = vrot.slane %v631, 4
      %v638 = vshrl.u32 %v452, 16
      %v640 = vrot.slane %v638, 7
      %v641 = vshll.u32 %v452, 16
      %v643 = vor.u32 %v640, %v641
      %v644 = vrot.slane %v640, 4
      %v646 = vshrl.u32 %v453, 16
      %v648 = vrot.slane %v646, 7
      %v649 = vshll.u32 %v453, 16
      %v651 = vor.u32 %v648, %v649
      %v652 = vsel %vm466, %v644, %v651
      %v653 = vrot.slane %v648, 4
      %v655 = vshrl.u32 %v454, 16
      %v657 = vrot.slane %v655, 7
      %v658 = vshll.u32 %v454, 16
      %v660 = vor.u32 %v657, %v658
      %v661 = vrot.slane %v657, 4
      %v663 = vshrl.u32 %v455, 16
      %v665 = vrot.slane %v663, 7
      %v666 = vshll.u32 %v455, 16
      %v668 = vor.u32 %v665, %v666
      %v669 = vsel %vm466, %v661, %v668
      %v670 = vrot.slane %v665, 4
      %v672 = vshrl.u32 %v456, 16
      %v674 = vrot.slane %v672, 7
      %v675 = vshll.u32 %v456, 16
      %v677 = vor.u32 %v674, %v675
      %v678 = vrot.slane %v674, 4
      %v680 = vshrl.u32 %v457, 16
      %v682 = vrot.slane %v680, 7
      %v683 = vshll.u32 %v457, 16
      %v685 = vor.u32 %v682, %v683
      %v686 = vsel %vm466, %v678, %v685
      %v687 = vrot.slane %v682, 4
      %v689 = vshrl.u32 %v458, 16
      %v691 = vrot.slane %v689, 7
      %v692 = vshll.u32 %v458, 16
      %v694 = vor.u32 %v691, %v692
      %v695 = vrot.slane %v691, 4
      %v697 = vshrl.u32 %v459, 16
      %v699 = vrot.slane %v697, 7
      %v700 = vshll.u32 %v459, 16
      %v702 = vor.u32 %v699, %v700
      %v703 = vsel %vm466, %v695, %v702
      %v704 = vrot.slane %v699, 4
      %v706 = vshrl.u32 %v460, 16
      %v708 = vrot.slane %v706, 7
      %v709 = vshll.u32 %v460, 16
      %v711 = vor.u32 %v708, %v709
      %v712 = vrot.slane %v708, 4
      %v714 = vshrl.u32 %v461, 16
      %v716 = vrot.slane %v714, 7
      %v717 = vshll.u32 %v461, 16
      %v719 = vor.u32 %v716, %v717
      %v720 = vsel %vm466, %v712, %v719
      %v721 = vrot.slane %v716, 4
      %v723 = vshrl.u32 %v462, 16
      %v725 = vrot.slane %v723, 7
      %v726 = vshll.u32 %v462, 16
      %v728 = vor.u32 %v725, %v726
      %v729 = vrot.slane %v725, 4
      %v731 = vshrl.u32 %v463, 16
      %v733 = vrot.slane %v731, 7
      %v734 = vshll.u32 %v463, 16
      %v736 = vor.u32 %v733, %v734
      %v737 = vsel %vm466, %v729, %v736
      %v738 = vrot.slane %v733, 4
      %s787 = scalar_lea.vmem %s170, 12
      %vm788 = vcmask 1043456
      %vm789 = vsmask.f32 7938
      %vm790 = vmand %vm788, %vm789
      %v791 = vld [vmem:[%s787] sm:$0xf]
      %v792 = vsel %vm790, %v473, %v791
      %793 = vst [vmem:[%s787] sm:$0xf] %v792
      %794 = vst [vmem:[%s787 + $0x4] sm:$0xf] %v482
      %vm795 = vcmask 1040384
      %vm796 = vmand %vm795, %vm464
      %v797 = vld [vmem:[%s787 + $0x8] sm:$0x1]
      %v798 = vsel %vm796, %v483, %v797
      %799 = vst [vmem:[%s787 + $0x8] sm:$0x1] %v798
      %v800 = vld [vmem:[%s787 + $0xc] sm:$0xf]
      %v801 = vsel %vm790, %v490, %v800
      %802 = vst [vmem:[%s787 + $0xc] sm:$0xf] %v801
      %803 = vst [vmem:[%s787 + $0x10] sm:$0xf] %v499
      %v804 = vld [vmem:[%s787 + $0x14] sm:$0x1]
      %v805 = vsel %vm796, %v500, %v804
      %806 = vst [vmem:[%s787 + $0x14] sm:$0x1] %v805
      %v807 = vld [vmem:[%s787 + $0x18] sm:$0xf]
      %v808 = vsel %vm790, %v507, %v807
      %809 = vst [vmem:[%s787 + $0x18] sm:$0xf] %v808
      %810 = vst [vmem:[%s787 + $0x1c] sm:$0xf] %v516
      %v811 = vld [vmem:[%s787 + $0x20] sm:$0x1]
      %v812 = vsel %vm796, %v517, %v811
      %813 = vst [vmem:[%s787 + $0x20] sm:$0x1] %v812
      %v814 = vld [vmem:[%s787 + $0x24] sm:$0xf]
      %v815 = vsel %vm790, %v524, %v814
      %816 = vst [vmem:[%s787 + $0x24] sm:$0xf] %v815
      %817 = vst [vmem:[%s787 + $0x28] sm:$0xf] %v533
      %v818 = vld [vmem:[%s787 + $0x2c] sm:$0x1]
      %v819 = vsel %vm796, %v534, %v818
      %820 = vst [vmem:[%s787 + $0x2c] sm:$0x1] %v819
      %v821 = vld [vmem:[%s787 + $0x30] sm:$0xf]
      %v822 = vsel %vm790, %v541, %v821
      %823 = vst [vmem:[%s787 + $0x30] sm:$0xf] %v822
      %824 = vst [vmem:[%s787 + $0x34] sm:$0xf] %v550
      %v825 = vld [vmem:[%s787 + $0x38] sm:$0x1]
      %v826 = vsel %vm796, %v551, %v825
      %827 = vst [vmem:[%s787 + $0x38] sm:$0x1] %v826
      %v828 = vld [vmem:[%s787 + $0x3c] sm:$0xf]
      %v829 = vsel %vm790, %v558, %v828
      %830 = vst [vmem:[%s787 + $0x3c] sm:$0xf] %v829
      %831 = vst [vmem:[%s787 + $0x40] sm:$0xf] %v567
      %v832 = vld [vmem:[%s787 + $0x44] sm:$0x1]
      %v833 = vsel %vm796, %v568, %v832
      %834 = vst [vmem:[%s787 + $0x44] sm:$0x1] %v833
      %v835 = vld [vmem:[%s787 + $0x48] sm:$0xf]
      %v836 = vsel %vm790, %v575, %v835
      %837 = vst [vmem:[%s787 + $0x48] sm:$0xf] %v836
      %838 = vst [vmem:[%s787 + $0x4c] sm:$0xf] %v584
      %v839 = vld [vmem:[%s787 + $0x50] sm:$0x1]
      %v840 = vsel %vm796, %v585, %v839
      %841 = vst [vmem:[%s787 + $0x50] sm:$0x1] %v840
      %v842 = vld [vmem:[%s787 + $0x54] sm:$0xf]
      %v843 = vsel %vm790, %v592, %v842
      %844 = vst [vmem:[%s787 + $0x54] sm:$0xf] %v843
      %845 = vst [vmem:[%s787 + $0x58] sm:$0xf] %v601
      %v846 = vld [vmem:[%s787 + $0x5c] sm:$0x1]
      %v847 = vsel %vm796, %v602, %v846
      %848 = vst [vmem:[%s787 + $0x5c] sm:$0x1] %v847
      %v849 = vld [vmem:[%s787 + $0x60] sm:$0xf]
      %v850 = vsel %vm790, %v609, %v849
      %851 = vst [vmem:[%s787 + $0x60] sm:$0xf] %v850
      %852 = vst [vmem:[%s787 + $0x64] sm:$0xf] %v618
      %v853 = vld [vmem:[%s787 + $0x68] sm:$0x1]
      %v854 = vsel %vm796, %v619, %v853
      %855 = vst [vmem:[%s787 + $0x68] sm:$0x1] %v854
      %v856 = vld [vmem:[%s787 + $0x6c] sm:$0xf]
      %v857 = vsel %vm790, %v626, %v856
      %858 = vst [vmem:[%s787 + $0x6c] sm:$0xf] %v857
      %859 = vst [vmem:[%s787 + $0x70] sm:$0xf] %v635
      %v860 = vld [vmem:[%s787 + $0x74] sm:$0x1]
      %v861 = vsel %vm796, %v636, %v860
      %862 = vst [vmem:[%s787 + $0x74] sm:$0x1] %v861
      %v863 = vld [vmem:[%s787 + $0x78] sm:$0xf]
      %v864 = vsel %vm790, %v643, %v863
      %865 = vst [vmem:[%s787 + $0x78] sm:$0xf] %v864
      %866 = vst [vmem:[%s787 + $0x7c] sm:$0xf] %v652
      %v867 = vld [vmem:[%s787 + $0x80] sm:$0x1]
      %v868 = vsel %vm796, %v653, %v867
      %869 = vst [vmem:[%s787 + $0x80] sm:$0x1] %v868
      %v870 = vld [vmem:[%s787 + $0x84] sm:$0xf]
      %v871 = vsel %vm790, %v660, %v870
      %872 = vst [vmem:[%s787 + $0x84] sm:$0xf] %v871
      %873 = vst [vmem:[%s787 + $0x88] sm:$0xf] %v669
      %v874 = vld [vmem:[%s787 + $0x8c] sm:$0x1]
      %v875 = vsel %vm796, %v670, %v874
      %876 = vst [vmem:[%s787 + $0x8c] sm:$0x1] %v875
      %v877 = vld [vmem:[%s787 + $0x90] sm:$0xf]
      %v878 = vsel %vm790, %v677, %v877
      %879 = vst [vmem:[%s787 + $0x90] sm:$0xf] %v878
      %880 = vst [vmem:[%s787 + $0x94] sm:$0xf] %v686
      %v881 = vld [vmem:[%s787 + $0x98] sm:$0x1]
      %v882 = vsel %vm796, %v687, %v881
      %883 = vst [vmem:[%s787 + $0x98] sm:$0x1] %v882
      %v884 = vld [vmem:[%s787 + $0x9c] sm:$0xf]
      %v885 = vsel %vm790, %v694, %v884
      %886 = vst [vmem:[%s787 + $0x9c] sm:$0xf] %v885
      %887 = vst [vmem:[%s787 + $0xa0] sm:$0xf] %v703
      %v888 = vld [vmem:[%s787 + $0xa4] sm:$0x1]
      %v889 = vsel %vm796, %v704, %v888
      %890 = vst [vmem:[%s787 + $0xa4] sm:$0x1] %v889
      %v891 = vld [vmem:[%s787 + $0xa8] sm:$0xf]
      %v892 = vsel %vm790, %v711, %v891
      %893 = vst [vmem:[%s787 + $0xa8] sm:$0xf] %v892
      %894 = vst [vmem:[%s787 + $0xac] sm:$0xf] %v720
      %v895 = vld [vmem:[%s787 + $0xb0] sm:$0x1]
      %v896 = vsel %vm796, %v721, %v895
      %897 = vst [vmem:[%s787 + $0xb0] sm:$0x1] %v896
      %v898 = vld [vmem:[%s787 + $0xb4] sm:$0xf]
      %v899 = vsel %vm790, %v728, %v898
      %900 = vst [vmem:[%s787 + $0xb4] sm:$0xf] %v899
      %901 = vst [vmem:[%s787 + $0xb8] sm:$0xf] %v737
      %v902 = vld [vmem:[%s787 + $0xbc] sm:$0x1]
      %v903 = vsel %vm796, %v738, %v902
      %904 = vst [vmem:[%s787 + $0xbc] sm:$0x1] %v903
      %p905 = scmp.lt.s32.totalorder %s14, 1
      %s906 = scalar_select %p905, %s14, 1
      %s907 = smul.addr %s906, 54
      %s908 = smul.addr %s907, 4
      %s909 = scalar_lea.vmem %s3, %s908
      // Predicated region
      $region33: #{preact_block_forward.3} parent=31 // pred_check
        %p910 = pneg %p100
      $region34: #{preact_block_forward.3} parent=31 // pred_check_branch
        %912 = sbr.rel (%p910) target = $region36
      $region35: #{preact_block_forward.3} parent=31 // pred_region
        _
      $region36: #{preact_block_forward.3} parent=31 // pred_fallthru
        _
    $region32: #{preact_block_forward.3} parent=5 // pred_fallthru
      _
    %p913 = scmp.le.s32.totalorder 2, %s9
    // Predicated region
    $region37: #{preact_block_forward.3} parent=5 // pred_check
      %p914 = pneg %p913
    $region38: #{preact_block_forward.3} parent=5 // pred_check_branch
      %916 = sbr.rel (%p914) target = $region40
    $region39: #{preact_block_forward.3} parent=5 // pred_region
      %s917 = ssub.s32 %s9, 2
      // Predicated region
      $region41: #{preact_block_forward.3} parent=39 // pred_check
        %p918 = pneg %p106
      $region42: #{preact_block_forward.3} parent=39 // pred_check_branch
        %920 = sbr.rel (%p918) target = $region44
      $region43: #{preact_block_forward.3} parent=39 // pred_region
        %p921 = scmp.lt.s32.totalorder %s15, 1
        %s922 = scalar_select %p921, %s15, 1
        %s923 = smul.addr %s922, 54
        %s924 = smul.addr %s923, 4
        %s925 = scalar_lea.vmem %s3, %s924
      $region44: #{preact_block_forward.3} parent=39 // pred_fallthru
        _
    $region40: #{preact_block_forward.3} parent=5 // pred_fallthru
      _
  $region6: #{preact_block_forward.3} parent=0 // loop_footer
    %s13 = sadd.s32 1, %s9
  $region7: #{preact_block_forward.3} parent=0 // loop_footer_branch
    %8 = sbr.rel target = $region3
  $region8: #{preact_block_forward.3} parent=0 // loop_exit
    _

// kernel: preact_block_forward.4
$region0: #{preact_block_forward.4}
  #allocation0 [shape = 'u32[]', space=smem, size = 0x4, offset = 0x4, fixed_abs, tag = 'smem constant byte address 0x4 - core index']
  #allocation1 [shape = 'u32[144,128]{1,0:T(1,128)}', space=vmem, size = 0x12000, scoped, tag = 'internal scratch']
  %s0 = inlined_call_operand.vmem [shape: bf16[2,36,9,128], index: 0, kind: input, shape index: {}]
  %s1 = inlined_call_operand.vmem [shape: bf16[3,3,128,128], index: 1, kind: input, shape index: {}]
  %s2 = inlined_call_operand.vmem [shape: f32[1,128], index: 2, kind: input, shape index: {}]
  %s3 = inlined_call_operand.vmem [shape: f32[1,128], index: 3, kind: input, shape index: {}]
  %s4 = inlined_call_operand.vmem [shape: bf16[2,10,10,128], index: 4, kind: output, shape index: {}]
  %s5 = sld [smem:[#allocation0]]
  $region49: #{preact_block_forward.4} parent=0
    _
  %s7 = ssub.s32 1, %s5
  %s8 = scalar_select 0, %s7, %s5
  loop: start=0, step=1, limit=4
  $region2: #{preact_block_forward.4} parent=0 // loop_pre_header
    _
  $region3: #{preact_block_forward.4} parent=0 // loop_header
    %s10 = sphi 0, %s14
    %p11 = scmp.ge.s32.totalorder %s10, 4
    %s17 = sphi 0, %s29
    %s18 = sphi 0, %s25
    %s19 = sphi 0, %s17
    %s20 = sphi 0, %s18
    %s21 = sphi 0, %s19
    %s22 = sphi 0, %s20
    %s32 = sphi 0, %s34
    %s35 = sphi 0, %s32
    %s36 = sphi 0, %s35
    %s52 = sphi 0, %s36
    %s58 = sphi 0, %s60
    %s61 = sphi 0, %s58
    %s62 = sphi 0, %s61
    %s78 = sphi 0, %s62
    %s84 = sphi 0, %s86
    %s87 = sphi 0, %s84
    %s88 = sphi 0, %s87
    %s104 = sphi 0, %s88
    %s110 = sphi 0, %s112
    %s113 = sphi 0, %s110
    %s114 = sphi 0, %s113
    %s130 = sphi 0, %s114
    %s138 = sphi 0, %s140
    %s141 = sphi 0, %s138
    %s142 = sphi 0, %s141
    %s158 = sphi 0, %s142
  $region4: #{preact_block_forward.4} parent=0 // loop_header_branch
    %13 = sbr.rel (%p11) target = $region8
  $region5: #{preact_block_forward.4} parent=0 // loop_body
    %s15 = ssub.s32 %s10, 1
    %s16 = ssub.s32 %s10, 2
    %s23 = sadd.s32 1, %s18
    %p24 = scmp.ge.s32.totalorder %s23, 1
    %s25 = scalar_select %p24, 0, %s23
    %s26 = sadd.s32 1, %s17
    %s27 = scalar_select %p24, %s26, %s17
    %p28 = scmp.ge.s32.totalorder %s27, 2
    %s29 = scalar_select %p28, 0, %s27
    %s30 = ssub.s32 %s17, %s29
    %p31 = scmp.eq.s32.totalorder %s30, 0
    %s33 = sadd.s32 %s32, 1
    %s34 = scalar_select %p31, %s32, %s33
    %p37 = pneg %p31
    %p38 = scmp.eq.s32.totalorder %s10, 1
    %p39 = por %p37, %p38
    %p40 = scmp.ne.s32.totalorder %s32, %s35
    %p41 = scmp.eq.s32.totalorder %s10, 0
    %p42 = por %p40, %p41
    %p43 = scmp.ne.s32.totalorder %s32, %s35
    %p44 = scmp.eq.s32.totalorder %s15, 1
    %p45 = por %p43, %p44
    %p46 = scmp.ne.s32.totalorder %s35, %s36
    %p47 = scmp.eq.s32.totalorder %s15, 0
    %p48 = por %p46, %p47
    %p49 = scmp.ne.s32.totalorder %s35, %s36
    %p50 = scmp.eq.s32.totalorder %s16, 1
    %p51 = por %p49, %p50
    %p53 = scmp.ne.s32.totalorder %s36, %s52
    %p54 = scmp.eq.s32.totalorder %s16, 0
    %p55 = por %p53, %p54
    %s56 = ssub.s32 %s18, %s25
    %p57 = scmp.eq.s32.totalorder %s56, 0
    %s59 = sadd.s32 %s58, 1
    %s60 = scalar_select %p57, %s58, %s59
    %p63 = pneg %p57
    %p64 = scmp.eq.s32.totalorder %s10, 1
    %p65 = por %p63, %p64
    %p66 = scmp.ne.s32.totalorder %s58, %s61
    %p67 = scmp.eq.s32.totalorder %s10, 0
    %p68 = por %p66, %p67
    %p69 = scmp.ne.s32.totalorder %s58, %s61
    %p70 = scmp.eq.s32.totalorder %s15, 1
    %p71 = por %p69, %p70
    %p72 = scmp.ne.s32.totalorder %s61, %s62
    %p73 = scmp.eq.s32.totalorder %s15, 0
    %p74 = por %p72, %p73
    %p75 = scmp.ne.s32.totalorder %s61, %s62
    %p76 = scmp.eq.s32.totalorder %s16, 1
    %p77 = por %p75, %p76
    %p79 = scmp.ne.s32.totalorder %s62, %s78
    %p80 = scmp.eq.s32.totalorder %s16, 0
    %p81 = por %p79, %p80
    %s82 = ssub.s32 %s18, %s25
    %p83 = scmp.eq.s32.totalorder %s82, 0
    %s85 = sadd.s32 %s84, 1
    %s86 = scalar_select %p83, %s84, %s85
    %p89 = pneg %p83
    %p90 = scmp.eq.s32.totalorder %s10, 1
    %p91 = por %p89, %p90
    %p92 = scmp.ne.s32.totalorder %s84, %s87
    %p93 = scmp.eq.s32.totalorder %s10, 0
    %p94 = por %p92, %p93
    %p95 = scmp.ne.s32.totalorder %s84, %s87
    %p96 = scmp.eq.s32.totalorder %s15, 1
    %p97 = por %p95, %p96
    %p98 = scmp.ne.s32.totalorder %s87, %s88
    %p99 = scmp.eq.s32.totalorder %s15, 0
    %p100 = por %p98, %p99
    %p101 = scmp.ne.s32.totalorder %s87, %s88
    %p102 = scmp.eq.s32.totalorder %s16, 1
    %p103 = por %p101, %p102
    %p105 = scmp.ne.s32.totalorder %s88, %s104
    %p106 = scmp.eq.s32.totalorder %s16, 0
    %p107 = por %p105, %p106
    %s108 = ssub.s32 %s18, %s25
    %p109 = scmp.eq.s32.totalorder %s108, 0
    %s111 = sadd.s32 %s110, 1
    %s112 = scalar_select %p109, %s110, %s111
    %p115 = pneg %p109
    %p116 = scmp.eq.s32.totalorder %s10, 1
    %p117 = por %p115, %p116
    %p118 = scmp.ne.s32.totalorder %s110, %s113
    %p119 = scmp.eq.s32.totalorder %s10, 0
    %p120 = por %p118, %p119
    %p121 = scmp.ne.s32.totalorder %s110, %s113
    %p122 = scmp.eq.s32.totalorder %s15, 1
    %p123 = por %p121, %p122
    %p124 = scmp.ne.s32.totalorder %s113, %s114
    %p125 = scmp.eq.s32.totalorder %s15, 0
    %p126 = por %p124, %p125
    %p127 = scmp.ne.s32.totalorder %s113, %s114
    %p128 = scmp.eq.s32.totalorder %s16, 1
    %p129 = por %p127, %p128
    %p131 = scmp.ne.s32.totalorder %s114, %s130
    %p132 = scmp.eq.s32.totalorder %s16, 0
    %p133 = por %p131, %p132
    %s134 = ssub.s32 %s17, %s29
    %s135 = ssub.s32 %s18, %s25
    %s136 = sor.u32 %s134, %s135
    %p137 = scmp.eq.s32.totalorder %s136, 0
    %s139 = sadd.s32 %s138, 1
    %s140 = scalar_select %p137, %s138, %s139
    %p143 = pneg %p137
    %p144 = scmp.eq.s32.totalorder %s10, 1
    %p145 = por %p143, %p144
    %p146 = scmp.ne.s32.totalorder %s138, %s141
    %p147 = scmp.eq.s32.totalorder %s10, 0
    %p148 = por %p146, %p147
    %p149 = scmp.ne.s32.totalorder %s138, %s141
    %p150 = scmp.eq.s32.totalorder %s15, 1
    %p151 = por %p149, %p150
    %p152 = scmp.ne.s32.totalorder %s141, %s142
    %p153 = scmp.eq.s32.totalorder %s15, 0
    %p154 = por %p152, %p153
    %p155 = scmp.ne.s32.totalorder %s141, %s142
    %p156 = scmp.eq.s32.totalorder %s16, 1
    %p157 = por %p155, %p156
    %p159 = scmp.ne.s32.totalorder %s142, %s158
    %p160 = scmp.eq.s32.totalorder %s16, 0
    %p161 = por %p159, %p160
    %p162 = scmp.le.s32.totalorder 1, %s10
    %p163 = scmp.lt.s32.totalorder %s10, 3
    %p164 = pnand %p162, %p163
    %p165 = pneg %p164
    // Predicated region
    $region9: #{preact_block_forward.4} parent=5 // pred_check
      _
    $region10: #{preact_block_forward.4} parent=5 // pred_check_branch
      %167 = sbr.rel (%p164) target = $region12
    $region11: #{preact_block_forward.4} parent=5 // pred_region
      %s168 = ssub.s32 %s10, 1
      // Predicated region
      $region13: #{preact_block_forward.4} parent=11 // pred_check
        %p169 = pneg %p74
      $region14: #{preact_block_forward.4} parent=11 // pred_check_branch
        %171 = sbr.rel (%p169) target = $region16
      $region15: #{preact_block_forward.4} parent=11 // pred_region
        %p172 = scmp.lt.s32.totalorder %s20, 0
        %s173 = scalar_select %p172, %s20, 0
        %s174 = smul.addr %s173, 4
        %s175 = scalar_lea.vmem %s1, %s174
      $region16: #{preact_block_forward.4} parent=11 // pred_fallthru
        _
      // Predicated region
      $region17: #{preact_block_forward.4} parent=11 // pred_check
        %p176 = pneg %p100
      $region18: #{preact_block_forward.4} parent=11 // pred_check_branch
        %178 = sbr.rel (%p176) target = $region20
      $region19: #{preact_block_forward.4} parent=11 // pred_region
        %p179 = scmp.lt.s32.totalorder %s20, 0
        %s180 = scalar_select %p179, %s20, 0
        %s181 = scalar_lea.vmem %s2, %s180
      $region20: #{preact_block_forward.4} parent=11 // pred_fallthru
        _
      // Predicated region
      $region21: #{preact_block_forward.4} parent=11 // pred_check
        %p182 = pneg %p126
      $region22: #{preact_block_forward.4} parent=11 // pred_check_branch
        %184 = sbr.rel (%p182) target = $region24
      $region23: #{preact_block_forward.4} parent=11 // pred_region
        %p185 = scmp.lt.s32.totalorder %s20, 0
        %s186 = scalar_select %p185, %s20, 0
        %s187 = scalar_lea.vmem %s3, %s186
      $region24: #{preact_block_forward.4} parent=11 // pred_fallthru
        _
    $region12: #{preact_block_forward.4} parent=5 // pred_fallthru
      _
    %p188 = scmp.lt.s32.totalorder %s10, 2
    // Predicated region
    $region25: #{preact_block_forward.4} parent=5 // pred_check
      %p189 = pneg %p188
    $region26: #{preact_block_forward.4} parent=5 // pred_check_branch
      %191 = sbr.rel (%p189) target = $region28
    $region27: #{preact_block_forward.4} parent=5 // pred_region
      // Predicated region
      $region29: #{preact_block_forward.4} parent=27 // pred_check
        %p192 = pneg %p42
      $region30: #{preact_block_forward.4} parent=27 // pred_check_branch
        %194 = sbr.rel (%p192) target = $region32
      $region31: #{preact_block_forward.4} parent=27 // pred_region
        %p195 = scmp.lt.s32.totalorder %s17, 1
        %s196 = scalar_select %p195, %s17, 1
        %s197 = smul.addr %s196, 72
        %s198 = smul.addr %s197, 4
        %s199 = scalar_lea.vmem %s0, %s198
      $region32: #{preact_block_forward.4} parent=27 // pred_fallthru
        _
    $region28: #{preact_block_forward.4} parent=5 // pred_fallthru
      _
    %p200 = scmp.le.s32.totalorder 1, %s10
    %p201 = scmp.lt.s32.totalorder %s10, 3
    %p202 = pnand %p200, %p201
    %p203 = pneg %p202
    // Predicated region
    $region33: #{preact_block_forward.4} parent=5 // pred_check
      _
    $region34: #{preact_block_forward.4} parent=5 // pred_check_branch
      %205 = sbr.rel (%p202) target = $region36
    $region35: #{preact_block_forward.4} parent=5 // pred_region
      %s206 = ssub.s32 %s10, 1
      %p207 = scmp.lt.s32.totalorder %s19, 1
      %s208 = scalar_select %p207, %s19, 1
      %s209 = smul.addr %s208, 72
      %s210 = smul.addr %s209, 4
      %s211 = scalar_lea.vmem %s0, %s210
      %p212 = pneg %p48
      %p213 = pneg %p45
      %p214 = scmp.lt.s32.totalorder %s20, 0
      %s215 = scalar_select %p214, %s20, 0
      %s216 = smul.addr %s215, 4
      %s217 = scalar_lea.vmem %s1, %s216
      %p218 = pneg %p74
      %p219 = pneg %p71
      %p220 = scmp.lt.s32.totalorder %s20, 0
      %s221 = scalar_select %p220, %s20, 0
      %s222 = scalar_lea.vmem %s2, %s221
      %p223 = pneg %p100
      %p224 = pneg %p97
      %p225 = scmp.lt.s32.totalorder %s20, 0
      %s226 = scalar_select %p225, %s20, 0
      %s227 = scalar_lea.vmem %s3, %s226
      %p228 = pneg %p126
      %p229 = pneg %p123
      %p230 = pneg %p154
      %p231 = pneg %p151
      %p232 = scmp.lt.s32.totalorder %s19, 1
      %s233 = scalar_select %p232, %s19, 1
      %p234 = scmp.lt.s32.totalorder %s20, 0
      %s235 = scalar_select %p234, %s20, 0
      %s236 = smul.addr %s233, 20
      %s237 = sadd.s32 %s235, %s236
      %s238 = smul.addr %s237, 4
      %s239 = scalar_lea.vmem %s4, %s238
      %p240 = scmp.lt.s32.totalorder %s19, 1
      %s241 = scalar_select %p240, %s19, 1
      %s242 = smul.addr %s241, 72
      %s243 = smul.addr %s242, 4
      %s244 = scalar_lea.vmem %s0, %s243
      %p245 = scmp.lt.s32.totalorder %s20, 0
      %s246 = scalar_select %p245, %s20, 0
      %s247 = smul.addr %s246, 4
      %s248 = scalar_lea.vmem %s1, %s247
      %p249 = scmp.lt.s32.totalorder %s20, 0
      %s250 = scalar_select %p249, %s20, 0
      %s251 = scalar_lea.vmem %s2, %s250
      %p252 = scmp.lt.s32.totalorder %s20, 0
      %s253 = scalar_select %p252, %s20, 0
      %s254 = scalar_lea.vmem %s3, %s253
      %p255 = scmp.lt.s32.totalorder %s19, 1
      %s256 = scalar_select %p255, %s19, 1
      %p257 = scmp.lt.s32.totalorder %s20, 0
      %s258 = scalar_select %p257, %s20, 0
      %s259 = smul.addr %s256, 20
      %s260 = sadd.s32 %s258, %s259
      %s261 = smul.addr %s260, 4
      %s262 = scalar_lea.vmem %s4, %s261
      %v264 = vld [vmem:[%s244] sm:$0xf]
      %v265 = vld [vmem:[%s244 + $0x8] sm:$0xf]
      %v266 = vld [vmem:[%s244 + $0x10] sm:$0xf]
      %v267 = vld [vmem:[%s244 + $0x18] sm:$0xf]
      %v268 = vld [vmem:[%s244 + $0x20] sm:$0xf]
      %v269 = vld [vmem:[%s244 + $0x28] sm:$0xf]
      %v270 = vld [vmem:[%s244 + $0x30] sm:$0xf]
      %v271 = vld [vmem:[%s244 + $0x38] sm:$0xf]
      %v272 = vld [vmem:[%s248] sm:$0xf]
      %v273 = vld [vmem:[%s248 + $0x4] sm:$0xf]
      %v274 = vld [vmem:[%s248 + $0x8] sm:$0xf]
      %v275 = vld [vmem:[%s248 + $0xc] sm:$0xf]
      %v276 = vld [vmem:[%s248 + $0x10] sm:$0xf]
      %v277 = vld [vmem:[%s248 + $0x14] sm:$0xf]
      %v278 = vld [vmem:[%s248 + $0x18] sm:$0xf]
      %v279 = vld [vmem:[%s248 + $0x1c] sm:$0xf]
      %v280 = vld [vmem:[%s248 + $0x20] sm:$0xf]
      %v281 = vld [vmem:[%s248 + $0x24] sm:$0xf]
      %v282 = vld [vmem:[%s248 + $0x28] sm:$0xf]
      %v283 = vld [vmem:[%s248 + $0x2c] sm:$0xf]
      %v284 = vld [vmem:[%s248 + $0x30] sm:$0xf]
      %v285 = vld [vmem:[%s248 + $0x34] sm:$0xf]
      %v286 = vld [vmem:[%s248 + $0x38] sm:$0xf]
      %v287 = vld [vmem:[%s248 + $0x3c] sm:$0xf]
      %s288 = scalar_lea.vmem %s244, 72
      %v289 = vld [vmem:[%s288] sm:$0xf]
      %v290 = vld [vmem:[%s288 + $0x8] sm:$0xf]
      %v291 = vld [vmem:[%s288 + $0x10] sm:$0xf]
      %v292 = vld [vmem:[%s288 + $0x18] sm:$0xf]
      %v293 = vld [vmem:[%s288 + $0x20] sm:$0xf]
      %v294 = vld [vmem:[%s288 + $0x28] sm:$0xf]
      %v295 = vld [vmem:[%s288 + $0x30] sm:$0xf]
      %v296 = vld [vmem:[%s288 + $0x38] sm:$0xf]
      %s297 = scalar_lea.vmem %s248, 64
      %v298 = vld [vmem:[%s297] sm:$0xf]
      %v299 = vld [vmem:[%s297 + $0x4] sm:$0xf]
      %v300 = vld [vmem:[%s297 + $0x8] sm:$0xf]
      %v301 = vld [vmem:[%s297 + $0xc] sm:$0xf]
      %v302 = vld [vmem:[%s297 + $0x10] sm:$0xf]
      %v303 = vld [vmem:[%s297 + $0x14] sm:$0xf]
      %v304 = vld [vmem:[%s297 + $0x18] sm:$0xf]
      %v305 = vld [vmem:[%s297 + $0x1c] sm:$0xf]
      %v306 = vld [vmem:[%s297 + $0x20] sm:$0xf]
      %v307 = vld [vmem:[%s297 + $0x24] sm:$0xf]
      %v308 = vld [vmem:[%s297 + $0x28] sm:$0xf]
      %v309 = vld [vmem:[%s297 + $0x2c] sm:$0xf]
      %v310 = vld [vmem:[%s297 + $0x30] sm:$0xf]
      %v311 = vld [vmem:[%s297 + $0x34] sm:$0xf]
      %v312 = vld [vmem:[%s297 + $0x38] sm:$0xf]
      %v313 = vld [vmem:[%s297 + $0x3c] sm:$0xf]
      %v322 = vunpack.c.l.b16 %v289
      %v323 = vunpack.c.l.b16 %v290
      %v324 = vunpack.c.l.b16 %v291
      %v325 = vunpack.c.l.b16 %v292
      %v326 = vunpack.c.l.b16 %v293
      %v327 = vunpack.c.l.b16 %v294
      %v328 = vunpack.c.l.b16 %v295
      %v329 = vunpack.c.l.b16 %v296
      %v330 = vpack.c.b16 %v323, %v322
      %v331 = vpack.c.b16 %v325, %v324
      %v332 = vpack.c.b16 %v327, %v326
      %v333 = vpack.c.b16 %v329, %v328
      %v354 = vunpack.c.l.b16 %v298
      %v355 = vunpack.c.l.b16 %v299
      %v356 = vunpack.c.l.b16 %v300
      %v357 = vunpack.c.l.b16 %v301
      %v358 = vunpack.c.l.b16 %v302
      %v359 = vunpack.c.l.b16 %v303
      %v360 = vunpack.c.l.b16 %v304
      %v361 = vunpack.c.l.b16 %v305
      %v362 = vunpack.c.l.b16 %v306
      %v363 = vunpack.c.l.b16 %v307
      %v364 = vunpack.c.l.b16 %v308
      %v365 = vunpack.c.l.b16 %v309
      %v366 = vunpack.c.l.b16 %v310
      %v367 = vunpack.c.l.b16 %v311
      %v368 = vunpack.c.l.b16 %v312
      %v369 = vunpack.c.l.b16 %v313
      %v370 = vpack.c.b16 %v355, %v354
      %v371 = vpack.c.b16 %v357, %v356
      %v372 = vpack.c.b16 %v359, %v358
      %v373 = vpack.c.b16 %v361, %v360
      %v374 = vpack.c.b16 %v363, %v362
      %v375 = vpack.c.b16 %v365, %v364
      %v376 = vpack.c.b16 %v367, %v366
      %v377 = vpack.c.b16 %v369, %v368
      %386 = vmatprep.subr.bf16.mxu0 0
      %387 = vmatpush1.bf16.msra.mxu0 %v370
      %388 = vmatprep.subr.bf16.mxu0 0
      %389 = vmatpush1.bf16.msra.mxu0 %v371
      %390 = vmatprep.subr.bf16.mxu0 0
      %391 = vmatpush1.bf16.msra.mxu0 %v372
      %392 = vmatprep.subr.bf16.mxu0 0
      %393 = vmatpush1.bf16.msra.mxu0 %v373
      %394 = vmatprep.subr.bf16.mxu0 0
      %395 = vmatpush1.bf16.msra.mxu0 %v374
      %396 = vmatprep.subr.bf16.mxu0 0
      %397 = vmatpush1.bf16.msra.mxu0 %v375
      %398 = vmatprep.subr.bf16.mxu0 0
      %399 = vmatpush1.bf16.msra.mxu0 %v376
      %400 = vmatprep.subr.bf16.mxu0 0
      %401 = vmatpush1.bf16.msra.mxu0 %v377
      %402 = vmatprep.subr.bf16.mxu0 0
      %403 = vmatpush1.bf16.msra.mxu0 0
      %404 = vmatprep.subr.bf16.mxu0 0
      %405 = vmatpush1.bf16.msra.mxu0 0
      %406 = vmatprep.subr.bf16.mxu0 0
      %407 = vmatpush1.bf16.msra.mxu0 0
      %408 = vmatprep.subr.bf16.mxu0 0
      %409 = vmatpush1.bf16.msra.mxu0 0
      %410 = vmatprep.subr.bf16.mxu0 0
      %411 = vmatpush1.bf16.msra.mxu0 0
      %412 = vmatprep.subr.bf16.mxu0 0
      %413 = vmatpush1.bf16.msra.mxu0 0
      %414 = vmatprep.subr.bf16.mxu0 0
      %415 = vmatpush1.bf16.msra.mxu0 0
      %416 = vmatprep.subr.bf16.mxu0 0
      %417 = vmatpush1.bf16.msra.mxu0 0
      %418 = vmatprep.mubr.bf16.mxu0 0
      %419 = vmatmul.mubr.bf16.gmra.mrb[0].mxu0 %v330
      %v420 = vpop.f32.mrb[0].mxu0
      %v421 = vadd.f32 0.0, %v420
      %v422 = vpop.f32.mrb[0].mxu0
      %v423 = vpop.f32.mrb[0].mxu0
      %v424 = vadd.f32 0.0, %v423
      %v425 = vpop.f32.mrb[0].mxu0
      %426 = vmatprep.mubr.bf16.mxu0 0
      %427 = vmatmul.mubr.bf16.gmra.mrb[0].mxu0 %v331
      %v428 = vpop.f32.mrb[0].mxu0
      %v429 = vadd.f32 0.0, %v428
      %v430 = vpop.f32.mrb[0].mxu0
      %v431 = vpop.f32.mrb[0].mxu0
      %v432 = vadd.f32 0.0, %v431
      %v433 = vpop.f32.mrb[0].mxu0
      %434 = vmatprep.mubr.bf16.mxu0 0
      %435 = vmatmul.mubr.bf16.gmra.mrb[0].mxu0 %v332
      %v436 = vpop.f32.mrb[0].mxu0
      %v437 = vadd.f32 0.0, %v436
      %v438 = vpop.f32.mrb[0].mxu0
      %v439 = vpop.f32.mrb[0].mxu0
      %v440 = vadd.f32 0.0, %v439
      %v441 = vpop.f32.mrb[0].mxu0
      %442 = vmatprep.mubr.bf16.mxu0 0
      %443 = vmatmul.mubr.bf16.gmra.mrb[0].mxu0 %v333
      %v444 = vpop.f32.mrb[0].mxu0
      %v445 = vadd.f32 0.0, %v444
      %v446 = vpop.f32.mrb[0].mxu0
      %v447 = vpop.f32.mrb[0].mxu0
      %v448 = vadd.f32 0.0, %v447
      %v449 = vpop.f32.mrb[0].mxu0
      %450 = vdwg.mxu0
      %v459 = vunpack.c.l.b16 %v264
      %v460 = vunpack.c.l.b16 %v265
      %v461 = vunpack.c.l.b16 %v266
      %v462 = vunpack.c.l.b16 %v267
      %v463 = vunpack.c.l.b16 %v268
      %v464 = vunpack.c.l.b16 %v269
      %v465 = vunpack.c.l.b16 %v270
      %v466 = vunpack.c.l.b16 %v271
      %v467 = vpack.c.b16 %v460, %v459
      %v468 = vpack.c.b16 %v462, %v461
      %v469 = vpack.c.b16 %v464, %v463
      %v470 = vpack.c.b16 %v466, %v465
      %v491 = vunpack.c.l.b16 %v272
      %v492 = vunpack.c.l.b16 %v273
      %v493 = vunpack.c.l.b16 %v274
      %v494 = vunpack.c.l.b16 %v275
      %v495 = vunpack.c.l.b16 %v276
      %v496 = vunpack.c.l.b16 %v277
      %v497 = vunpack.c.l.b16 %v278
      %v498 = vunpack.c.l.b16 %v279
      %v499 = vunpack.c.l.b16 %v280
      %v500 = vunpack.c.l.b16 %v281
      %v501 = vunpack.c.l.b16 %v282
      %v502 = vunpack.c.l.b16 %v283
      %v503 = vunpack.c.l.b16 %v284
      %v504 = vunpack.c.l.b16 %v285
      %v505 = vunpack.c.l.b16 %v286
      %v506 = vunpack.c.l.b16 %v287
      %v507 = vpack.c.b16 %v492, %v491
      %v508 = vpack.c.b16 %v494, %v493
      %v509 = vpack.c.b16 %v496, %v495
      %v510 = vpack.c.b16 %v498, %v497
      %v511 = vpack.c.b16 %v500, %v499
      %v512 = vpack.c.b16 %v502, %v501
      %v513 = vpack.c.b16 %v504, %v503
      %v514 = vpack.c.b16 %v506, %v505
      %523 = vmatprep.subr.bf16.mxu0 0
      %524 = vmatpush1.bf16.msra.mxu0 %v507
      %525 = vmatprep.subr.bf16.mxu0 0
      %526 = vmatpush1.bf16.msra.mxu0 %v508
      %527 = vmatprep.subr.bf16.mxu0 0
      %528 = vmatpush1.bf16.msra.mxu0 %v509
      %529 = vmatprep.subr.bf16.mxu0 0
      %530 = vmatpush1.bf16.msra.mxu0 %v510
      %531 = vmatprep.subr.bf16.mxu0 0
      %532 = vmatpush1.bf16.msra.mxu0 %v511
      %533 = vmatprep.subr.bf16.mxu0 0
      %534 = vmatpush1.bf16.msra.mxu0 %v512
      %535 = vmatprep.subr.bf16.mxu0 0
      %536 = vmatpush1.bf16.msra.mxu0 %v513
      %537 = vmatprep.subr.bf16.mxu0 0
      %538 = vmatpush1.bf16.msra.mxu0 %v514
      %539 = vmatprep.subr.bf16.mxu0 0
      %540 = vmatpush1.bf16.msra.mxu0 0
      %541 = vmatprep.subr.bf16.mxu0 0
      %542 = vmatpush1.bf16.msra.mxu0 0
      %543 = vmatprep.subr.bf16.mxu0 0
      %544 = vmatpush1.bf16.msra.mxu0 0
      %545 = vmatprep.subr.bf16.mxu0 0
      %546 = vmatpush1.bf16.msra.mxu0 0
      %547 = vmatprep.subr.bf16.mxu0 0
      %548 = vmatpush1.bf16.msra.mxu0 0
      %549 = vmatprep.subr.bf16.mxu0 0
      %550 = vmatpush1.bf16.msra.mxu0 0
      %551 = vmatprep.subr.bf16.mxu0 0
      %552 = vmatpush1.bf16.msra.mxu0 0
      %553 = vmatprep.subr.bf16.mxu0 0
      %554 = vmatpush1.bf16.msra.mxu0 0
      %555 = vmatprep.mubr.bf16.mxu0 0
      %556 = vmatmul.mubr.bf16.gmra.mrb[0].mxu0 %v467
      %v557 = vpop.f32.mrb[0].mxu0
      %v558 = vadd.f32 %v421, %v557
      %v559 = vpop.f32.mrb[0].mxu0
      %v560 = vpop.f32.mrb[0].mxu0
      %v561 = vadd.f32 %v424, %v560
      %v562 = vpop.f32.mrb[0].mxu0
      %563 = vmatprep.mubr.bf16.mxu0 0
      %564 = vmatmul.mubr.bf16.gmra.mrb[0].mxu0 %v468
      %v565 = vpop.f32.mrb[0].mxu0
      %v566 = vadd.f32 %v429, %v565
      %v567 = vpop.f32.mrb[0].mxu0
      %v568 = vpop.f32.mrb[0].mxu0
      %v569 = vadd.f32 %v432, %v568
      %v570 = vpop.f32.mrb[0].mxu0
      %571 = vmatprep.mubr.bf16.mxu0 0
      %572 = vmatmul.mubr.bf16.gmra.mrb[0].mxu0 %v469
      %v573 = vpop.f32.mrb[0].mxu0
      %v574 = vadd.f32 %v437, %v573
      %v575 = vpop.f32.mrb[0].mxu0
      %v576 = vpop.f32.mrb[0].mxu0
      %v577 = vadd.f32 %v440, %v576
      %v578 = vpop.f32.mrb[0].mxu0
      %579 = vmatprep.mubr.bf16.mxu0 0
      %580 = vmatmul.mubr.bf16.gmra.mrb[0].mxu0 %v470
      %v581 = vpop.f32.mrb[0].mxu0
      %v582 = vadd.f32 %v445, %v581
      %v583 = vpop.f32.mrb[0].mxu0
      %v584 = vpop.f32.mrb[0].mxu0
      %v585 = vadd.f32 %v448, %v584
      %v586 = vpop.f32.mrb[0].mxu0
      %587 = vdwg.mxu0
      %v588 = vld [vmem:[%s244] sm:$0xf]
      %v589 = vld [vmem:[%s244 + $0x4] sm:$0x1]
      %v590 = vld [vmem:[%s244 + $0x8] sm:$0xf]
      %v591 = vld [vmem:[%s244 + $0xc] sm:$0x1]
      %v592 = vld [vmem:[%s244 + $0x10] sm:$0xf]
      %v593 = vld [vmem:[%s244 + $0x14] sm:$0x1]
      %v594 = vld [vmem:[%s244 + $0x18] sm:$0xf]
      %v595 = vld [vmem:[%s244 + $0x1c] sm:$0x1]
      %v596 = vld [vmem:[%s244 + $0x20] sm:$0xf]
      %v597 = vld [vmem:[%s244 + $0x24] sm:$0x1]
      %v598 = vld [vmem:[%s244 + $0x28] sm:$0xf]
      %v599 = vld [vmem:[%s244 + $0x2c] sm:$0x1]
      %v600 = vld [vmem:[%s244 + $0x30] sm:$0xf]
      %v601 = vld [vmem:[%s244 + $0x34] sm:$0x1]
      %v602 = vld [vmem:[%s244 + $0x38] sm:$0xf]
      %v603 = vld [vmem:[%s244 + $0x3c] sm:$0x1]
      %vm604 = vsmask.f32 3328
      %vm605 = vsmask.f32 7440
      %vm606 = vmor %vm604, %vm605
      %v608 = vshrl.u32 %v588, 16
      %v610 = vrot.slane %v608, 4
      %v611 = vshll.u32 %v588, 16
      %v613 = vrot.slane %v611, 5
      %v614 = vor.u32 %v610, %v613
      %v615 = vrot.slane %v614, 4
      %v617 = vshll.u32 %v589, 16
      %v619 = vrot.slane %v617, 5
      %v620 = vsel %vm606, %v615, %v619
      %v622 = vshrl.u32 %v590, 16
      %v624 = vrot.slane %v622, 4
      %v625 = vshll.u32 %v590, 16
      %v627 = vrot.slane %v625, 5
      %v628 = vor.u32 %v624, %v627
      %v629 = vrot.slane %v628, 4
      %v631 = vshll.u32 %v591, 16
      %v633 = vrot.slane %v631, 5
      %v634 = vsel %vm606, %v629, %v633
      %v636 = vshrl.u32 %v592, 16
      %v638 = vrot.slane %v636, 4
      %v639 = vshll.u32 %v592, 16
      %v641 = vrot.slane %v639, 5
      %v642 = vor.u32 %v638, %v641
      %v643 = vrot.slane %v642, 4
      %v645 = vshll.u32 %v593, 16
      %v647 = vrot.slane %v645, 5
      %v648 = vsel %vm606, %v643, %v647
      %v650 = vshrl.u32 %v594, 16
      %v652 = vrot.slane %v650, 4
      %v653 = vshll.u32 %v594, 16
      %v655 = vrot.slane %v653, 5
      %v656 = vor.u32 %v652, %v655
      %v657 = vrot.slane %v656, 4
      %v659 = vshll.u32 %v595, 16
      %v661 = vrot.slane %v659, 5
      %v662 = vsel %vm606, %v657, %v661
      %v664 = vshrl.u32 %v596, 16
      %v666 = vrot.slane %v664, 4
      %v667 = vshll.u32 %v596, 16
      %v669 = vrot.slane %v667, 5
      %v670 = vor.u32 %v666, %v669
      %v671 = vrot.slane %v670, 4
      %v673 = vshll.u32 %v597, 16
      %v675 = vrot.slane %v673, 5
      %v676 = vsel %vm606, %v671, %v675
      %v678 = vshrl.u32 %v598, 16
      %v680 = vrot.slane %v678, 4
      %v681 = vshll.u32 %v598, 16
      %v683 = vrot.slane %v681, 5
      %v684 = vor.u32 %v680, %v683
      %v685 = vrot.slane %v684, 4
      %v687 = vshll.u32 %v599, 16
      %v689 = vrot.slane %v687, 5
      %v690 = vsel %vm606, %v685, %v689
      %v692 = vshrl.u32 %v600, 16
      %v694 = vrot.slane %v692, 4
      %v695 = vshll.u32 %v600, 16
      %v697 = vrot.slane %v695, 5
      %v698 = vor.u32 %v694, %v697
      %v699 = vrot.slane %v698, 4
      %v701 = vshll.u32 %v601, 16
      %v703 = vrot.slane %v701, 5
      %v704 = vsel %vm606, %v699, %v703
      %v706 = vshrl.u32 %v602, 16
      %v708 = vrot.slane %v706, 4
      %v709 = vshll.u32 %v602, 16
      %v711 = vrot.slane %v709, 5
      %v712 = vor.u32 %v708, %v711
      %v713 = vrot.slane %v712, 4
      %v715 = vshll.u32 %v603, 16
      %v717 = vrot.slane %v715, 5
      %v718 = vsel %vm606, %v713, %v717
      %s719 = scalar_lea.vmem %s248, 128
      %v720 = vld [vmem:[%s719] sm:$0xf]
      %v721 = vld [vmem:[%s719 + $0x4] sm:$0xf]
      %v722 = vld [vmem:[%s719 + $0x8] sm:$0xf]
      %v723 = vld [vmem:[%s719 + $0xc] sm:$0xf]
      %v724 = vld [vmem:[%s719 + $0x10] sm:$0xf]
      %v725 = vld [vmem:[%s719 + $0x14] sm:$0xf]
      %v726 = vld [vmem:[%s719 + $0x18] sm:$0xf]
      %v727 = vld [vmem:[%s719 + $0x1c] sm:$0xf]
      %v728 = vld [vmem:[%s719 + $0x20] sm:$0xf]
      %v729 = vld [vmem:[%s719 + $0x24] sm:$0xf]
      %v730 = vld [vmem:[%s719 + $0x28] sm:$0xf]
      %v731 = vld [vmem:[%s719 + $0x2c] sm:$0xf]
      %v732 = vld [vmem:[%s719 + $0x30] sm:$0xf]
      %v733 = vld [vmem:[%s719 + $0x34] sm:$0xf]
      %v734 = vld [vmem:[%s719 + $0x38] sm:$0xf]
      %v735 = vld [vmem:[%s719 + $0x3c] sm:$0xf]
      %v736 = vunpack.c.l.b16 %v620
      %v737 = vunpack.c.l.b16 %v634
      %v738 = vunpack.c.l.b16 %v648
      %v739 = vunpack.c.l.b16 %v662
      %v740 = vunpack.c.l.b16 %v676
      %v741 = vunpack.c.l.b16 %v690
      %v742 = vunpack.c.l.b16 %v704
      %v743 = vunpack.c.l.b16 %v718
      %v744 = vpack.c.b16 %v737, %v736
      %v745 = vpack.c.b16 %v739, %v738
      %v746 = vpack.c.b16 %v741, %v740
      %v747 = vpack.c.b16 %v743, %v742
      %v768 = vunpack.c.l.b16 %v720
      %v769 = vunpack.c.l.b16 %v721
      %v770 = vunpack.c.l.b16 %v722
      %v771 = vunpack.c.l.b16 %v723
      %v772 = vunpack.c.l.b16 %v724
      %v773 = vunpack.c.l.b16 %v725
      %v774 = vunpack.c.l.b16 %v726
      %v775 = vunpack.c.l.b16 %v727
      %v776 = vunpack.c.l.b16 %v728
      %v777 = vunpack.c.l.b16 %v729
      %v778 = vunpack.c.l.b16 %v730
      %v779 = vunpack.c.l.b16 %v731
      %v780 = vunpack.c.l.b16 %v732
      %v781 = vunpack.c.l.b16 %v733
      %v782 = vunpack.c.l.b16 %v734
      %v783 = vunpack.c.l.b16 %v735
      %v784 = vpack.c.b16 %v769, %v768
      %v785 = vpack.c.b16 %v771, %v770
      %v786 = vpack.c.b16 %v773, %v772
      %v787 = vpack.c.b16 %v775, %v774
      %v788 = vpack.c.b16 %v777, %v776
      %v789 = vpack.c.b16 %v779, %v778
      %v790 = vpack.c.b16 %v781, %v780
      %v791 = vpack.c.b16 %v783, %v782
      %800 = vmatprep.subr.bf16.mxu0 0
      %801 = vmatpush1.bf16.msra.mxu0 %v784
      %802 = vmatprep.subr.bf16.mxu0 0
      %803 = vmatpush1.bf16.msra.mxu0 %v785
      %804 = vmatprep.subr.bf16.mxu0 0
      %805 = vmatpush1.bf16.msra.mxu0 %v786
      %806 = vmatprep.subr.bf16.mxu0 0
      %807 = vmatpush1.bf16.msra.mxu0 %v787
      %808 = vmatprep.subr.bf16.mxu0 0
      %809 = vmatpush1.bf16.msra.mxu0 %v788
      %810 = vmatprep.subr.bf16.mxu0 0
      %811 = vmatpush1.bf16.msra.mxu0 %v789
      %812 = vmatprep.subr.bf16.mxu0 0
      %813 = vmatpush1.bf16.msra.mxu0 %v790
      %814 = vmatprep.subr.bf16.mxu0 0
      %815 = vmatpush1.bf16.msra.mxu0 %v791
      %816 = vmatprep.subr.bf16.mxu0 0
      %817 = vmatpush1.bf16.msra.mxu0 0
      %818 = vmatprep.subr.bf16.mxu0 0
      %819 = vmatpush1.bf16.msra.mxu0 0
      %820 = vmatprep.subr.bf16.mxu0 0
      %821 = vmatpush1.bf16.msra.mxu0 0
      %822 = vmatprep.subr.bf16.mxu0 0
      %823 = vmatpush1.bf16.msra.mxu0 0
      %824 = vmatprep.subr.bf16.mxu0 0
      %825 = vmatpush1.bf16.msra.mxu0 0
      %826 = vmatprep.subr.bf16.mxu0 0
      %827 = vmatpush1.bf16.msra.mxu0 0
      %828 = vmatprep.subr.bf16.mxu0 0
      %829 = vmatpush1.bf16.msra.mxu0 0
      %830 = vmatprep.subr.bf16.mxu0 0
      %831 = vmatpush1.bf16.msra.mxu0 0
      %832 = vmatprep.mubr.bf16.mxu0 0
      %833 = vmatmul.mubr.bf16.gmra.mrb[0].mxu0 %v744
      %v834 = vpop.f32.mrb[0].mxu0
      %v835 = vadd.f32 0.0, %v834
      %v836 = vpop.f32.mrb[0].mxu0
      %v837 = vpop.f32.mrb[0].mxu0
      %v838 = vadd.f32 0.0, %v837
      %v839 = vpop.f32.mrb[0].mxu0
      %840 = vmatprep.mubr.bf16.mxu0 0
      %841 = vmatmul.mubr.bf16.gmra.mrb[0].mxu0 %v745
      %v842 = vpop.f32.mrb[0].mxu0
      %v843 = vadd.f32 0.0, %v842
      %v844 = vpop.f32.mrb[0].mxu0
      %v845 = vpop.f32.mrb[0].mxu0
      %v846 = vadd.f32 0.0, %v845
      %v847 = vpop.f32.mrb[0].mxu0
      %848 = vmatprep.mubr.bf16.mxu0 0
      %849 = vmatmul.mubr.bf16.gmra.mrb[0].mxu0 %v746
      %v850 = vpop.f32.mrb[0].mxu0
      %v851 = vadd.f32 0.0, %v850
      %v852 = vpop.f32.mrb[0].mxu0
      %v853 = vpop.f32.mrb[0].mxu0
      %v854 = vadd.f32 0.0, %v853
      %v855 = vpop.f32.mrb[0].mxu0
      %856 = vmatprep.mubr.bf16.mxu0 0
      %857 = vmatmul.mubr.bf16.gmra.mrb[0].mxu0 %v747
      %v858 = vpop.f32.mrb[0].mxu0
      %v859 = vadd.f32 0.0, %v858
      %v860 = vpop.f32.mrb[0].mxu0
      %v861 = vpop.f32.mrb[0].mxu0
      %v862 = vadd.f32 0.0, %v861
      %v863 = vpop.f32.mrb[0].mxu0
      %864 = vdwg.mxu0
      %v865 = vadd.f32 %v558, %v835
      %v866 = vadd.f32 %v561, %v838
      %v867 = vadd.f32 %v566, %v843
      %v868 = vadd.f32 %v569, %v846
      %v869 = vadd.f32 %v574, %v851
      %v870 = vadd.f32 %v577, %v854
      %v871 = vadd.f32 %v582, %v859
      %v872 = vadd.f32 %v585, %v862
      %s873 = scalar_lea.vmem %s244, 144
      %v874 = vld [vmem:[%s873] sm:$0xf]
      %v875 = vld [vmem:[%s873 + $0x8] sm:$0xf]
      %v876 = vld [vmem:[%s873 + $0x10] sm:$0xf]
      %v877 = vld [vmem:[%s873 + $0x18] sm:$0xf]
      %v878 = vld [vmem:[%s873 + $0x20] sm:$0xf]
      %v879 = vld [vmem:[%s873 + $0x28] sm:$0xf]
      %v880 = vld [vmem:[%s873 + $0x30] sm:$0xf]
      %v881 = vld [vmem:[%s873 + $0x38] sm:$0xf]
      %s882 = scalar_lea.vmem %s248, 192
      %v883 = vld [vmem:[%s882] sm:$0xf]
      %v884 = vld [vmem:[%s882 + $0x4] sm:$0xf]
      %v885 = vld [vmem:[%s882 + $0x8] sm:$0xf]
      %v886 = vld [vmem:[%s882 + $0xc] sm:$0xf]
      %v887 = vld [vmem:[%s882 + $0x10] sm:$0xf]
      %v888 = vld [vmem:[%s882 + $0x14] sm:$0xf]
      %v889 = vld [vmem:[%s882 + $0x18] sm:$0xf]
      %v890 = vld [vmem:[%s882 + $0x1c] sm:$0xf]
      %v891 = vld [vmem:[%s882 + $0x20] sm:$0xf]
      %v892 = vld [vmem:[%s882 + $0x24] sm:$0xf]
      %v893 = vld [vmem:[%s882 + $0x28] sm:$0xf]
      %v894 = vld [vmem:[%s882 + $0x2c] sm:$0xf]
      %v895 = vld [vmem:[%s882 + $0x30] sm:$0xf]
      %v896 = vld [vmem:[%s882 + $0x34] sm:$0xf]
      %v897 = vld [vmem:[%s882 + $0x38] sm:$0xf]
      %v898 = vld [vmem:[%s882 + $0x3c] sm:$0xf]
      %v907 = vunpack.c.l.b16 %v874
      %v908 = vunpack.c.l.b16 %v875
      %v909 = vunpack.c.l.b16 %v876
      %v910 = vunpack.c.l.b16 %v877
      %v911 = vunpack.c.l.b16 %v878
      %v912 = vunpack.c.l.b16 %v879
      %v913 = vunpack.c.l.b16 %v880
      %v914 = vunpack.c.l.b16 %v881
      %v915 = vpack.c.b16 %v908, %v907
      %v916 = vpack.c.b16 %v910, %v909
      %v917 = vpack.c.b16 %v912, %v911
      %v918 = vpack.c.b16 %v914, %v913
      %v939 = vunpack.c.l.b16 %v883
      %v940 = vunpack.c.l.b16 %v884
      %v941 = vunpack.c.l.b16 %v885
      %v942 = vunpack.c.l.b16 %v886
      %v943 = vunpack.c.l.b16 %v887
      %v944 = vunpack.c.l.b16 %v888
      %v945 = vunpack.c.l.b16 %v889
      %v946 = vunpack.c.l.b16 %v890
      %v947 = vunpack.c.l.b16 %v891
      %v948 = vunpack.c.l.b16 %v892
      %v949 = vunpack.c.l.b16 %v893
      %v950 = vunpack.c.l.b16 %v894
      %v951 = vunpack.c.l.b16 %v895
      %v952 = vunpack.c.l.b16 %v896
      %v953 = vunpack.c.l.b16 %v897
      %v954 = vunpack.c.l.b16 %v898
      %v955 = vpack.c.b16 %v940, %v939
      %v956 = vpack.c.b16 %v942, %v941
      %v957 = vpack.c.b16 %v944, %v943
      %v958 = vpack.c.b16 %v946, %v945
      %v959 = vpack.c.b16 %v948, %v947
      %v960 = vpack.c.b16 %v950, %v949
      %v961 = vpack.c.b16 %v952, %v951
      %v962 = vpack.c.b16 %v954, %v953
      %971 = vmatprep.subr.bf16.mxu0 0
      %972 = vmatpush1.bf16.msra.mxu0 %v955
      %973 = vmatprep.subr.bf16.mxu0 0
      %974 = vmatpush1.bf16.msra.mxu0 %v956
      %975 = vmatprep.subr.bf16.mxu0 0
      %976 = vmatpush1.bf16.msra.mxu0 %v957
      %977 = vmatprep.subr.bf16.mxu0 0
      %978 = vmatpush1.bf16.msra.mxu0 %v958
      %979 = vmatprep.subr.bf16.mxu0 0
      %980 = vmatpush1.bf16.msra.mxu0 %v959
      %981 = vmatprep.subr.bf16.mxu0 0
      %982 = vmatpush1.bf16.msra.mxu0 %v960
      %983 = vmatprep.subr.bf16.mxu0 0
      %984 = vmatpush1.bf16.msra.mxu0 %v961
      %985 = vmatprep.subr.bf16.mxu0 0
      %986 = vmatpush1.bf16.msra.mxu0 %v962
      %987 = vmatprep.subr.bf16.mxu0 0
      %988 = vmatpush1.bf16.msra.mxu0 0
      %989 = vmatprep.subr.bf16.mxu0 0
      %990 = vmatpush1.bf16.msra.mxu0 0
      %991 = vmatprep.subr.bf16.mxu0 0
      %992 = vmatpush1.bf16.msra.mxu0 0
      %993 = vmatprep.subr.bf16.mxu0 0
      %994 = vmatpush1.bf16.msra.mxu0 0
      %995 = vmatprep.subr.bf16.mxu0 0
      %996 = vmatpush1.bf16.msra.mxu0 0
      %997 = vmatprep.subr.bf16.mxu0 0
      %998 = vmatpush1.bf16.msra.mxu0 0
      %999 = vmatprep.subr.bf16.mxu0 0
      %1000 = vmatpush1.bf16.msra.mxu0 0
      %1001 = vmatprep.subr.bf16.mxu0 0
      %1002 = vmatpush1.bf16.msra.mxu0 0
      %1003 = vmatprep.mubr.bf16.mxu0 0
      %1004 = vmatmul.mubr.bf16.gmra.mrb[0].mxu0 %v915
      %v1005 = vpop.f32.mrb[0].mxu0
      %v1006 = vadd.f32 0.0, %v1005
      %v1007 = vpop.f32.mrb[0].mxu0
      %v1008 = vpop.f32.mrb[0].mxu0
      %v1009 = vadd.f32 0.0, %v1008
      %v1010 = vpop.f32.mrb[0].mxu0
      %1011 = vmatprep.mubr.bf16.mxu0 0
      %1012 = vmatmul.mubr.bf16.gmra.mrb[0].mxu0 %v916
      %v1013 = vpop.f32.mrb[0].mxu0
      %v1014 = vadd.f32 0.0, %v1013
      %v1015 = vpop.f32.mrb[0].mxu0
      %v1016 = vpop.f32.mrb[0].mxu0
      %v1017 = vadd.f32 0.0, %v1016
      %v1018 = vpop.f32.mrb[0].mxu0
      %1019 = vmatprep.mubr.bf16.mxu0 0
      %1020 = vmatmul.mubr.bf16.gmra.mrb[0].mxu0 %v917
      %v1021 = vpop.f32.mrb[0].mxu0
      %v1022 = vadd.f32 0.0, %v1021
      %v1023 = vpop.f32.mrb[0].mxu0
      %v1024 = vpop.f32.mrb[0].mxu0
      %v1025 = vadd.f32 0.0, %v1024
      %v1026 = vpop.f32.mrb[0].mxu0
      %1027 = vmatprep.mubr.bf16.mxu0 0
      %1028 = vmatmul.mubr.bf16.gmra.mrb[0].mxu0 %v918
      %v1029 = vpop.f32.mrb[0].mxu0
      %v1030 = vadd.f32 0.0, %v1029
      %v1031 = vpop.f32.mrb[0].mxu0
      %v1032 = vpop.f32.mrb[0].mxu0
      %v1033 = vadd.f32 0.0, %v1032
      %v1034 = vpop.f32.mrb[0].mxu0
      %1035 = vdwg.mxu0
      %v1036 = vadd.f32 %v865, %v1006
      %v1037 = vadd.f32 %v866, %v1009
      %v1038 = vadd.f32 %v867, %v1014
      %v1039 = vadd.f32 %v868, %v1017
      %v1040 = vadd.f32 %v869, %v1022
      %v1041 = vadd.f32 %v870, %v1025
      %v1042 = vadd.f32 %v871, %v1030
      %v1043 = vadd.f32 %v872, %v1033
      %s1044 = scalar_lea.vmem %s244, 216
      %v1045 = vld [vmem:[%s1044] sm:$0xf]
      %v1046 = vld [vmem:[%s1044 + $0x8] sm:$0xf]
      %v1047 = vld [vmem:[%s1044 + $0x10] sm:$0xf]
      %v1048 = vld [vmem:[%s1044 + $0x18] sm:$0xf]
      %v1049 = vld [vmem:[%s1044 + $0x20] sm:$0xf]
      %v1050 = vld [vmem:[%s1044 + $0x28] sm:$0xf]
      %v1051 = vld [vmem:[%s1044 + $0x30] sm:$0xf]
      %v1052 = vld [vmem:[%s1044 + $0x38] sm:$0xf]
      %s1053 = scalar_lea.vmem %s248, 256
      %v1054 = vld [vmem:[%s1053] sm:$0xf]
      %v1055 = vld [vmem:[%s1053 + $0x4] sm:$0xf]
      %v1056 = vld [vmem:[%s1053 + $0x8] sm:$0xf]
      %v1057 = vld [vmem:[%s1053 + $0xc] sm:$0xf]
      %v1058 = vld [vmem:[%s1053 + $0x10] sm:$0xf]
      %v1059 = vld [vmem:[%s1053 + $0x14] sm:$0xf]
      %v1060 = vld [vmem:[%s1053 + $0x18] sm:$0xf]
      %v1061 = vld [vmem:[%s1053 + $0x1c] sm:$0xf]
      %v1062 = vld [vmem:[%s1053 + $0x20] sm:$0xf]
      %v1063 = vld [vmem:[%s1053 + $0x24] sm:$0xf]
      %v1064 = vld [vmem:[%s1053 + $0x28] sm:$0xf]
      %v1065 = vld [vmem:[%s1053 + $0x2c] sm:$0xf]
      %v1066 = vld [vmem:[%s1053 + $0x30] sm:$0xf]
      %v1067 = vld [vmem:[%s1053 + $0x34] sm:$0xf]
      %v1068 = vld [vmem:[%s1053 + $0x38] sm:$0xf]
      %v1069 = vld [vmem:[%s1053 + $0x3c] sm:$0xf]
      %v1078 = vunpack.c.l.b16 %v1045
      %v1079 = vunpack.c.l.b16 %v1046
      %v1080 = vunpack.c.l.b16 %v1047
      %v1081 = vunpack.c.l.b16 %v1048
      %v1082 = vunpack.c.l.b16 %v1049
      %v1083 = vunpack.c.l.b16 %v1050
      %v1084 = vunpack.c.l.b16 %v1051
      %v1085 = vunpack.c.l.b16 %v1052
      %v1086 = vpack.c.b16 %v1079, %v1078
      %v1087 = vpack.c.b16 %v1081, %v1080
      %v1088 = vpack.c.b16 %v1083, %v1082
      %v1089 = vpack.c.b16 %v1085, %v1084
      %v1110 = vunpack.c.l.b16 %v1054
      %v1111 = vunpack.c.l.b16 %v1055
      %v1112 = vunpack.c.l.b16 %v1056
      %v1113 = vunpack.c.l.b16 %v1057
      %v1114 = vunpack.c.l.b16 %v1058
      %v1115 = vunpack.c.l.b16 %v1059
      %v1116 = vunpack.c.l.b16 %v1060
      %v1117 = vunpack.c.l.b16 %v1061
      %v1118 = vunpack.c.l.b16 %v1062
      %v1119 = vunpack.c.l.b16 %v1063
      %v1120 = vunpack.c.l.b16 %v1064
      %v1121 = vunpack.c.l.b16 %v1065
      %v1122 = vunpack.c.l.b16 %v1066
      %v1123 = vunpack.c.l.b16 %v1067
      %v1124 = vunpack.c.l.b16 %v1068
      %v1125 = vunpack.c.l.b16 %v1069
      %v1126 = vpack.c.b16 %v1111, %v1110
      %v1127 = vpack.c.b16 %v1113, %v1112
      %v1128 = vpack.c.b16 %v1115, %v1114
      %v1129 = vpack.c.b16 %v1117, %v1116
      %v1130 = vpack.c.b16 %v1119, %v1118
      %v1131 = vpack.c.b16 %v1121, %v1120
      %v1132 = vpack.c.b16 %v1123, %v1122
      %v1133 = vpack.c.b16 %v1125, %v1124
      %1142 = vmatprep.subr.bf16.mxu0 0
      %1143 = vmatpush1.bf16.msra.mxu0 %v1126
      %1144 = vmatprep.subr.bf16.mxu0 0
      %1145 = vmatpush1.bf16.msra.mxu0 %v1127
      %1146 = vmatprep.subr.bf16.mxu0 0
      %1147 = vmatpush1.bf16.msra.mxu0 %v1128
      %1148 = vmatprep.subr.bf16.mxu0 0
      %1149 = vmatpush1.bf16.msra.mxu0 %v1129
      %1150 = vmatprep.subr.bf16.mxu0 0
      %1151 = vmatpush1.bf16.msra.mxu0 %v1130
      %1152 = vmatprep.subr.bf16.mxu0 0
      %1153 = vmatpush1.bf16.msra.mxu0 %v1131
      %1154 = vmatprep.subr.bf16.mxu0 0
      %1155 = vmatpush1.bf16.msra.mxu0 %v1132
      %1156 = vmatprep.subr.bf16.mxu0 0
      %1157 = vmatpush1.bf16.msra.mxu0 %v1133
      %1158 = vmatprep.subr.bf16.mxu0 0
      %1159 = vmatpush1.bf16.msra.mxu0 0
      %1160 = vmatprep.subr.bf16.mxu0 0
      %1161 = vmatpush1.bf16.msra.mxu0 0
      %1162 = vmatprep.subr.bf16.mxu0 0
      %1163 = vmatpush1.bf16.msra.mxu0 0
      %1164 = vmatprep.subr.bf16.mxu0 0
      %1165 = vmatpush1.bf16.msra.mxu0 0
      %1166 = vmatprep.subr.bf16.mxu0 0
      %1167 = vmatpush1.bf16.msra.mxu0 0
      %1168 = vmatprep.subr.bf16.mxu0 0
      %1169 = vmatpush1.bf16.msra.mxu0 0
      %1170 = vmatprep.subr.bf16.mxu0 0
      %1171 = vmatpush1.bf16.msra.mxu0 0
      %1172 = vmatprep.subr.bf16.mxu0 0
      %1173 = vmatpush1.bf16.msra.mxu0 0
      %1174 = vmatprep.mubr.bf16.mxu0 0
      %1175 = vmatmul.mubr.bf16.gmra.mrb[0].mxu0 %v1086
      %v1176 = vpop.f32.mrb[0].mxu0
      %v1177 = vadd.f32 0.0, %v1176
      %v1178 = vpop.f32.mrb[0].mxu0
      %v1179 = vpop.f32.mrb[0].mxu0
      %v1180 = vadd.f32 0.0, %v1179
      %v1181 = vpop.f32.mrb[0].mxu0
      %1182 = vmatprep.mubr.bf16.mxu0 0
      %1183 = vmatmul.mubr.bf16.gmra.mrb[0].mxu0 %v1087
      %v1184 = vpop.f32.mrb[0].mxu0
      %v1185 = vadd.f32 0.0, %v1184
      %v1186 = vpop.f32.mrb[0].mxu0
      %v1187 = vpop.f32.mrb[0].mxu0
      %v1188 = vadd.f32 0.0, %v1187
      %v1189 = vpop.f32.mrb[0].mxu0
      %1190 = vmatprep.mubr.bf16.mxu0 0
      %1191 = vmatmul.mubr.bf16.gmra.mrb[0].mxu0 %v1088
      %v1192 = vpop.f32.mrb[0].mxu0
      %v1193 = vadd.f32 0.0, %v1192
      %v1194 = vpop.f32.mrb[0].mxu0
      %v1195 = vpop.f32.mrb[0].mxu0
      %v1196 = vadd.f32 0.0, %v1195
      %v1197 = vpop.f32.mrb[0].mxu0
      %1198 = vmatprep.mubr.bf16.mxu0 0
      %1199 = vmatmul.mubr.bf16.gmra.mrb[0].mxu0 %v1089
      %v1200 = vpop.f32.mrb[0].mxu0
      %v1201 = vadd.f32 0.0, %v1200
      %v1202 = vpop.f32.mrb[0].mxu0
      %v1203 = vpop.f32.mrb[0].mxu0
      %v1204 = vadd.f32 0.0, %v1203
      %v1205 = vpop.f32.mrb[0].mxu0
      %1206 = vdwg.mxu0
      %v1207 = vadd.f32 %v1036, %v1177
      %v1208 = vadd.f32 %v1037, %v1180
      %v1209 = vadd.f32 %v1038, %v1185
      %v1210 = vadd.f32 %v1039, %v1188
      %v1211 = vadd.f32 %v1040, %v1193
      %v1212 = vadd.f32 %v1041, %v1196
      %v1213 = vadd.f32 %v1042, %v1201
      %v1214 = vadd.f32 %v1043, %v1204
      %v1215 = vld [vmem:[%s873] sm:$0xf]
      %v1216 = vld [vmem:[%s873 + $0x4] sm:$0x1]
      %v1217 = vld [vmem:[%s873 + $0x8] sm:$0xf]
      %v1218 = vld [vmem:[%s873 + $0xc] sm:$0x1]
      %v1219 = vld [vmem:[%s873 + $0x10] sm:$0xf]
      %v1220 = vld [vmem:[%s873 + $0x14] sm:$0x1]
      %v1221 = vld [vmem:[%s873 + $0x18] sm:$0xf]
      %v1222 = vld [vmem:[%s873 + $0x1c] sm:$0x1]
      %v1223 = vld [vmem:[%s873 + $0x20] sm:$0xf]
      %v1224 = vld [vmem:[%s873 + $0x24] sm:$0x1]
      %v1225 = vld [vmem:[%s873 + $0x28] sm:$0xf]
      %v1226 = vld [vmem:[%s873 + $0x2c] sm:$0x1]
      %v1227 = vld [vmem:[%s873 + $0x30] sm:$0xf]
      %v1228 = vld [vmem:[%s873 + $0x34] sm:$0x1]
      %v1229 = vld [vmem:[%s873 + $0x38] sm:$0xf]
      %v1230 = vld [vmem:[%s873 + $0x3c] sm:$0x1]
      %v1232 = vshrl.u32 %v1215, 16
      %v1234 = vrot.slane %v1232, 4
      %v1235 = vshll.u32 %v1215, 16
      %v1237 = vrot.slane %v1235, 5
      %v1238 = vor.u32 %v1234, %v1237
      %v1239 = vrot.slane %v1238, 4
      %v1241 = vshll.u32 %v1216, 16
      %v1243 = vrot.slane %v1241, 5
      %v1244 = vsel %vm606, %v1239, %v1243
      %v1246 = vshrl.u32 %v1217, 16
      %v1248 = vrot.slane %v1246, 4
      %v1249 = vshll.u32 %v1217, 16
      %v1251 = vrot.slane %v1249, 5
      %v1252 = vor.u32 %v1248, %v1251
      %v1253 = vrot.slane %v1252, 4
      %v1255 = vshll.u32 %v1218, 16
      %v1257 = vrot.slane %v1255, 5
      %v1258 = vsel %vm606, %v1253, %v1257
      %v1260 = vshrl.u32 %v1219, 16
      %v1262 = vrot.slane %v1260, 4
      %v1263 = vshll.u32 %v1219, 16
      %v1265 = vrot.slane %v1263, 5
      %v1266 = vor.u32 %v1262, %v1265
      %v1267 = vrot.slane %v1266, 4
      %v1269 = vshll.u32 %v1220, 16
      %v1271 = vrot.slane %v1269, 5
      %v1272 = vsel %vm606, %v1267, %v1271
      %v1274 = vshrl.u32 %v1221, 16
      %v1276 = vrot.slane %v1274, 4
      %v1277 = vshll.u32 %v1221, 16
      %v1279 = vrot.slane %v1277, 5
      %v1280 = vor.u32 %v1276, %v1279
      %v1281 = vrot.slane %v1280, 4
      %v1283 = vshll.u32 %v1222, 16
      %v1285 = vrot.slane %v1283, 5
      %v1286 = vsel %vm606, %v1281, %v1285
      %v1288 = vshrl.u32 %v1223, 16
      %v1290 = vrot.slane %v1288, 4
      %v1291 = vshll.u32 %v1223, 16
      %v1293 = vrot.slane %v1291, 5
      %v1294 = vor.u32 %v1290, %v1293
      %v1295 = vrot.slane %v1294, 4
      %v1297 = vshll.u32 %v1224, 16
      %v1299 = vrot.slane %v1297, 5
      %v1300 = vsel %vm606, %v1295, %v1299
      %v1302 = vshrl.u32 %v1225, 16
      %v1304 = vrot.slane %v1302, 4
      %v1305 = vshll.u32 %v1225, 16
      %v1307 = vrot.slane %v1305, 5
      %v1308 = vor.u32 %v1304, %v1307
      %v1309 = vrot.slane %v1308, 4
      %v1311 = vshll.u32 %v1226, 16
      %v1313 = vrot.slane %v1311, 5
      %v1314 = vsel %vm606, %v1309, %v1313
      %v1316 = vshrl.u32 %v1227, 16
      %v1318 = vrot.slane %v1316, 4
      %v1319 = vshll.u32 %v1227, 16
      %v1321 = vrot.slane %v1319, 5
      %v1322 = vor.u32 %v1318, %v1321
      %v1323 = vrot.slane %v1322, 4
      %v1325 = vshll.u32 %v1228, 16
      %v1327 = vrot.slane %v1325, 5
      %v1328 = vsel %vm606, %v1323, %v1327
      %v1330 = vshrl.u32 %v1229, 16
      %v1332 = vrot.slane %v1330, 4
      %v1333 = vshll.u32 %v1229, 16
      %v1335 = vrot.slane %v1333, 5
      %v1336 = vor.u32 %v1332, %v1335
      %v1337 = vrot.slane %v1336, 4
      %v1339 = vshll.u32 %v1230, 16
      %v1341 = vrot.slane %v1339, 5
      %v1342 = vsel %vm606, %v1337, %v1341
      %s1343 = scalar_lea.vmem %s248, 320
      %v1344 = vld [vmem:[%s1343] sm:$0xf]
      %v1345 = vld [vmem:[%s1343 + $0x4] sm:$0xf]
      %v1346 = vld [vmem:[%s1343 + $0x8] sm:$0xf]
      %v1347 = vld [vmem:[%s1343 + $0xc] sm:$0xf]
      %v1348 = vld [vmem:[%s1343 + $0x10] sm:$0xf]
      %v1349 = vld [vmem:[%s1343 + $0x14] sm:$0xf]
      %v1350 = vld [vmem:[%s1343 + $0x18] sm:$0xf]
      %v1351 = vld [vmem:[%s1343 + $0x1c] sm:$0xf]
      %v1352 = vld [vmem:[%s1343 + $0x20] sm:$0xf]
      %v1353 = vld [vmem:[%s1343 + $0x24] sm:$0xf]
      %v1354 = vld [vmem:[%s1343 + $0x28] sm:$0xf]
      %v1355 = vld [vmem:[%s1343 + $0x2c] sm:$0xf]
      %v1356 = vld [vmem:[%s1343 + $0x30] sm:$0xf]
      %v1357 = vld [vmem:[%s1343 + $0x34] sm:$0xf]
      %v1358 = vld [vmem:[%s1343 + $0x38] sm:$0xf]
      %v1359 = vld [vmem:[%s1343 + $0x3c] sm:$0xf]
      %v1360 = vunpack.c.l.b16 %v1244
      %v1361 = vunpack.c.l.b16 %v1258
      %v1362 = vunpack.c.l.b16 %v1272
      %v1363 = vunpack.c.l.b16 %v1286
      %v1364 = vunpack.c.l.b16 %v1300
      %v1365 = vunpack.c.l.b16 %v1314
      %v1366 = vunpack.c.l.b16 %v1328
      %v1367 = vunpack.c.l.b16 %v1342
      %v1368 = vpack.c.b16 %v1361, %v1360
      %v1369 = vpack.c.b16 %v1363, %v1362
      %v1370 = vpack.c.b16 %v1365, %v1364
      %v1371 = vpack.c.b16 %v1367, %v1366
      %v1392 = vunpack.c.l.b16 %v1344
      %v1393 = vunpack.c.l.b16 %v1345
      %v1394 = vunpack.c.l.b16 %v1346
      %v1395 = vunpack.c.l.b16 %v1347
      %v1396 = vunpack.c.l.b16 %v1348
      %v1397 = vunpack.c.l.b16 %v1349
      %v1398 = vunpack.c.l.b16 %v1350
      %v1399 = vunpack.c.l.b16 %v1351
      %v1400 = vunpack.c.l.b16 %v1352
      %v1401 = vunpack.c.l.b16 %v1353
      %v1402 = vunpack.c.l.b16 %v1354
      %v1403 = vunpack.c.l.b16 %v1355
      %v1404 = vunpack.c.l.b16 %v1356
      %v1405 = vunpack.c.l.b16 %v1357
      %v1406 = vunpack.c.l.b16 %v1358
      %v1407 = vunpack.c.l.b16 %v1359
      %v1408 = vpack.c.b16 %v1393, %v1392
      %v1409 = vpack.c.b16 %v1395, %v1394
      %v1410 = vpack.c.b16 %v1397, %v1396
      %v1411 = vpack.c.b16 %v1399, %v1398
      %v1412 = vpack.c.b16 %v1401, %v1400
      %v1413 = vpack.c.b16 %v1403, %v1402
      %v1414 = vpack.c.b16 %v1405, %v1404
      %v1415 = vpack.c.b16 %v1407, %v1406
      %1424 = vmatprep.subr.bf16.mxu0 0
      %1425 = vmatpush1.bf16.msra.mxu0 %v1408
      %1426 = vmatprep.subr.bf16.mxu0 0
      %1427 = vmatpush1.bf16.msra.mxu0 %v1409
      %1428 = vmatprep.subr.bf16.mxu0 0
      %1429 = vmatpush1.bf16.msra.mxu0 %v1410
      %1430 = vmatprep.subr.bf16.mxu0 0
      %1431 = vmatpush1.bf16.msra.mxu0 %v1411
      %1432 = vmatprep.subr.bf16.mxu0 0
      %1433 = vmatpush1.bf16.msra.mxu0 %v1412
      %1434 = vmatprep.subr.bf16.mxu0 0
      %1435 = vmatpush1.bf16.msra.mxu0 %v1413
      %1436 = vmatprep.subr.bf16.mxu0 0
      %1437 = vmatpush1.bf16.msra.mxu0 %v1414
      %1438 = vmatprep.subr.bf16.mxu0 0
      %1439 = vmatpush1.bf16.msra.mxu0 %v1415
      %1440 = vmatprep.subr.bf16.mxu0 0
      %1441 = vmatpush1.bf16.msra.mxu0 0
      %1442 = vmatprep.subr.bf16.mxu0 0
      %1443 = vmatpush1.bf16.msra.mxu0 0
      %1444 = vmatprep.subr.bf16.mxu0 0
      %1445 = vmatpush1.bf16.msra.mxu0 0
      %1446 = vmatprep.subr.bf16.mxu0 0
      %1447 = vmatpush1.bf16.msra.mxu0 0
      %1448 = vmatprep.subr.bf16.mxu0 0
      %1449 = vmatpush1.bf16.msra.mxu0 0
      %1450 = vmatprep.subr.bf16.mxu0 0
      %1451 = vmatpush1.bf16.msra.mxu0 0
      %1452 = vmatprep.subr.bf16.mxu0 0
      %1453 = vmatpush1.bf16.msra.mxu0 0
      %1454 = vmatprep.subr.bf16.mxu0 0
      %1455 = vmatpush1.bf16.msra.mxu0 0
      %1456 = vmatprep.mubr.bf16.mxu0 0
      %1457 = vmatmul.mubr.bf16.gmra.mrb[0].mxu0 %v1368
      %v1458 = vpop.f32.mrb[0].mxu0
      %v1459 = vadd.f32 0.0, %v1458
      %v1460 = vpop.f32.mrb[0].mxu0
      %v1461 = vpop.f32.mrb[0].mxu0
      %v1462 = vadd.f32 0.0, %v1461
      %v1463 = vpop.f32.mrb[0].mxu0
      %1464 = vmatprep.mubr.bf16.mxu0 0
      %1465 = vmatmul.mubr.bf16.gmra.mrb[0].mxu0 %v1369
      %v1466 = vpop.f32.mrb[0].mxu0
      %v1467 = vadd.f32 0.0, %v1466
      %v1468 = vpop.f32.mrb[0].mxu0
      %v1469 = vpop.f32.mrb[0].mxu0
      %v1470 = vadd.f32 0.0, %v1469
      %v1471 = vpop.f32.mrb[0].mxu0
      %1472 = vmatprep.mubr.bf16.mxu0 0
      %1473 = vmatmul.mubr.bf16.gmra.mrb[0].mxu0 %v1370
      %v1474 = vpop.f32.mrb[0].mxu0
      %v1475 = vadd.f32 0.0, %v1474
      %v1476 = vpop.f32.mrb[0].mxu0
      %v1477 = vpop.f32.mrb[0].mxu0
      %v1478 = vadd.f32 0.0, %v1477
      %v1479 = vpop.f32.mrb[0].mxu0
      %1480 = vmatprep.mubr.bf16.mxu0 0
      %1481 = vmatmul.mubr.bf16.gmra.mrb[0].mxu0 %v1371
      %v1482 = vpop.f32.mrb[0].mxu0
      %v1483 = vadd.f32 0.0, %v1482
      %v1484 = vpop.f32.mrb[0].mxu0
      %v1485 = vpop.f32.mrb[0].mxu0
      %v1486 = vadd.f32 0.0, %v1485
      %v1487 = vpop.f32.mrb[0].mxu0
      %1488 = vdwg.mxu0
      %v1489 = vadd.f32 %v1207, %v1459
      %v1490 = vadd.f32 %v1208, %v1462
      %v1491 = vadd.f32 %v1209, %v1467
      %v1492 = vadd.f32 %v1210, %v1470
      %v1493 = vadd.f32 %v1211, %v1475
      %v1494 = vadd.f32 %v1212, %v1478
      %v1495 = vadd.f32 %v1213, %v1483
      %v1496 = vadd.f32 %v1214, %v1486
      %s1497 = scalar_lea.vmem %s244, 8
      %v1498 = vld [vmem:[%s1497] sm:$0xf]
      %v1499 = vld [vmem:[%s1497 + $0x8] sm:$0xf]
      %v1500 = vld [vmem:[%s1497 + $0x10] sm:$0xf]
      %v1501 = vld [vmem:[%s1497 + $0x18] sm:$0xf]
      %v1502 = vld [vmem:[%s1497 + $0x20] sm:$0xf]
      %v1503 = vld [vmem:[%s1497 + $0x28] sm:$0xf]
      %v1504 = vld [vmem:[%s1497 + $0x30] sm:$0xf]
      %v1505 = vld [vmem:[%s1497 + $0x38] sm:$0xf]
      %s1506 = scalar_lea.vmem %s248, 384
      %v1507 = vld [vmem:[%s1506] sm:$0xf]
      %v1508 = vld [vmem:[%s1506 + $0x4] sm:$0xf]
      %v1509 = vld [vmem:[%s1506 + $0x8] sm:$0xf]
      %v1510 = vld [vmem:[%s1506 + $0xc] sm:$0xf]
      %v1511 = vld [vmem:[%s1506 + $0x10] sm:$0xf]
      %v1512 = vld [vmem:[%s1506 + $0x14] sm:$0xf]
      %v1513 = vld [vmem:[%s1506 + $0x18] sm:$0xf]
      %v1514 = vld [vmem:[%s1506 + $0x1c] sm:$0xf]
      %v1515 = vld [vmem:[%s1506 + $0x20] sm:$0xf]
      %v1516 = vld [vmem:[%s1506 + $0x24] sm:$0xf]
      %v1517 = vld [vmem:[%s1506 + $0x28] sm:$0xf]
      %v1518 = vld [vmem:[%s1506 + $0x2c] sm:$0xf]
      %v1519 = vld [vmem:[%s1506 + $0x30] sm:$0xf]
      %v1520 = vld [vmem:[%s1506 + $0x34] sm:$0xf]
      %v1521 = vld [vmem:[%s1506 + $0x38] sm:$0xf]
      %v1522 = vld [vmem:[%s1506 + $0x3c] sm:$0xf]
      %v1531 = vunpack.c.l.b16 %v1498
      %v1532 = vunpack.c.l.b16 %v1499
      %v1533 = vunpack.c.l.b16 %v1500
      %v1534 = vunpack.c.l.b16 %v1501
      %v1535 = vunpack.c.l.b16 %v1502
      %v1536 = vunpack.c.l.b16 %v1503
      %v1537 = vunpack.c.l.b16 %v1504
      %v1538 = vunpack.c.l.b16 %v1505
      %v1539 = vpack.c.b16 %v1532, %v1531
      %v1540 = vpack.c.b16 %v1534, %v1533
      %v1541 = vpack.c.b16 %v1536, %v1535
      %v1542 = vpack.c.b16 %v1538, %v1537
      %v1563 = vunpack.c.l.b16 %v1507
      %v1564 = vunpack.c.l.b16 %v1508
      %v1565 = vunpack.c.l.b16 %v1509
      %v1566 = vunpack.c.l.b16 %v1510
      %v1567 = vunpack.c.l.b16 %v1511
      %v1568 = vunpack.c.l.b16 %v1512
      %v1569 = vunpack.c.l.b16 %v1513
      %v1570 = vunpack.c.l.b16 %v1514
      %v1571 = vunpack.c.l.b16 %v1515
      %v1572 = vunpack.c.l.b16 %v1516
      %v1573 = vunpack.c.l.b16 %v1517
      %v1574 = vunpack.c.l.b16 %v1518
      %v1575 = vunpack.c.l.b16 %v1519
      %v1576 = vunpack.c.l.b16 %v1520
      %v1577 = vunpack.c.l.b16 %v1521
      %v1578 = vunpack.c.l.b16 %v1522
      %v1579 = vpack.c.b16 %v1564, %v1563
      %v1580 = vpack.c.b16 %v1566, %v1565
      %v1581 = vpack.c.b16 %v1568, %v1567
      %v1582 = vpack.c.b16 %v1570, %v1569
      %v1583 = vpack.c.b16 %v1572, %v1571
      %v1584 = vpack.c.b16 %v1574, %v1573
      %v1585 = vpack.c.b16 %v1576, %v1575
      %v1586 = vpack.c.b16 %v1578, %v1577
      %1595 = vmatprep.subr.bf16.mxu0 0
      %1596 = vmatpush1.bf16.msra.mxu0 %v1579
      %1597 = vmatprep.subr.bf16.mxu0 0
      %1598 = vmatpush1.bf16.msra.mxu0 %v1580
      %1599 = vmatprep.subr.bf16.mxu0 0
      %1600 = vmatpush1.bf16.msra.mxu0 %v1581
      %1601 = vmatprep.subr.bf16.mxu0 0
      %1602 = vmatpush1.bf16.msra.mxu0 %v1582
      %1603 = vmatprep.subr.bf16.mxu0 0
      %1604 = vmatpush1.bf16.msra.mxu0 %v1583
      %1605 = vmatprep.subr.bf16.mxu0 0
      %1606 = vmatpush1.bf16.msra.mxu0 %v1584
      %1607 = vmatprep.subr.bf16.mxu0 0
      %1608 = vmatpush1.bf16.msra.mxu0 %v1585
      %1609 = vmatprep.subr.bf16.mxu0 0
      %1610 = vmatpush1.bf16.msra.mxu0 %v1586
      %1611 = vmatprep.subr.bf16.mxu0 0
      %1612 = vmatpush1.bf16.msra.mxu0 0
      %1613 = vmatprep.subr.bf16.mxu0 0
      %1614 = vmatpush1.bf16.msra.mxu0 0
      %1615 = vmatprep.subr.bf16.mxu0 0
      %1616 = vmatpush1.bf16.msra.mxu0 0
      %1617 = vmatprep.subr.bf16.mxu0 0
      %1618 = vmatpush1.bf16.msra.mxu0 0
      %1619 = vmatprep.subr.bf16.mxu0 0
      %1620 = vmatpush1.bf16.msra.mxu0 0
      %1621 = vmatprep.subr.bf16.mxu0 0
      %1622 = vmatpush1.bf16.msra.mxu0 0
      %1623 = vmatprep.subr.bf16.mxu0 0
      %1624 = vmatpush1.bf16.msra.mxu0 0
      %1625 = vmatprep.subr.bf16.mxu0 0
      %1626 = vmatpush1.bf16.msra.mxu0 0
      %1627 = vmatprep.mubr.bf16.mxu0 0
      %1628 = vmatmul.mubr.bf16.gmra.mrb[0].mxu0 %v1539
      %v1629 = vpop.f32.mrb[0].mxu0
      %v1630 = vadd.f32 0.0, %v1629
      %v1631 = vpop.f32.mrb[0].mxu0
      %v1632 = vpop.f32.mrb[0].mxu0
      %v1633 = vadd.f32 0.0, %v1632
      %v1634 = vpop.f32.mrb[0].mxu0
      %1635 = vmatprep.mubr.bf16.mxu0 0
      %1636 = vmatmul.mubr.bf16.gmra.mrb[0].mxu0 %v1540
      %v1637 = vpop.f32.mrb[0].mxu0
      %v1638 = vadd.f32 0.0, %v1637
      %v1639 = vpop.f32.mrb[0].mxu0
      %v1640 = vpop.f32.mrb[0].mxu0
      %v1641 = vadd.f32 0.0, %v1640
      %v1642 = vpop.f32.mrb[0].mxu0
      %1643 = vmatprep.mubr.bf16.mxu0 0
      %1644 = vmatmul.mubr.bf16.gmra.mrb[0].mxu0 %v1541
      %v1645 = vpop.f32.mrb[0].mxu0
      %v1646 = vadd.f32 0.0, %v1645
      %v1647 = vpop.f32.mrb[0].mxu0
      %v1648 = vpop.f32.mrb[0].mxu0
      %v1649 = vadd.f32 0.0, %v1648
      %v1650 = vpop.f32.mrb[0].mxu0
      %1651 = vmatprep.mubr.bf16.mxu0 0
      %1652 = vmatmul.mubr.bf16.gmra.mrb[0].mxu0 %v1542
      %v1653 = vpop.f32.mrb[0].mxu0
      %v1654 = vadd.f32 0.0, %v1653
      %v1655 = vpop.f32.mrb[0].mxu0
      %v1656 = vpop.f32.mrb[0].mxu0
      %v1657 = vadd.f32 0.0, %v1656
      %v1658 = vpop.f32.mrb[0].mxu0
      %1659 = vdwg.mxu0
      %v1660 = vadd.f32 %v1489, %v1630
      %v1661 = vadd.f32 %v1490, %v1633
      %v1662 = vadd.f32 %v1491, %v1638
      %v1663 = vadd.f32 %v1492, %v1641
      %v1664 = vadd.f32 %v1493, %v1646
      %v1665 = vadd.f32 %v1494, %v1649
      %v1666 = vadd.f32 %v1495, %v1654
      %v1667 = vadd.f32 %v1496, %v1657
      %s1668 = scalar_lea.vmem %s244, 80
      %v1669 = vld [vmem:[%s1668] sm:$0xf]
      %v1670 = vld [vmem:[%s1668 + $0x8] sm:$0xf]
      %v1671 = vld [vmem:[%s1668 + $0x10] sm:$0xf]
      %v1672 = vld [vmem:[%s1668 + $0x18] sm:$0xf]
      %v1673 = vld [vmem:[%s1668 + $0x20] sm:$0xf]
      %v1674 = vld [vmem:[%s1668 + $0x28] sm:$0xf]
      %v1675 = vld [vmem:[%s1668 + $0x30] sm:$0xf]
      %v1676 = vld [vmem:[%s1668 + $0x38] sm:$0xf]
      %s1677 = scalar_lea.vmem %s248, 448
      %v1678 = vld [vmem:[%s1677] sm:$0xf]
      %v1679 = vld [vmem:[%s1677 + $0x4] sm:$0xf]
      %v1680 = vld [vmem:[%s1677 + $0x8] sm:$0xf]
      %v1681 = vld [vmem:[%s1677 + $0xc] sm:$0xf]
      %v1682 = vld [vmem:[%s1677 + $0x10] sm:$0xf]
      %v1683 = vld [vmem:[%s1677 + $0x14] sm:$0xf]
      %v1684 = vld [vmem:[%s1677 + $0x18] sm:$0xf]
      %v1685 = vld [vmem:[%s1677 + $0x1c] sm:$0xf]
      %v1686 = vld [vmem:[%s1677 + $0x20] sm:$0xf]
      %v1687 = vld [vmem:[%s1677 + $0x24] sm:$0xf]
      %v1688 = vld [vmem:[%s1677 + $0x28] sm:$0xf]
      %v1689 = vld [vmem:[%s1677 + $0x2c] sm:$0xf]
      %v1690 = vld [vmem:[%s1677 + $0x30] sm:$0xf]
      %v1691 = vld [vmem:[%s1677 + $0x34] sm:$0xf]
      %v1692 = vld [vmem:[%s1677 + $0x38] sm:$0xf]
      %v1693 = vld [vmem:[%s1677 + $0x3c] sm:$0xf]
      %v1702 = vunpack.c.l.b16 %v1669
      %v1703 = vunpack.c.l.b16 %v1670
      %v1704 = vunpack.c.l.b16 %v1671
      %v1705 = vunpack.c.l.b16 %v1672
      %v1706 = vunpack.c.l.b16 %v1673
      %v1707 = vunpack.c.l.b16 %v1674
      %v1708 = vunpack.c.l.b16 %v1675
      %v1709 = vunpack.c.l.b16 %v1676
      %v1710 = vpack.c.b16 %v1703, %v1702
      %v1711 = vpack.c.b16 %v1705, %v1704
      %v1712 = vpack.c.b16 %v1707, %v1706
      %v1713 = vpack.c.b16 %v1709, %v1708
      %v1734 = vunpack.c.l.b16 %v1678
      %v1735 = vunpack.c.l.b16 %v1679
      %v1736 = vunpack.c.l.b16 %v1680
      %v1737 = vunpack.c.l.b16 %v1681
      %v1738 = vunpack.c.l.b16 %v1682
      %v1739 = vunpack.c.l.b16 %v1683
      %v1740 = vunpack.c.l.b16 %v1684
      %v1741 = vunpack.c.l.b16 %v1685
      %v1742 = vunpack.c.l.b16 %v1686
      %v1743 = vunpack.c.l.b16 %v1687
      %v1744 = vunpack.c.l.b16 %v1688
      %v1745 = vunpack.c.l.b16 %v1689
      %v1746 = vunpack.c.l.b16 %v1690
      %v1747 = vunpack.c.l.b16 %v1691
      %v1748 = vunpack.c.l.b16 %v1692
      %v1749 = vunpack.c.l.b16 %v1693
      %v1750 = vpack.c.b16 %v1735, %v1734
      %v1751 = vpack.c.b16 %v1737, %v1736
      %v1752 = vpack.c.b16 %v1739, %v1738
      %v1753 = vpack.c.b16 %v1741, %v1740
      %v1754 = vpack.c.b16 %v1743, %v1742
      %v1755 = vpack.c.b16 %v1745, %v1744
      %v1756 = vpack.c.b16 %v1747, %v1746
      %v1757 = vpack.c.b16 %v1749, %v1748
      %1766 = vmatprep.subr.bf16.mxu0 0
      %1767 = vmatpush1.bf16.msra.mxu0 %v1750
      %1768 = vmatprep.subr.bf16.mxu0 0
      %1769 = vmatpush1.bf16.msra.mxu0 %v1751
      %1770 = vmatprep.subr.bf16.mxu0 0
      %1771 = vmatpush1.bf16.msra.mxu0 %v1752
      %1772 = vmatprep.subr.bf16.mxu0 0
      %1773 = vmatpush1.bf16.msra.mxu0 %v1753
      %1774 = vmatprep.subr.bf16.mxu0 0
      %1775 = vmatpush1.bf16.msra.mxu0 %v1754
      %1776 = vmatprep.subr.bf16.mxu0 0
      %1777 = vmatpush1.bf16.msra.mxu0 %v1755
      %1778 = vmatprep.subr.bf16.mxu0 0
      %1779 = vmatpush1.bf16.msra.mxu0 %v1756
      %1780 = vmatprep.subr.bf16.mxu0 0
      %1781 = vmatpush1.bf16.msra.mxu0 %v1757
      %1782 = vmatprep.subr.bf16.mxu0 0
      %1783 = vmatpush1.bf16.msra.mxu0 0
      %1784 = vmatprep.subr.bf16.mxu0 0
      %1785 = vmatpush1.bf16.msra.mxu0 0
      %1786 = vmatprep.subr.bf16.mxu0 0
      %1787 = vmatpush1.bf16.msra.mxu0 0
      %1788 = vmatprep.subr.bf16.mxu0 0
      %1789 = vmatpush1.bf16.msra.mxu0 0
      %1790 = vmatprep.subr.bf16.mxu0 0
      %1791 = vmatpush1.bf16.msra.mxu0 0
      %1792 = vmatprep.subr.bf16.mxu0 0
      %1793 = vmatpush1.bf16.msra.mxu0 0
      %1794 = vmatprep.subr.bf16.mxu0 0
      %1795 = vmatpush1.bf16.msra.mxu0 0
      %1796 = vmatprep.subr.bf16.mxu0 0
      %1797 = vmatpush1.bf16.msra.mxu0 0
      %1798 = vmatprep.mubr.bf16.mxu0 0
      %1799 = vmatmul.mubr.bf16.gmra.mrb[0].mxu0 %v1710
      %v1800 = vpop.f32.mrb[0].mxu0
      %v1801 = vadd.f32 0.0, %v1800
      %v1802 = vpop.f32.mrb[0].mxu0
      %v1803 = vpop.f32.mrb[0].mxu0
      %v1804 = vadd.f32 0.0, %v1803
      %v1805 = vpop.f32.mrb[0].mxu0
      %1806 = vmatprep.mubr.bf16.mxu0 0
      %1807 = vmatmul.mubr.bf16.gmra.mrb[0].mxu0 %v1711
      %v1808 = vpop.f32.mrb[0].mxu0
      %v1809 = vadd.f32 0.0, %v1808
      %v1810 = vpop.f32.mrb[0].mxu0
      %v1811 = vpop.f32.mrb[0].mxu0
      %v1812 = vadd.f32 0.0, %v1811
      %v1813 = vpop.f32.mrb[0].mxu0
      %1814 = vmatprep.mubr.bf16.mxu0 0
      %1815 = vmatmul.mubr.bf16.gmra.mrb[0].mxu0 %v1712
      %v1816 = vpop.f32.mrb[0].mxu0
      %v1817 = vadd.f32 0.0, %v1816
      %v1818 = vpop.f32.mrb[0].mxu0
      %v1819 = vpop.f32.mrb[0].mxu0
      %v1820 = vadd.f32 0.0, %v1819
      %v1821 = vpop.f32.mrb[0].mxu0
      %1822 = vmatprep.mubr.bf16.mxu0 0
      %1823 = vmatmul.mubr.bf16.gmra.mrb[0].mxu0 %v1713
      %v1824 = vpop.f32.mrb[0].mxu0
      %v1825 = vadd.f32 0.0, %v1824
      %v1826 = vpop.f32.mrb[0].mxu0
      %v1827 = vpop.f32.mrb[0].mxu0
      %v1828 = vadd.f32 0.0, %v1827
      %v1829 = vpop.f32.mrb[0].mxu0
      %1830 = vdwg.mxu0
      %v1831 = vadd.f32 %v1660, %v1801
      %v1832 = vadd.f32 %v1661, %v1804
      %v1833 = vadd.f32 %v1662, %v1809
      %v1834 = vadd.f32 %v1663, %v1812
      %v1835 = vadd.f32 %v1664, %v1817
      %v1836 = vadd.f32 %v1665, %v1820
      %v1837 = vadd.f32 %v1666, %v1825
      %v1838 = vadd.f32 %v1667, %v1828
      %v1839 = vld [vmem:[%s1497] sm:$0xf]
      %v1840 = vld [vmem:[%s1497 + $0x4] sm:$0x1]
      %v1841 = vld [vmem:[%s1497 + $0x8] sm:$0xf]
      %v1842 = vld [vmem:[%s1497 + $0xc] sm:$0x1]
      %v1843 = vld [vmem:[%s1497 + $0x10] sm:$0xf]
      %v1844 = vld [vmem:[%s1497 + $0x14] sm:$0x1]
      %v1845 = vld [vmem:[%s1497 + $0x18] sm:$0xf]
      %v1846 = vld [vmem:[%s1497 + $0x1c] sm:$0x1]
      %v1847 = vld [vmem:[%s1497 + $0x20] sm:$0xf]
      %v1848 = vld [vmem:[%s1497 + $0x24] sm:$0x1]
      %v1849 = vld [vmem:[%s1497 + $0x28] sm:$0xf]
      %v1850 = vld [vmem:[%s1497 + $0x2c] sm:$0x1]
      %v1851 = vld [vmem:[%s1497 + $0x30] sm:$0xf]
      %v1852 = vld [vmem:[%s1497 + $0x34] sm:$0x1]
      %v1853 = vld [vmem:[%s1497 + $0x38] sm:$0xf]
      %v1854 = vld [vmem:[%s1497 + $0x3c] sm:$0x1]
      %v1856 = vshrl.u32 %v1839, 16
      %v1858 = vrot.slane %v1856, 4
      %v1859 = vshll.u32 %v1839, 16
      %v1861 = vrot.slane %v1859, 5
      %v1862 = vor.u32 %v1858, %v1861
      %v1863 = vrot.slane %v1862, 4
      %v1865 = vshll.u32 %v1840, 16
      %v1867 = vrot.slane %v1865, 5
      %v1868 = vsel %vm606, %v1863, %v1867
      %v1870 = vshrl.u32 %v1841, 16
      %v1872 = vrot.slane %v1870, 4
      %v1873 = vshll.u32 %v1841, 16
      %v1875 = vrot.slane %v1873, 5
      %v1876 = vor.u32 %v1872, %v1875
      %v1877 = vrot.slane %v1876, 4
      %v1879 = vshll.u32 %v1842, 16
      %v1881 = vrot.slane %v1879, 5
      %v1882 = vsel %vm606, %v1877, %v1881
      %v1884 = vshrl.u32 %v1843, 16
      %v1886 = vrot.slane %v1884, 4
      %v1887 = vshll.u32 %v1843, 16
      %v1889 = vrot.slane %v1887, 5
      %v1890 = vor.u32 %v1886, %v1889
      %v1891 = vrot.slane %v1890, 4
      %v1893 = vshll.u32 %v1844, 16
      %v1895 = vrot.slane %v1893, 5
      %v1896 = vsel %vm606, %v1891, %v1895
      %v1898 = vshrl.u32 %v1845, 16
      %v1900 = vrot.slane %v1898, 4
      %v1901 = vshll.u32 %v1845, 16
      %v1903 = vrot.slane %v1901, 5
      %v1904 = vor.u32 %v1900, %v1903
      %v1905 = vrot.slane %v1904, 4
      %v1907 = vshll.u32 %v1846, 16
      %v1909 = vrot.slane %v1907, 5
      %v1910 = vsel %vm606, %v1905, %v1909
      %v1912 = vshrl.u32 %v1847, 16
      %v1914 = vrot.slane %v1912, 4
      %v1915 = vshll.u32 %v1847, 16
      %v1917 = vrot.slane %v1915, 5
      %v1918 = vor.u32 %v1914, %v1917
      %v1919 = vrot.slane %v1918, 4
      %v1921 = vshll.u32 %v1848, 16
      %v1923 = vrot.slane %v1921, 5
      %v1924 = vsel %vm606, %v1919, %v1923
      %v1926 = vshrl.u32 %v1849, 16
      %v1928 = vrot.slane %v1926, 4
      %v1929 = vshll.u32 %v1849, 16
      %v1931 = vrot.slane %v1929, 5
      %v1932 = vor.u32 %v1928, %v1931
      %v1933 = vrot.slane %v1932, 4
      %v1935 = vshll.u32 %v1850, 16
      %v1937 = vrot.slane %v1935, 5
      %v1938 = vsel %vm606, %v1933, %v1937
      %v1940 = vshrl.u32 %v1851, 16
      %v1942 = vrot.slane %v1940, 4
      %v1943 = vshll.u32 %v1851, 16
      %v1945 = vrot.slane %v1943, 5
      %v1946 = vor.u32 %v1942, %v1945
      %v1947 = vrot.slane %v1946, 4
      %v1949 = vshll.u32 %v1852, 16
      %v1951 = vrot.slane %v1949, 5
      %v1952 = vsel %vm606, %v1947, %v1951
      %v1954 = vshrl.u32 %v1853, 16
      %v1956 = vrot.slane %v1954, 4
      %v1957 = vshll.u32 %v1853, 16
      %v1959 = vrot.slane %v1957, 5
      %v1960 = vor.u32 %v1956, %v1959
      %v1961 = vrot.slane %v1960, 4
      %v1963 = vshll.u32 %v1854, 16
      %v1965 = vrot.slane %v1963, 5
      %v1966 = vsel %vm606, %v1961, %v1965
      %s1967 = scalar_lea.vmem %s248, 512
      %v1968 = vld [vmem:[%s1967] sm:$0xf]
      %v1969 = vld [vmem:[%s1967 + $0x4] sm:$0xf]
      %v1970 = vld [vmem:[%s1967 + $0x8] sm:$0xf]
      %v1971 = vld [vmem:[%s1967 + $0xc] sm:$0xf]
      %v1972 = vld [vmem:[%s1967 + $0x10] sm:$0xf]
      %v1973 = vld [vmem:[%s1967 + $0x14] sm:$0xf]
      %v1974 = vld [vmem:[%s1967 + $0x18] sm:$0xf]
      %v1975 = vld [vmem:[%s1967 + $0x1c] sm:$0xf]
      %v1976 = vld [vmem:[%s1967 + $0x20] sm:$0xf]
      %v1977 = vld [vmem:[%s1967 + $0x24] sm:$0xf]
      %v1978 = vld [vmem:[%s1967 + $0x28] sm:$0xf]
      %v1979 = vld [vmem:[%s1967 + $0x2c] sm:$0xf]
      %v1980 = vld [vmem:[%s1967 + $0x30] sm:$0xf]
      %v1981 = vld [vmem:[%s1967 + $0x34] sm:$0xf]
      %v1982 = vld [vmem:[%s1967 + $0x38] sm:$0xf]
      %v1983 = vld [vmem:[%s1967 + $0x3c] sm:$0xf]
      %v1984 = vunpack.c.l.b16 %v1868
      %v1985 = vunpack.c.l.b16 %v1882
      %v1986 = vunpack.c.l.b16 %v1896
      %v1987 = vunpack.c.l.b16 %v1910
      %v1988 = vunpack.c.l.b16 %v1924
      %v1989 = vunpack.c.l.b16 %v1938
      %v1990 = vunpack.c.l.b16 %v1952
      %v1991 = vunpack.c.l.b16 %v1966
      %v1992 = vpack.c.b16 %v1985, %v1984
      %v1993 = vpack.c.b16 %v1987, %v1986
      %v1994 = vpack.c.b16 %v1989, %v1988
      %v1995 = vpack.c.b16 %v1991, %v1990
      %v2016 = vunpack.c.l.b16 %v1968
      %v2017 = vunpack.c.l.b16 %v1969
      %v2018 = vunpack.c.l.b16 %v1970
      %v2019 = vunpack.c.l.b16 %v1971
      %v2020 = vunpack.c.l.b16 %v1972
      %v2021 = vunpack.c.l.b16 %v1973
      %v2022 = vunpack.c.l.b16 %v1974
      %v2023 = vunpack.c.l.b16 %v1975
      %v2024 = vunpack.c.l.b16 %v1976
      %v2025 = vunpack.c.l.b16 %v1977
      %v2026 = vunpack.c.l.b16 %v1978
      %v2027 = vunpack.c.l.b16 %v1979
      %v2028 = vunpack.c.l.b16 %v1980
      %v2029 = vunpack.c.l.b16 %v1981
      %v2030 = vunpack.c.l.b16 %v1982
      %v2031 = vunpack.c.l.b16 %v1983
      %v2032 = vpack.c.b16 %v2017, %v2016
      %v2033 = vpack.c.b16 %v2019, %v2018
      %v2034 = vpack.c.b16 %v2021, %v2020
      %v2035 = vpack.c.b16 %v2023, %v2022
      %v2036 = vpack.c.b16 %v2025, %v2024
      %v2037 = vpack.c.b16 %v2027, %v2026
      %v2038 = vpack.c.b16 %v2029, %v2028
      %v2039 = vpack.c.b16 %v2031, %v2030
      %2048 = vmatprep.subr.bf16.mxu0 0
      %2049 = vmatpush1.bf16.msra.mxu0 %v2032
      %2050 = vmatprep.subr.bf16.mxu0 0
      %2051 = vmatpush1.bf16.msra.mxu0 %v2033
      %2052 = vmatprep.subr.bf16.mxu0 0
      %2053 = vmatpush1.bf16.msra.mxu0 %v2034
      %2054 = vmatprep.subr.bf16.mxu0 0
      %2055 = vmatpush1.bf16.msra.mxu0 %v2035
      %2056 = vmatprep.subr.bf16.mxu0 0
      %2057 = vmatpush1.bf16.msra.mxu0 %v2036
      %2058 = vmatprep.subr.bf16.mxu0 0
      %2059 = vmatpush1.bf16.msra.mxu0 %v2037
      %2060 = vmatprep.subr.bf16.mxu0 0
      %2061 = vmatpush1.bf16.msra.mxu0 %v2038
      %2062 = vmatprep.subr.bf16.mxu0 0
      %2063 = vmatpush1.bf16.msra.mxu0 %v2039
      %2064 = vmatprep.subr.bf16.mxu0 0
      %2065 = vmatpush1.bf16.msra.mxu0 0
      %2066 = vmatprep.subr.bf16.mxu0 0
      %2067 = vmatpush1.bf16.msra.mxu0 0
      %2068 = vmatprep.subr.bf16.mxu0 0
      %2069 = vmatpush1.bf16.msra.mxu0 0
      %2070 = vmatprep.subr.bf16.mxu0 0
      %2071 = vmatpush1.bf16.msra.mxu0 0
      %2072 = vmatprep.subr.bf16.mxu0 0
      %2073 = vmatpush1.bf16.msra.mxu0 0
      %2074 = vmatprep.subr.bf16.mxu0 0
      %2075 = vmatpush1.bf16.msra.mxu0 0
      %2076 = vmatprep.subr.bf16.mxu0 0
      %2077 = vmatpush1.bf16.msra.mxu0 0
      %2078 = vmatprep.subr.bf16.mxu0 0
      %2079 = vmatpush1.bf16.msra.mxu0 0
      %2080 = vmatprep.mubr.bf16.mxu0 0
      %2081 = vmatmul.mubr.bf16.gmra.mrb[0].mxu0 %v1992
      %v2082 = vpop.f32.mrb[0].mxu0
      %v2083 = vadd.f32 0.0, %v2082
      %v2084 = vpop.f32.mrb[0].mxu0
      %v2085 = vpop.f32.mrb[0].mxu0
      %v2086 = vadd.f32 0.0, %v2085
      %v2087 = vpop.f32.mrb[0].mxu0
      %2088 = vmatprep.mubr.bf16.mxu0 0
      %2089 = vmatmul.mubr.bf16.gmra.mrb[0].mxu0 %v1993
      %v2090 = vpop.f32.mrb[0].mxu0
      %v2091 = vadd.f32 0.0, %v2090
      %v2092 = vpop.f32.mrb[0].mxu0
      %v2093 = vpop.f32.mrb[0].mxu0
      %v2094 = vadd.f32 0.0, %v2093
      %v2095 = vpop.f32.mrb[0].mxu0
      %2096 = vmatprep.mubr.bf16.mxu0 0
      %2097 = vmatmul.mubr.bf16.gmra.mrb[0].mxu0 %v1994
      %v2098 = vpop.f32.mrb[0].mxu0
      %v2099 = vadd.f32 0.0, %v2098
      %v2100 = vpop.f32.mrb[0].mxu0
      %v2101 = vpop.f32.mrb[0].mxu0
      %v2102 = vadd.f32 0.0, %v2101
      %v2103 = vpop.f32.mrb[0].mxu0
      %2104 = vmatprep.mubr.bf16.mxu0 0
      %2105 = vmatmul.mubr.bf16.gmra.mrb[0].mxu0 %v1995
      %v2106 = vpop.f32.mrb[0].mxu0
      %v2107 = vadd.f32 0.0, %v2106
      %v2108 = vpop.f32.mrb[0].mxu0
      %v2109 = vpop.f32.mrb[0].mxu0
      %v2110 = vadd.f32 0.0, %v2109
      %v2111 = vpop.f32.mrb[0].mxu0
      %2112 = vdwg.mxu0
      %v2113 = vadd.f32 %v1831, %v2083
      %v2114 = vadd.f32 %v1832, %v2086
      %v2115 = vadd.f32 %v1833, %v2091
      %v2116 = vadd.f32 %v1834, %v2094
      %v2117 = vadd.f32 %v1835, %v2099
      %v2118 = vadd.f32 %v1836, %v2102
      %v2119 = vadd.f32 %v1837, %v2107
      %v2120 = vadd.f32 %v1838, %v2110
      %v2121 = vld [vmem:[%s251] sm:$0x1]
      %v2123 = vlaneseq
      %v2124 = vshrl.u32 %v2123, 7
      %v2125 = vsub.s32 0, %v2124
      %v2126 = vrot.slane %v2121, %v2125
      %v2128 = vmul.f32 %v2113, %v2126
      %v2129 = vmul.f32 %v2114, %v2126
      %v2130 = vmul.f32 %v2115, %v2126
      %v2131 = vmul.f32 %v2116, %v2126
      %v2132 = vmul.f32 %v2117, %v2126
      %v2133 = vmul.f32 %v2118, %v2126
      %v2134 = vmul.f32 %v2119, %v2126
      %v2135 = vmul.f32 %v2120, %v2126
      %v2136 = vld [vmem:[%s254] sm:$0x1]
      %v2138 = vlaneseq
      %v2139 = vshrl.u32 %v2138, 7
      %v2140 = vsub.s32 0, %v2139
      %v2141 = vrot.slane %v2136, %v2140
      %v2143 = vadd.f32 %v2128, %v2141
      %v2144 = vadd.f32 %v2129, %v2141
      %v2145 = vadd.f32 %v2130, %v2141
      %v2146 = vadd.f32 %v2131, %v2141
      %v2147 = vadd.f32 %v2132, %v2141
      %v2148 = vadd.f32 %v2133, %v2141
      %v2149 = vadd.f32 %v2134, %v2141
      %v2150 = vadd.f32 %v2135, %v2141
      %v2151 = vmax.f32 %v2143, 0.0
      %v2152 = vmax.f32 %v2144, 0.0
      %v2153 = vmax.f32 %v2145, 0.0
      %v2154 = vmax.f32 %v2146, 0.0
      %v2155 = vmax.f32 %v2147, 0.0
      %v2156 = vmax.f32 %v2148, 0.0
      %v2157 = vmax.f32 %v2149, 0.0
      %v2158 = vmax.f32 %v2150, 0.0
      %2159 = vst [vmem:[%s262] sm:$0xf] 0
      %2160 = vst [vmem:[%s262 + $0x4] sm:$0x1] 0
      %2161 = vst [vmem:[%s262 + $0x8] sm:$0xf] 0
      %2162 = vst [vmem:[%s262 + $0xc] sm:$0x1] 0
      %2163 = vst [vmem:[%s262 + $0x10] sm:$0xf] 0
      %2164 = vst [vmem:[%s262 + $0x14] sm:$0x1] 0
      %2165 = vst [vmem:[%s262 + $0x18] sm:$0xf] 0
      %2166 = vst [vmem:[%s262 + $0x1c] sm:$0x1] 0
      %2167 = vst [vmem:[%s262 + $0x20] sm:$0xf] 0
      %2168 = vst [vmem:[%s262 + $0x24] sm:$0x1] 0
      %2169 = vst [vmem:[%s262 + $0x28] sm:$0xf] 0
      %2170 = vst [vmem:[%s262 + $0x2c] sm:$0x1] 0
      %2171 = vst [vmem:[%s262 + $0x30] sm:$0xf] 0
      %2172 = vst [vmem:[%s262 + $0x34] sm:$0x1] 0
      %2173 = vst [vmem:[%s262 + $0x38] sm:$0xf] 0
      %2174 = vst [vmem:[%s262 + $0x3c] sm:$0x1] 0
      %2175 = vst [vmem:[%s262 + $0x40] sm:$0xf] 0
      %2176 = vst [vmem:[%s262 + $0x44] sm:$0x1] 0
      %2177 = vst [vmem:[%s262 + $0x48] sm:$0xf] 0
      %2178 = vst [vmem:[%s262 + $0x4c] sm:$0x1] 0
      %v2179 = vpack.c.bf16 %v2151, %v2151
      %v2180 = vpack.c.bf16 %v2152, %v2152
      %v2181 = vpack.c.bf16 %v2153, %v2153
      %v2182 = vpack.c.bf16 %v2154, %v2154
      %v2183 = vpack.c.bf16 %v2155, %v2155
      %v2184 = vpack.c.bf16 %v2156, %v2156
      %v2185 = vpack.c.bf16 %v2157, %v2157
      %v2186 = vpack.c.bf16 %v2158, %v2158
      %v2195 = vunpack.c.l.b16 %v2179
      %v2196 = vunpack.c.l.b16 %v2180
      %v2197 = vunpack.c.l.b16 %v2181
      %v2198 = vunpack.c.l.b16 %v2182
      %v2199 = vunpack.c.l.b16 %v2183
      %v2200 = vunpack.c.l.b16 %v2184
      %v2201 = vunpack.c.l.b16 %v2185
      %v2202 = vunpack.c.l.b16 %v2186
      %v2203 = vpack.c.b16 %v2195, %v2195
      %v2204 = vpack.c.b16 %v2196, %v2196
      %v2205 = vpack.c.b16 %v2197, %v2197
      %v2206 = vpack.c.b16 %v2198, %v2198
      %v2207 = vpack.c.b16 %v2199, %v2199
      %v2208 = vpack.c.b16 %v2200, %v2200
      %v2209 = vpack.c.b16 %v2201, %v2201
      %v2210 = vpack.c.b16 %v2202, %v2202
      %v2212 = vshrl.u32 %v2203, 16
      %v2214 = vrot.slane %v2212, 7
      %v2215 = vshll.u32 %v2203, 16
      %v2217 = vor.u32 %v2214, %v2215
      %v2218 = vrot.slane %v2214, 4
      %v2220 = vshrl.u32 %v2204, 16
      %v2222 = vrot.slane %v2220, 7
      %v2223 = vshll.u32 %v2204, 16
      %v2225 = vor.u32 %v2222, %v2223
      %v2226 = vrot.slane %v2222, 4
      %v2228 = vshrl.u32 %v2205, 16
      %v2230 = vrot.slane %v2228, 7
      %v2231 = vshll.u32 %v2205, 16
      %v2233 = vor.u32 %v2230, %v2231
      %v2234 = vrot.slane %v2230, 4
      %v2236 = vshrl.u32 %v2206, 16
      %v2238 = vrot.slane %v2236, 7
      %v2239 = vshll.u32 %v2206, 16
      %v2241 = vor.u32 %v2238, %v2239
      %v2242 = vrot.slane %v2238, 4
      %v2244 = vshrl.u32 %v2207, 16
      %v2246 = vrot.slane %v2244, 7
      %v2247 = vshll.u32 %v2207, 16
      %v2249 = vor.u32 %v2246, %v2247
      %v2250 = vrot.slane %v2246, 4
      %v2252 = vshrl.u32 %v2208, 16
      %v2254 = vrot.slane %v2252, 7
      %v2255 = vshll.u32 %v2208, 16
      %v2257 = vor.u32 %v2254, %v2255
      %v2258 = vrot.slane %v2254, 4
      %v2260 = vshrl.u32 %v2209, 16
      %v2262 = vrot.slane %v2260, 7
      %v2263 = vshll.u32 %v2209, 16
      %v2265 = vor.u32 %v2262, %v2263
      %v2266 = vrot.slane %v2262, 4
      %v2268 = vshrl.u32 %v2210, 16
      %v2270 = vrot.slane %v2268, 7
      %v2271 = vshll.u32 %v2210, 16
      %v2273 = vor.u32 %v2270, %v2271
      %v2274 = vrot.slane %v2270, 4
      %s2291 = scalar_lea.vmem %s262, 8
      %vm2292 = vcmask 1043456
      %vm2293 = vsmask.f32 7938
      %vm2294 = vmand %vm2292, %vm2293
      %v2295 = vld [vmem:[%s2291] sm:$0xf]
      %v2296 = vsel %vm2294, %v2217, %v2295
      %2297 = vst [vmem:[%s2291] sm:$0xf] %v2296
      %vm2298 = vcmask 1040384
      %vm2299 = vsmask.f32 256
      %vm2300 = vmand %vm2298, %vm2299
      %v2301 = vld [vmem:[%s2291 + $0x4] sm:$0x1]
      %v2302 = vsel %vm2300, %v2218, %v2301
      %2303 = vst [vmem:[%s2291 + $0x4] sm:$0x1] %v2302
      %v2304 = vld [vmem:[%s2291 + $0x8] sm:$0xf]
      %v2305 = vsel %vm2294, %v2225, %v2304
      %2306 = vst [vmem:[%s2291 + $0x8] sm:$0xf] %v2305
      %v2307 = vld [vmem:[%s2291 + $0xc] sm:$0x1]
      %v2308 = vsel %vm2300, %v2226, %v2307
      %2309 = vst [vmem:[%s2291 + $0xc] sm:$0x1] %v2308
      %v2310 = vld [vmem:[%s2291 + $0x10] sm:$0xf]
      %v2311 = vsel %vm2294, %v2233, %v2310
      %2312 = vst [vmem:[%s2291 + $0x10] sm:$0xf] %v2311
      %v2313 = vld [vmem:[%s2291 + $0x14] sm:$0x1]
      %v2314 = vsel %vm2300, %v2234, %v2313
      %2315 = vst [vmem:[%s2291 + $0x14] sm:$0x1] %v2314
      %v2316 = vld [vmem:[%s2291 + $0x18] sm:$0xf]
      %v2317 = vsel %vm2294, %v2241, %v2316
      %2318 = vst [vmem:[%s2291 + $0x18] sm:$0xf] %v2317
      %v2319 = vld [vmem:[%s2291 + $0x1c] sm:$0x1]
      %v2320 = vsel %vm2300, %v2242, %v2319
      %2321 = vst [vmem:[%s2291 + $0x1c] sm:$0x1] %v2320
      %v2322 = vld [vmem:[%s2291 + $0x20] sm:$0xf]
      %v2323 = vsel %vm2294, %v2249, %v2322
      %2324 = vst [vmem:[%s2291 + $0x20] sm:$0xf] %v2323
      %v2325 = vld [vmem:[%s2291 + $0x24] sm:$0x1]
      %v2326 = vsel %vm2300, %v2250, %v2325
      %2327 = vst [vmem:[%s2291 + $0x24] sm:$0x1] %v2326
      %v2328 = vld [vmem:[%s2291 + $0x28] sm:$0xf]
      %v2329 = vsel %vm2294, %v2257, %v2328
      %2330 = vst [vmem:[%s2291 + $0x28] sm:$0xf] %v2329
      %v2331 = vld [vmem:[%s2291 + $0x2c] sm:$0x1]
      %v2332 = vsel %vm2300, %v2258, %v2331
      %2333 = vst [vmem:[%s2291 + $0x2c] sm:$0x1] %v2332
      %v2334 = vld [vmem:[%s2291 + $0x30] sm:$0xf]
      %v2335 = vsel %vm2294, %v2265, %v2334
      %2336 = vst [vmem:[%s2291 + $0x30] sm:$0xf] %v2335
      %v2337 = vld [vmem:[%s2291 + $0x34] sm:$0x1]
      %v2338 = vsel %vm2300, %v2266, %v2337
      %2339 = vst [vmem:[%s2291 + $0x34] sm:$0x1] %v2338
      %v2340 = vld [vmem:[%s2291 + $0x38] sm:$0xf]
      %v2341 = vsel %vm2294, %v2273, %v2340
      %2342 = vst [vmem:[%s2291 + $0x38] sm:$0xf] %v2341
      %v2343 = vld [vmem:[%s2291 + $0x3c] sm:$0x1]
      %v2344 = vsel %vm2300, %v2274, %v2343
      %2345 = vst [vmem:[%s2291 + $0x3c] sm:$0x1] %v2344
      %p2346 = scmp.lt.s32.totalorder %s19, 1
      %s2347 = scalar_select %p2346, %s19, 1
      %p2348 = scmp.lt.s32.totalorder %s20, 0
      %s2349 = scalar_select %p2348, %s20, 0
      %s2350 = smul.addr %s2347, 20
      %s2351 = sadd.s32 %s2349, %s2350
      %s2352 = smul.addr %s2351, 4
      %s2353 = scalar_lea.vmem %s4, %s2352
      // Predicated region
      $region37: #{preact_block_forward.4} parent=35 // pred_check
        %p2354 = pneg %p151
      $region38: #{preact_block_forward.4} parent=35 // pred_check_branch
        %2356 = sbr.rel (%p2354) target = $region40
      $region39: #{preact_block_forward.4} parent=35 // pred_region
        _
      $region40: #{preact_block_forward.4} parent=35 // pred_fallthru
        _
    $region36: #{preact_block_forward.4} parent=5 // pred_fallthru
      _
    %p2357 = scmp.le.s32.totalorder 2, %s10
    // Predicated region
    $region41: #{preact_block_forward.4} parent=5 // pred_check
      %p2358 = pneg %p2357
    $region42: #{preact_block_forward.4} parent=5 // pred_check_branch
      %2360 = sbr.rel (%p2358) target = $region44
    $region43: #{preact_block_forward.4} parent=5 // pred_region
      %s2361 = ssub.s32 %s10, 2
      // Predicated region
      $region45: #{preact_block_forward.4} parent=43 // pred_check
        %p2362 = pneg %p157
      $region46: #{preact_block_forward.4} parent=43 // pred_check_branch
        %2364 = sbr.rel (%p2362) target = $region48
      $region47: #{preact_block_forward.4} parent=43 // pred_region
        %p2365 = scmp.lt.s32.totalorder %s21, 1
        %s2366 = scalar_select %p2365, %s21, 1
        %p2367 = scmp.lt.s32.totalorder %s22, 0
        %s2368 = scalar_select %p2367, %s22, 0
        %s2369 = smul.addr %s2366, 20
        %s2370 = sadd.s32 %s2368, %s2369
        %s2371 = smul.addr %s2370, 4
        %s2372 = scalar_lea.vmem %s4, %s2371
      $region48: #{preact_block_forward.4} parent=43 // pred_fallthru
        _
    $region44: #{preact_block_forward.4} parent=5 // pred_fallthru
      _
  $region6: #{preact_block_forward.4} parent=0 // loop_footer
    %s14 = sadd.s32 1, %s10
  $region7: #{preact_block_forward.4} parent=0 // loop_footer_branch
    %9 = sbr.rel target = $region3
  $region8: #{preact_block_forward.4} parent=0 // loop_exit
    _

// kernel: preact_block_forward.5
$region0: #{preact_block_forward.5}
  #allocation0 [shape = 'u32[]', space=smem, size = 0x4, offset = 0x4, fixed_abs, tag = 'smem constant byte address 0x4 - core index']
  #allocation1 [shape = 'u32[144,128]{1,0:T(1,128)}', space=vmem, size = 0x12000, scoped, tag = 'internal scratch']
  %s0 = inlined_call_operand.vmem [shape: bf16[2,10,10,128], index: 0, kind: input, shape index: {}]
  %s1 = inlined_call_operand.vmem [shape: bf16[3,3,128,128], index: 1, kind: input, shape index: {}]
  %s2 = inlined_call_operand.vmem [shape: bf16[2,36,9,128], index: 2, kind: input, shape index: {}]
  %s3 = inlined_call_operand.vmem [shape: bf16[128,128], index: 3, kind: input, shape index: {}]
  %s4 = inlined_call_operand.vmem [shape: f32[2,8,8,128], index: 4, kind: output, shape index: {}]
  %s5 = sld [smem:[#allocation0]]
  $region49: #{preact_block_forward.5} parent=0
    _
  %s7 = ssub.s32 1, %s5
  %s8 = scalar_select 0, %s7, %s5
  loop: start=0, step=1, limit=4
  $region2: #{preact_block_forward.5} parent=0 // loop_pre_header
    _
  $region3: #{preact_block_forward.5} parent=0 // loop_header
    %s10 = sphi 0, %s14
    %p11 = scmp.ge.s32.totalorder %s10, 4
    %s17 = sphi 0, %s29
    %s18 = sphi 0, %s25
    %s19 = sphi 0, %s17
    %s20 = sphi 0, %s18
    %s21 = sphi 0, %s19
    %s22 = sphi 0, %s20
    %s32 = sphi 0, %s34
    %s35 = sphi 0, %s32
    %s36 = sphi 0, %s35
    %s52 = sphi 0, %s36
    %s58 = sphi 0, %s60
    %s61 = sphi 0, %s58
    %s62 = sphi 0, %s61
    %s78 = sphi 0, %s62
    %s84 = sphi 0, %s86
    %s87 = sphi 0, %s84
    %s88 = sphi 0, %s87
    %s104 = sphi 0, %s88
    %s110 = sphi 0, %s112
    %s113 = sphi 0, %s110
    %s114 = sphi 0, %s113
    %s130 = sphi 0, %s114
    %s138 = sphi 0, %s140
    %s141 = sphi 0, %s138
    %s142 = sphi 0, %s141
    %s158 = sphi 0, %s142
  $region4: #{preact_block_forward.5} parent=0 // loop_header_branch
    %13 = sbr.rel (%p11) target = $region8
  $region5: #{preact_block_forward.5} parent=0 // loop_body
    %s15 = ssub.s32 %s10, 1
    %s16 = ssub.s32 %s10, 2
    %s23 = sadd.s32 1, %s18
    %p24 = scmp.ge.s32.totalorder %s23, 1
    %s25 = scalar_select %p24, 0, %s23
    %s26 = sadd.s32 1, %s17
    %s27 = scalar_select %p24, %s26, %s17
    %p28 = scmp.ge.s32.totalorder %s27, 2
    %s29 = scalar_select %p28, 0, %s27
    %s30 = ssub.s32 %s17, %s29
    %p31 = scmp.eq.s32.totalorder %s30, 0
    %s33 = sadd.s32 %s32, 1
    %s34 = scalar_select %p31, %s32, %s33
    %p37 = pneg %p31
    %p38 = scmp.eq.s32.totalorder %s10, 1
    %p39 = por %p37, %p38
    %p40 = scmp.ne.s32.totalorder %s32, %s35
    %p41 = scmp.eq.s32.totalorder %s10, 0
    %p42 = por %p40, %p41
    %p43 = scmp.ne.s32.totalorder %s32, %s35
    %p44 = scmp.eq.s32.totalorder %s15, 1
    %p45 = por %p43, %p44
    %p46 = scmp.ne.s32.totalorder %s35, %s36
    %p47 = scmp.eq.s32.totalorder %s15, 0
    %p48 = por %p46, %p47
    %p49 = scmp.ne.s32.totalorder %s35, %s36
    %p50 = scmp.eq.s32.totalorder %s16, 1
    %p51 = por %p49, %p50
    %p53 = scmp.ne.s32.totalorder %s36, %s52
    %p54 = scmp.eq.s32.totalorder %s16, 0
    %p55 = por %p53, %p54
    %s56 = ssub.s32 %s18, %s25
    %p57 = scmp.eq.s32.totalorder %s56, 0
    %s59 = sadd.s32 %s58, 1
    %s60 = scalar_select %p57, %s58, %s59
    %p63 = pneg %p57
    %p64 = scmp.eq.s32.totalorder %s10, 1
    %p65 = por %p63, %p64
    %p66 = scmp.ne.s32.totalorder %s58, %s61
    %p67 = scmp.eq.s32.totalorder %s10, 0
    %p68 = por %p66, %p67
    %p69 = scmp.ne.s32.totalorder %s58, %s61
    %p70 = scmp.eq.s32.totalorder %s15, 1
    %p71 = por %p69, %p70
    %p72 = scmp.ne.s32.totalorder %s61, %s62
    %p73 = scmp.eq.s32.totalorder %s15, 0
    %p74 = por %p72, %p73
    %p75 = scmp.ne.s32.totalorder %s61, %s62
    %p76 = scmp.eq.s32.totalorder %s16, 1
    %p77 = por %p75, %p76
    %p79 = scmp.ne.s32.totalorder %s62, %s78
    %p80 = scmp.eq.s32.totalorder %s16, 0
    %p81 = por %p79, %p80
    %s82 = ssub.s32 %s17, %s29
    %p83 = scmp.eq.s32.totalorder %s82, 0
    %s85 = sadd.s32 %s84, 1
    %s86 = scalar_select %p83, %s84, %s85
    %p89 = pneg %p83
    %p90 = scmp.eq.s32.totalorder %s10, 1
    %p91 = por %p89, %p90
    %p92 = scmp.ne.s32.totalorder %s84, %s87
    %p93 = scmp.eq.s32.totalorder %s10, 0
    %p94 = por %p92, %p93
    %p95 = scmp.ne.s32.totalorder %s84, %s87
    %p96 = scmp.eq.s32.totalorder %s15, 1
    %p97 = por %p95, %p96
    %p98 = scmp.ne.s32.totalorder %s87, %s88
    %p99 = scmp.eq.s32.totalorder %s15, 0
    %p100 = por %p98, %p99
    %p101 = scmp.ne.s32.totalorder %s87, %s88
    %p102 = scmp.eq.s32.totalorder %s16, 1
    %p103 = por %p101, %p102
    %p105 = scmp.ne.s32.totalorder %s88, %s104
    %p106 = scmp.eq.s32.totalorder %s16, 0
    %p107 = por %p105, %p106
    %s108 = ssub.s32 %s18, %s25
    %p109 = scmp.eq.s32.totalorder %s108, 0
    %s111 = sadd.s32 %s110, 1
    %s112 = scalar_select %p109, %s110, %s111
    %p115 = pneg %p109
    %p116 = scmp.eq.s32.totalorder %s10, 1
    %p117 = por %p115, %p116
    %p118 = scmp.ne.s32.totalorder %s110, %s113
    %p119 = scmp.eq.s32.totalorder %s10, 0
    %p120 = por %p118, %p119
    %p121 = scmp.ne.s32.totalorder %s110, %s113
    %p122 = scmp.eq.s32.totalorder %s15, 1
    %p123 = por %p121, %p122
    %p124 = scmp.ne.s32.totalorder %s113, %s114
    %p125 = scmp.eq.s32.totalorder %s15, 0
    %p126 = por %p124, %p125
    %p127 = scmp.ne.s32.totalorder %s113, %s114
    %p128 = scmp.eq.s32.totalorder %s16, 1
    %p129 = por %p127, %p128
    %p131 = scmp.ne.s32.totalorder %s114, %s130
    %p132 = scmp.eq.s32.totalorder %s16, 0
    %p133 = por %p131, %p132
    %s134 = ssub.s32 %s17, %s29
    %s135 = ssub.s32 %s18, %s25
    %s136 = sor.u32 %s134, %s135
    %p137 = scmp.eq.s32.totalorder %s136, 0
    %s139 = sadd.s32 %s138, 1
    %s140 = scalar_select %p137, %s138, %s139
    %p143 = pneg %p137
    %p144 = scmp.eq.s32.totalorder %s10, 1
    %p145 = por %p143, %p144
    %p146 = scmp.ne.s32.totalorder %s138, %s141
    %p147 = scmp.eq.s32.totalorder %s10, 0
    %p148 = por %p146, %p147
    %p149 = scmp.ne.s32.totalorder %s138, %s141
    %p150 = scmp.eq.s32.totalorder %s15, 1
    %p151 = por %p149, %p150
    %p152 = scmp.ne.s32.totalorder %s141, %s142
    %p153 = scmp.eq.s32.totalorder %s15, 0
    %p154 = por %p152, %p153
    %p155 = scmp.ne.s32.totalorder %s141, %s142
    %p156 = scmp.eq.s32.totalorder %s16, 1
    %p157 = por %p155, %p156
    %p159 = scmp.ne.s32.totalorder %s142, %s158
    %p160 = scmp.eq.s32.totalorder %s16, 0
    %p161 = por %p159, %p160
    %p162 = scmp.le.s32.totalorder 1, %s10
    %p163 = scmp.lt.s32.totalorder %s10, 3
    %p164 = pnand %p162, %p163
    %p165 = pneg %p164
    // Predicated region
    $region9: #{preact_block_forward.5} parent=5 // pred_check
      _
    $region10: #{preact_block_forward.5} parent=5 // pred_check_branch
      %167 = sbr.rel (%p164) target = $region12
    $region11: #{preact_block_forward.5} parent=5 // pred_region
      %s168 = ssub.s32 %s10, 1
      // Predicated region
      $region13: #{preact_block_forward.5} parent=11 // pred_check
        %p169 = pneg %p74
      $region14: #{preact_block_forward.5} parent=11 // pred_check_branch
        %171 = sbr.rel (%p169) target = $region16
      $region15: #{preact_block_forward.5} parent=11 // pred_region
        %p172 = scmp.lt.s32.totalorder %s20, 0
        %s173 = scalar_select %p172, %s20, 0
        %s174 = smul.addr %s173, 4
        %s175 = scalar_lea.vmem %s1, %s174
      $region16: #{preact_block_forward.5} parent=11 // pred_fallthru
        _
      // Predicated region
      $region17: #{preact_block_forward.5} parent=11 // pred_check
        %p176 = pneg %p126
      $region18: #{preact_block_forward.5} parent=11 // pred_check_branch
        %178 = sbr.rel (%p176) target = $region20
      $region19: #{preact_block_forward.5} parent=11 // pred_region
        %p179 = scmp.lt.s32.totalorder %s20, 0
        %s180 = scalar_select %p179, %s20, 0
        %s181 = smul.addr %s180, 4
        %s182 = scalar_lea.vmem %s3, %s181
      $region20: #{preact_block_forward.5} parent=11 // pred_fallthru
        _
    $region12: #{preact_block_forward.5} parent=5 // pred_fallthru
      _
    %p183 = scmp.lt.s32.totalorder %s10, 2
    // Predicated region
    $region21: #{preact_block_forward.5} parent=5 // pred_check
      %p184 = pneg %p183
    $region22: #{preact_block_forward.5} parent=5 // pred_check_branch
      %186 = sbr.rel (%p184) target = $region24
    $region23: #{preact_block_forward.5} parent=5 // pred_region
      // Predicated region
      $region25: #{preact_block_forward.5} parent=23 // pred_check
        %p187 = pneg %p42
      $region26: #{preact_block_forward.5} parent=23 // pred_check_branch
        %189 = sbr.rel (%p187) target = $region28
      $region27: #{preact_block_forward.5} parent=23 // pred_region
        %p190 = scmp.lt.s32.totalorder %s17, 1
        %s191 = scalar_select %p190, %s17, 1
        %s192 = smul.addr %s191, 20
        %s193 = smul.addr %s192, 4
        %s194 = scalar_lea.vmem %s0, %s193
      $region28: #{preact_block_forward.5} parent=23 // pred_fallthru
        _
      // Predicated region
      $region29: #{preact_block_forward.5} parent=23 // pred_check
        %p195 = pneg %p94
      $region30: #{preact_block_forward.5} parent=23 // pred_check_branch
        %197 = sbr.rel (%p195) target = $region32
      $region31: #{preact_block_forward.5} parent=23 // pred_region
        %p198 = scmp.lt.s32.totalorder %s17, 1
        %s199 = scalar_select %p198, %s17, 1
        %s200 = smul.addr %s199, 72
        %s201 = smul.addr %s200, 4
        %s202 = scalar_lea.vmem %s2, %s201
      $region32: #{preact_block_forward.5} parent=23 // pred_fallthru
        _
    $region24: #{preact_block_forward.5} parent=5 // pred_fallthru
      _
    %p203 = scmp.le.s32.totalorder 1, %s10
    %p204 = scmp.lt.s32.totalorder %s10, 3
    %p205 = pnand %p203, %p204
    %p206 = pneg %p205
    // Predicated region
    $region33: #{preact_block_forward.5} parent=5 // pred_check
      _
    $region34: #{preact_block_forward.5} parent=5 // pred_check_branch
      %208 = sbr.rel (%p205) target = $region36
    $region35: #{preact_block_forward.5} parent=5 // pred_region
      %s209 = ssub.s32 %s10, 1
      %p210 = scmp.lt.s32.totalorder %s19, 1
      %s211 = scalar_select %p210, %s19, 1
      %s212 = smul.addr %s211, 20
      %s213 = smul.addr %s212, 4
      %s214 = scalar_lea.vmem %s0, %s213
      %p215 = pneg %p48
      %p216 = pneg %p45
      %p217 = scmp.lt.s32.totalorder %s20, 0
      %s218 = scalar_select %p217, %s20, 0
      %s219 = smul.addr %s218, 4
      %s220 = scalar_lea.vmem %s1, %s219
      %p221 = pneg %p74
      %p222 = pneg %p71
      %p223 = scmp.lt.s32.totalorder %s19, 1
      %s224 = scalar_select %p223, %s19, 1
      %s225 = smul.addr %s224, 72
      %s226 = smul.addr %s225, 4
      %s227 = scalar_lea.vmem %s2, %s226
      %p228 = pneg %p100
      %p229 = pneg %p97
      %p230 = scmp.lt.s32.totalorder %s20, 0
      %s231 = scalar_select %p230, %s20, 0
      %s232 = smul.addr %s231, 4
      %s233 = scalar_lea.vmem %s3, %s232
      %p234 = pneg %p126
      %p235 = pneg %p123
      %p236 = pneg %p154
      %p237 = pneg %p151
      %p238 = scmp.lt.s32.totalorder %s19, 1
      %s239 = scalar_select %p238, %s19, 1
      %p240 = scmp.lt.s32.totalorder %s20, 0
      %s241 = scalar_select %p240, %s20, 0
      %s242 = smul.addr %s239, 8
      %s243 = sadd.s32 %s241, %s242
      %s244 = smul.addr %s243, 8
      %s245 = scalar_lea.vmem %s4, %s244
      %p246 = scmp.lt.s32.totalorder %s19, 1
      %s247 = scalar_select %p246, %s19, 1
      %s248 = smul.addr %s247, 20
      %s249 = smul.addr %s248, 4
      %s250 = scalar_lea.vmem %s0, %s249
      %p251 = scmp.lt.s32.totalorder %s20, 0
      %s252 = scalar_select %p251, %s20, 0
      %s253 = smul.addr %s252, 4
      %s254 = scalar_lea.vmem %s1, %s253
      %p255 = scmp.lt.s32.totalorder %s19, 1
      %s256 = scalar_select %p255, %s19, 1
      %s257 = smul.addr %s256, 72
      %s258 = smul.addr %s257, 4
      %s259 = scalar_lea.vmem %s2, %s258
      %p260 = scmp.lt.s32.totalorder %s20, 0
      %s261 = scalar_select %p260, %s20, 0
      %s262 = smul.addr %s261, 4
      %s263 = scalar_lea.vmem %s3, %s262
      %p264 = scmp.lt.s32.totalorder %s19, 1
      %s265 = scalar_select %p264, %s19, 1
      %p266 = scmp.lt.s32.totalorder %s20, 0
      %s267 = scalar_select %p266, %s20, 0
      %s268 = smul.addr %s265, 8
      %s269 = sadd.s32 %s267, %s268
      %s270 = smul.addr %s269, 8
      %s271 = scalar_lea.vmem %s4, %s270
      %v273 = vld [vmem:[%s250] sm:$0xf]
      %v274 = vld [vmem:[%s250 + $0x8] sm:$0xf]
      %v275 = vld [vmem:[%s250 + $0x10] sm:$0xf]
      %v276 = vld [vmem:[%s250 + $0x18] sm:$0xf]
      %v277 = vld [vmem:[%s250 + $0x20] sm:$0xf]
      %v278 = vld [vmem:[%s250 + $0x28] sm:$0xf]
      %v279 = vld [vmem:[%s250 + $0x30] sm:$0xf]
      %v280 = vld [vmem:[%s250 + $0x38] sm:$0xf]
      %v281 = vld [vmem:[%s254] sm:$0xf]
      %v282 = vld [vmem:[%s254 + $0x4] sm:$0xf]
      %v283 = vld [vmem:[%s254 + $0x8] sm:$0xf]
      %v284 = vld [vmem:[%s254 + $0xc] sm:$0xf]
      %v285 = vld [vmem:[%s254 + $0x10] sm:$0xf]
      %v286 = vld [vmem:[%s254 + $0x14] sm:$0xf]
      %v287 = vld [vmem:[%s254 + $0x18] sm:$0xf]
      %v288 = vld [vmem:[%s254 + $0x1c] sm:$0xf]
      %v289 = vld [vmem:[%s254 + $0x20] sm:$0xf]
      %v290 = vld [vmem:[%s254 + $0x24] sm:$0xf]
      %v291 = vld [vmem:[%s254 + $0x28] sm:$0xf]
      %v292 = vld [vmem:[%s254 + $0x2c] sm:$0xf]
      %v293 = vld [vmem:[%s254 + $0x30] sm:$0xf]
      %v294 = vld [vmem:[%s254 + $0x34] sm:$0xf]
      %v295 = vld [vmem:[%s254 + $0x38] sm:$0xf]
      %v296 = vld [vmem:[%s254 + $0x3c] sm:$0xf]
      %v297 = vld [vmem:[%s250 + $0x4] sm:$0x1]
      %v298 = vld [vmem:[%s250 + $0xc] sm:$0x1]
      %v299 = vld [vmem:[%s250 + $0x14] sm:$0x1]
      %v300 = vld [vmem:[%s250 + $0x1c] sm:$0x1]
      %v301 = vld [vmem:[%s250 + $0x24] sm:$0x1]
      %v302 = vld [vmem:[%s250 + $0x2c] sm:$0x1]
      %v303 = vld [vmem:[%s250 + $0x34] sm:$0x1]
      %v304 = vld [vmem:[%s250 + $0x3c] sm:$0x1]
      %vm305 = vsmask.f32 3328
      %vm306 = vsmask.f32 7440
      %vm307 = vmor %vm305, %vm306
      %v309 = vshrl.u32 %v273, 16
      %v311 = vrot.slane %v309, 4
      %v312 = vshll.u32 %v273, 16
      %v314 = vrot.slane %v312, 5
      %v315 = vor.u32 %v311, %v314
      %v316 = vrot.slane %v315, 4
      %v318 = vshll.u32 %v297, 16
      %v320 = vrot.slane %v318, 5
      %v321 = vsel %vm307, %v316, %v320
      %v323 = vshrl.u32 %v274, 16
      %v325 = vrot.slane %v323, 4
      %v326 = vshll.u32 %v274, 16
      %v328 = vrot.slane %v326, 5
      %v329 = vor.u32 %v325, %v328
      %v330 = vrot.slane %v329, 4
      %v332 = vshll.u32 %v298, 16
      %v334 = vrot.slane %v332, 5
      %v335 = vsel %vm307, %v330, %v334
      %v337 = vshrl.u32 %v275, 16
      %v339 = vrot.slane %v337, 4
      %v340 = vshll.u32 %v275, 16
      %v342 = vrot.slane %v340, 5
      %v343 = vor.u32 %v339, %v342
      %v344 = vrot.slane %v343, 4
      %v346 = vshll.u32 %v299, 16
      %v348 = vrot.slane %v346, 5
      %v349 = vsel %vm307, %v344, %v348
      %v351 = vshrl.u32 %v276, 16
      %v353 = vrot.slane %v351, 4
      %v354 = vshll.u32 %v276, 16
      %v356 = vrot.slane %v354, 5
      %v357 = vor.u32 %v353, %v356
      %v358 = vrot.slane %v357, 4
      %v360 = vshll.u32 %v300, 16
      %v362 = vrot.slane %v360, 5
      %v363 = vsel %vm307, %v358, %v362
      %v365 = vshrl.u32 %v277, 16
      %v367 = vrot.slane %v365, 4
      %v368 = vshll.u32 %v277, 16
      %v370 = vrot.slane %v368, 5
      %v371 = vor.u32 %v367, %v370
      %v372 = vrot.slane %v371, 4
      %v374 = vshll.u32 %v301, 16
      %v376 = vrot.slane %v374, 5
      %v377 = vsel %vm307, %v372, %v376
      %v379 = vshrl.u32 %v278, 16
      %v381 = vrot.slane %v379, 4
      %v382 = vshll.u32 %v278, 16
      %v384 = vrot.slane %v382, 5
      %v385 = vor.u32 %v381, %v384
      %v386 = vrot.slane %v385, 4
      %v388 = vshll.u32 %v302, 16
      %v390 = vrot.slane %v388, 5
      %v391 = vsel %vm307, %v386, %v390
      %v393 = vshrl.u32 %v279, 16
      %v395 = vrot.slane %v393, 4
      %v396 = vshll.u32 %v279, 16
      %v398 = vrot.slane %v396, 5
      %v399 = vor.u32 %v395, %v398
      %v400 = vrot.slane %v399, 4
      %v402 = vshll.u32 %v303, 16
      %v404 = vrot.slane %v402, 5
      %v405 = vsel %vm307, %v400, %v404
      %v407 = vshrl.u32 %v280, 16
      %v409 = vrot.slane %v407, 4
      %v410 = vshll.u32 %v280, 16
      %v412 = vrot.slane %v410, 5
      %v413 = vor.u32 %v409, %v412
      %v414 = vrot.slane %v413, 4
      %v416 = vshll.u32 %v304, 16
      %v418 = vrot.slane %v416, 5
      %v419 = vsel %vm307, %v414, %v418
      %s420 = scalar_lea.vmem %s254, 64
      %v421 = vld [vmem:[%s420] sm:$0xf]
      %v422 = vld [vmem:[%s420 + $0x4] sm:$0xf]
      %v423 = vld [vmem:[%s420 + $0x8] sm:$0xf]
      %v424 = vld [vmem:[%s420 + $0xc] sm:$0xf]
      %v425 = vld [vmem:[%s420 + $0x10] sm:$0xf]
      %v426 = vld [vmem:[%s420 + $0x14] sm:$0xf]
      %v427 = vld [vmem:[%s420 + $0x18] sm:$0xf]
      %v428 = vld [vmem:[%s420 + $0x1c] sm:$0xf]
      %v429 = vld [vmem:[%s420 + $0x20] sm:$0xf]
      %v430 = vld [vmem:[%s420 + $0x24] sm:$0xf]
      %v431 = vld [vmem:[%s420 + $0x28] sm:$0xf]
      %v432 = vld [vmem:[%s420 + $0x2c] sm:$0xf]
      %v433 = vld [vmem:[%s420 + $0x30] sm:$0xf]
      %v434 = vld [vmem:[%s420 + $0x34] sm:$0xf]
      %v435 = vld [vmem:[%s420 + $0x38] sm:$0xf]
      %v436 = vld [vmem:[%s420 + $0x3c] sm:$0xf]
      %v437 = vunpack.c.l.b16 %v321
      %v438 = vunpack.c.l.b16 %v335
      %v439 = vunpack.c.l.b16 %v349
      %v440 = vunpack.c.l.b16 %v363
      %v441 = vunpack.c.l.b16 %v377
      %v442 = vunpack.c.l.b16 %v391
      %v443 = vunpack.c.l.b16 %v405
      %v444 = vunpack.c.l.b16 %v419
      %v445 = vpack.c.b16 %v438, %v437
      %v446 = vpack.c.b16 %v440, %v439
      %v447 = vpack.c.b16 %v442, %v441
      %v448 = vpack.c.b16 %v444, %v443
      %v469 = vunpack.c.l.b16 %v421
      %v470 = vunpack.c.l.b16 %v422
      %v471 = vunpack.c.l.b16 %v423
      %v472 = vunpack.c.l.b16 %v424
      %v473 = vunpack.c.l.b16 %v425
      %v474 = vunpack.c.l.b16 %v426
      %v475 = vunpack.c.l.b16 %v427
      %v476 = vunpack.c.l.b16 %v428
      %v477 = vunpack.c.l.b16 %v429
      %v478 = vunpack.c.l.b16 %v430
      %v479 = vunpack.c.l.b16 %v431
      %v480 = vunpack.c.l.b16 %v432
      %v481 = vunpack.c.l.b16 %v433
      %v482 = vunpack.c.l.b16 %v434
      %v483 = vunpack.c.l.b16 %v435
      %v484 = vunpack.c.l.b16 %v436
      %v485 = vpack.c.b16 %v470, %v469
      %v486 = vpack.c.b16 %v472, %v471
      %v487 = vpack.c.b16 %v474, %v473
      %v488 = vpack.c.b16 %v476, %v475
      %v489 = vpack.c.b16 %v478, %v477
      %v490 = vpack.c.b16 %v480, %v479
      %v491 = vpack.c.b16 %v482, %v481
      %v492 = vpack.c.b16 %v484, %v483
      %501 = vmatprep.subr.bf16.mxu0 0
      %502 = vmatpush1.bf16.msra.mxu0 %v485
      %503 = vmatprep.subr.bf16.mxu0 0
      %504 = vmatpush1.bf16.msra.mxu0 %v486
      %505 = vmatprep.subr.bf16.mxu0 0
      %506 = vmatpush1.bf16.msra.mxu0 %v487
      %507 = vmatprep.subr.bf16.mxu0 0
      %508 = vmatpush1.bf16.msra.mxu0 %v488
      %509 = vmatprep.subr.bf16.mxu0 0
      %510 = vmatpush1.bf16.msra.mxu0 %v489
      %511 = vmatprep.subr.bf16.mxu0 0
      %512 = vmatpush1.bf16.msra.mxu0 %v490
      %513 = vmatprep.subr.bf16.mxu0 0
      %514 = vmatpush1.bf16.msra.mxu0 %v491
      %515 = vmatprep.subr.bf16.mxu0 0
      %516 = vmatpush1.bf16.msra.mxu0 %v492
      %517 = vmatprep.subr.bf16.mxu0 0
      %518 = vmatpush1.bf16.msra.mxu0 0
      %519 = vmatprep.subr.bf16.mxu0 0
      %520 = vmatpush1.bf16.msra.mxu0 0
      %521 = vmatprep.subr.bf16.mxu0 0
      %522 = vmatpush1.bf16.msra.mxu0 0
      %523 = vmatprep.subr.bf16.mxu0 0
      %524 = vmatpush1.bf16.msra.mxu0 0
      %525 = vmatprep.subr.bf16.mxu0 0
      %526 = vmatpush1.bf16.msra.mxu0 0
      %527 = vmatprep.subr.bf16.mxu0 0
      %528 = vmatpush1.bf16.msra.mxu0 0
      %529 = vmatprep.subr.bf16.mxu0 0
      %530 = vmatpush1.bf16.msra.mxu0 0
      %531 = vmatprep.subr.bf16.mxu0 0
      %532 = vmatpush1.bf16.msra.mxu0 0
      %533 = vmatprep.mubr.bf16.mxu0 0
      %534 = vmatmul.mubr.bf16.gmra.mrb[0].mxu0 %v445
      %v535 = vpop.f32.mrb[0].mxu0
      %v536 = vadd.f32 0.0, %v535
      %v537 = vpop.f32.mrb[0].mxu0
      %v538 = vpop.f32.mrb[0].mxu0
      %v539 = vadd.f32 0.0, %v538
      %v540 = vpop.f32.mrb[0].mxu0
      %541 = vmatprep.mubr.bf16.mxu0 0
      %542 = vmatmul.mubr.bf16.gmra.mrb[0].mxu0 %v446
      %v543 = vpop.f32.mrb[0].mxu0
      %v544 = vadd.f32 0.0, %v543
      %v545 = vpop.f32.mrb[0].mxu0
      %v546 = vpop.f32.mrb[0].mxu0
      %v547 = vadd.f32 0.0, %v546
      %v548 = vpop.f32.mrb[0].mxu0
      %549 = vmatprep.mubr.bf16.mxu0 0
      %550 = vmatmul.mubr.bf16.gmra.mrb[0].mxu0 %v447
      %v551 = vpop.f32.mrb[0].mxu0
      %v552 = vadd.f32 0.0, %v551
      %v553 = vpop.f32.mrb[0].mxu0
      %v554 = vpop.f32.mrb[0].mxu0
      %v555 = vadd.f32 0.0, %v554
      %v556 = vpop.f32.mrb[0].mxu0
      %557 = vmatprep.mubr.bf16.mxu0 0
      %558 = vmatmul.mubr.bf16.gmra.mrb[0].mxu0 %v448
      %v559 = vpop.f32.mrb[0].mxu0
      %v560 = vadd.f32 0.0, %v559
      %v561 = vpop.f32.mrb[0].mxu0
      %v562 = vpop.f32.mrb[0].mxu0
      %v563 = vadd.f32 0.0, %v562
      %v564 = vpop.f32.mrb[0].mxu0
      %565 = vdwg.mxu0
      %v574 = vunpack.c.l.b16 %v273
      %v575 = vunpack.c.l.b16 %v274
      %v576 = vunpack.c.l.b16 %v275
      %v577 = vunpack.c.l.b16 %v276
      %v578 = vunpack.c.l.b16 %v277
      %v579 = vunpack.c.l.b16 %v278
      %v580 = vunpack.c.l.b16 %v279
      %v581 = vunpack.c.l.b16 %v280
      %v582 = vpack.c.b16 %v575, %v574
      %v583 = vpack.c.b16 %v577, %v576
      %v584 = vpack.c.b16 %v579, %v578
      %v585 = vpack.c.b16 %v581, %v580
      %v606 = vunpack.c.l.b16 %v281
      %v607 = vunpack.c.l.b16 %v282
      %v608 = vunpack.c.l.b16 %v283
      %v609 = vunpack.c.l.b16 %v284
      %v610 = vunpack.c.l.b16 %v285
      %v611 = vunpack.c.l.b16 %v286
      %v612 = vunpack.c.l.b16 %v287
      %v613 = vunpack.c.l.b16 %v288
      %v614 = vunpack.c.l.b16 %v289
      %v615 = vunpack.c.l.b16 %v290
      %v616 = vunpack.c.l.b16 %v291
      %v617 = vunpack.c.l.b16 %v292
      %v618 = vunpack.c.l.b16 %v293
      %v619 = vunpack.c.l.b16 %v294
      %v620 = vunpack.c.l.b16 %v295
      %v621 = vunpack.c.l.b16 %v296
      %v622 = vpack.c.b16 %v607, %v606
      %v623 = vpack.c.b16 %v609, %v608
      %v624 = vpack.c.b16 %v611, %v610
      %v625 = vpack.c.b16 %v613, %v612
      %v626 = vpack.c.b16 %v615, %v614
      %v627 = vpack.c.b16 %v617, %v616
      %v628 = vpack.c.b16 %v619, %v618
      %v629 = vpack.c.b16 %v621, %v620
      %638 = vmatprep.subr.bf16.mxu0 0
      %639 = vmatpush1.bf16.msra.mxu0 %v622
      %640 = vmatprep.subr.bf16.mxu0 0
      %641 = vmatpush1.bf16.msra.mxu0 %v623
      %642 = vmatprep.subr.bf16.mxu0 0
      %643 = vmatpush1.bf16.msra.mxu0 %v624
      %644 = vmatprep.subr.bf16.mxu0 0
      %645 = vmatpush1.bf16.msra.mxu0 %v625
      %646 = vmatprep.subr.bf16.mxu0 0
      %647 = vmatpush1.bf16.msra.mxu0 %v626
      %648 = vmatprep.subr.bf16.mxu0 0
      %649 = vmatpush1.bf16.msra.mxu0 %v627
      %650 = vmatprep.subr.bf16.mxu0 0
      %651 = vmatpush1.bf16.msra.mxu0 %v628
      %652 = vmatprep.subr.bf16.mxu0 0
      %653 = vmatpush1.bf16.msra.mxu0 %v629
      %654 = vmatprep.subr.bf16.mxu0 0
      %655 = vmatpush1.bf16.msra.mxu0 0
      %656 = vmatprep.subr.bf16.mxu0 0
      %657 = vmatpush1.bf16.msra.mxu0 0
      %658 = vmatprep.subr.bf16.mxu0 0
      %659 = vmatpush1.bf16.msra.mxu0 0
      %660 = vmatprep.subr.bf16.mxu0 0
      %661 = vmatpush1.bf16.msra.mxu0 0
      %662 = vmatprep.subr.bf16.mxu0 0
      %663 = vmatpush1.bf16.msra.mxu0 0
      %664 = vmatprep.subr.bf16.mxu0 0
      %665 = vmatpush1.bf16.msra.mxu0 0
      %666 = vmatprep.subr.bf16.mxu0 0
      %667 = vmatpush1.bf16.msra.mxu0 0
      %668 = vmatprep.subr.bf16.mxu0 0
      %669 = vmatpush1.bf16.msra.mxu0 0
      %670 = vmatprep.mubr.bf16.mxu0 0
      %671 = vmatmul.mubr.bf16.gmra.mrb[0].mxu0 %v582
      %v672 = vpop.f32.mrb[0].mxu0
      %v673 = vadd.f32 %v536, %v672
      %v674 = vpop.f32.mrb[0].mxu0
      %v675 = vpop.f32.mrb[0].mxu0
      %v676 = vadd.f32 %v539, %v675
      %v677 = vpop.f32.mrb[0].mxu0
      %678 = vmatprep.mubr.bf16.mxu0 0
      %679 = vmatmul.mubr.bf16.gmra.mrb[0].mxu0 %v583
      %v680 = vpop.f32.mrb[0].mxu0
      %v681 = vadd.f32 %v544, %v680
      %v682 = vpop.f32.mrb[0].mxu0
      %v683 = vpop.f32.mrb[0].mxu0
      %v684 = vadd.f32 %v547, %v683
      %v685 = vpop.f32.mrb[0].mxu0
      %686 = vmatprep.mubr.bf16.mxu0 0
      %687 = vmatmul.mubr.bf16.gmra.mrb[0].mxu0 %v584
      %v688 = vpop.f32.mrb[0].mxu0
      %v689 = vadd.f32 %v552, %v688
      %v690 = vpop.f32.mrb[0].mxu0
      %v691 = vpop.f32.mrb[0].mxu0
      %v692 = vadd.f32 %v555, %v691
      %v693 = vpop.f32.mrb[0].mxu0
      %694 = vmatprep.mubr.bf16.mxu0 0
      %695 = vmatmul.mubr.bf16.gmra.mrb[0].mxu0 %v585
      %v696 = vpop.f32.mrb[0].mxu0
      %v697 = vadd.f32 %v560, %v696
      %v698 = vpop.f32.mrb[0].mxu0
      %v699 = vpop.f32.mrb[0].mxu0
      %v700 = vadd.f32 %v563, %v699
      %v701 = vpop.f32.mrb[0].mxu0
      %702 = vdwg.mxu0
      %v703 = vld [vmem:[%s250] sm:$0xe]
      %v704 = vld [vmem:[%s250 + $0x8] sm:$0xe]
      %v705 = vld [vmem:[%s250 + $0x10] sm:$0xe]
      %v706 = vld [vmem:[%s250 + $0x18] sm:$0xe]
      %v707 = vld [vmem:[%s250 + $0x20] sm:$0xe]
      %v708 = vld [vmem:[%s250 + $0x28] sm:$0xe]
      %v709 = vld [vmem:[%s250 + $0x30] sm:$0xe]
      %v710 = vld [vmem:[%s250 + $0x38] sm:$0xe]
      %vm727 = vcmask 1042432
      %vm728 = vcmask 1046532
      %vm729 = vmor %vm727, %vm728
      %v730 = vrot.slane %v703, 5
      %v731 = vrot.slane %v730, 4
      %v732 = vrot.slane %v297, 5
      %v733 = vsel %vm729, %v731, %v732
      %v734 = vrot.slane %v704, 5
      %v735 = vrot.slane %v734, 4
      %v736 = vrot.slane %v298, 5
      %v737 = vsel %vm729, %v735, %v736
      %v738 = vrot.slane %v705, 5
      %v739 = vrot.slane %v738, 4
      %v740 = vrot.slane %v299, 5
      %v741 = vsel %vm729, %v739, %v740
      %v742 = vrot.slane %v706, 5
      %v743 = vrot.slane %v742, 4
      %v744 = vrot.slane %v300, 5
      %v745 = vsel %vm729, %v743, %v744
      %v746 = vrot.slane %v707, 5
      %v747 = vrot.slane %v746, 4
      %v748 = vrot.slane %v301, 5
      %v749 = vsel %vm729, %v747, %v748
      %v750 = vrot.slane %v708, 5
      %v751 = vrot.slane %v750, 4
      %v752 = vrot.slane %v302, 5
      %v753 = vsel %vm729, %v751, %v752
      %v754 = vrot.slane %v709, 5
      %v755 = vrot.slane %v754, 4
      %v756 = vrot.slane %v303, 5
      %v757 = vsel %vm729, %v755, %v756
      %v758 = vrot.slane %v710, 5
      %v759 = vrot.slane %v758, 4
      %v760 = vrot.slane %v304, 5
      %v761 = vsel %vm729, %v759, %v760
      %s762 = scalar_lea.vmem %s254, 128
      %v763 = vld [vmem:[%s762] sm:$0xf]
      %v764 = vld [vmem:[%s762 + $0x4] sm:$0xf]
      %v765 = vld [vmem:[%s762 + $0x8] sm:$0xf]
      %v766 = vld [vmem:[%s762 + $0xc] sm:$0xf]
      %v767 = vld [vmem:[%s762 + $0x10] sm:$0xf]
      %v768 = vld [vmem:[%s762 + $0x14] sm:$0xf]
      %v769 = vld [vmem:[%s762 + $0x18] sm:$0xf]
      %v770 = vld [vmem:[%s762 + $0x1c] sm:$0xf]
      %v771 = vld [vmem:[%s762 + $0x20] sm:$0xf]
      %v772 = vld [vmem:[%s762 + $0x24] sm:$0xf]
      %v773 = vld [vmem:[%s762 + $0x28] sm:$0xf]
      %v774 = vld [vmem:[%s762 + $0x2c] sm:$0xf]
      %v775 = vld [vmem:[%s762 + $0x30] sm:$0xf]
      %v776 = vld [vmem:[%s762 + $0x34] sm:$0xf]
      %v777 = vld [vmem:[%s762 + $0x38] sm:$0xf]
      %v778 = vld [vmem:[%s762 + $0x3c] sm:$0xf]
      %v779 = vunpack.c.l.b16 %v733
      %v780 = vunpack.c.l.b16 %v737
      %v781 = vunpack.c.l.b16 %v741
      %v782 = vunpack.c.l.b16 %v745
      %v783 = vunpack.c.l.b16 %v749
      %v784 = vunpack.c.l.b16 %v753
      %v785 = vunpack.c.l.b16 %v757
      %v786 = vunpack.c.l.b16 %v761
      %v787 = vpack.c.b16 %v780, %v779
      %v788 = vpack.c.b16 %v782, %v781
      %v789 = vpack.c.b16 %v784, %v783
      %v790 = vpack.c.b16 %v786, %v785
      %v811 = vunpack.c.l.b16 %v763
      %v812 = vunpack.c.l.b16 %v764
      %v813 = vunpack.c.l.b16 %v765
      %v814 = vunpack.c.l.b16 %v766
      %v815 = vunpack.c.l.b16 %v767
      %v816 = vunpack.c.l.b16 %v768
      %v817 = vunpack.c.l.b16 %v769
      %v818 = vunpack.c.l.b16 %v770
      %v819 = vunpack.c.l.b16 %v771
      %v820 = vunpack.c.l.b16 %v772
      %v821 = vunpack.c.l.b16 %v773
      %v822 = vunpack.c.l.b16 %v774
      %v823 = vunpack.c.l.b16 %v775
      %v824 = vunpack.c.l.b16 %v776
      %v825 = vunpack.c.l.b16 %v777
      %v826 = vunpack.c.l.b16 %v778
      %v827 = vpack.c.b16 %v812, %v811
      %v828 = vpack.c.b16 %v814, %v813
      %v829 = vpack.c.b16 %v816, %v815
      %v830 = vpack.c.b16 %v818, %v817
      %v831 = vpack.c.b16 %v820, %v819
      %v832 = vpack.c.b16 %v822, %v821
      %v833 = vpack.c.b16 %v824, %v823
      %v834 = vpack.c.b16 %v826, %v825
      %843 = vmatprep.subr.bf16.mxu0 0
      %844 = vmatpush1.bf16.msra.mxu0 %v827
      %845 = vmatprep.subr.bf16.mxu0 0
      %846 = vmatpush1.bf16.msra.mxu0 %v828
      %847 = vmatprep.subr.bf16.mxu0 0
      %848 = vmatpush1.bf16.msra.mxu0 %v829
      %849 = vmatprep.subr.bf16.mxu0 0
      %850 = vmatpush1.bf16.msra.mxu0 %v830
      %851 = vmatprep.subr.bf16.mxu0 0
      %852 = vmatpush1.bf16.msra.mxu0 %v831
      %853 = vmatprep.subr.bf16.mxu0 0
      %854 = vmatpush1.bf16.msra.mxu0 %v832
      %855 = vmatprep.subr.bf16.mxu0 0
      %856 = vmatpush1.bf16.msra.mxu0 %v833
      %857 = vmatprep.subr.bf16.mxu0 0
      %858 = vmatpush1.bf16.msra.mxu0 %v834
      %859 = vmatprep.subr.bf16.mxu0 0
      %860 = vmatpush1.bf16.msra.mxu0 0
      %861 = vmatprep.subr.bf16.mxu0 0
      %862 = vmatpush1.bf16.msra.mxu0 0
      %863 = vmatprep.subr.bf16.mxu0 0
      %864 = vmatpush1.bf16.msra.mxu0 0
      %865 = vmatprep.subr.bf16.mxu0 0
      %866 = vmatpush1.bf16.msra.mxu0 0
      %867 = vmatprep.subr.bf16.mxu0 0
      %868 = vmatpush1.bf16.msra.mxu0 0
      %869 = vmatprep.subr.bf16.mxu0 0
      %870 = vmatpush1.bf16.msra.mxu0 0
      %871 = vmatprep.subr.bf16.mxu0 0
      %872 = vmatpush1.bf16.msra.mxu0 0
      %873 = vmatprep.subr.bf16.mxu0 0
      %874 = vmatpush1.bf16.msra.mxu0 0
      %875 = vmatprep.mubr.bf16.mxu0 0
      %876 = vmatmul.mubr.bf16.gmra.mrb[0].mxu0 %v787
      %v877 = vpop.f32.mrb[0].mxu0
      %v878 = vadd.f32 0.0, %v877
      %v879 = vpop.f32.mrb[0].mxu0
      %v880 = vpop.f32.mrb[0].mxu0
      %v881 = vadd.f32 0.0, %v880
      %v882 = vpop.f32.mrb[0].mxu0
      %883 = vmatprep.mubr.bf16.mxu0 0
      %884 = vmatmul.mubr.bf16.gmra.mrb[0].mxu0 %v788
      %v885 = vpop.f32.mrb[0].mxu0
      %v886 = vadd.f32 0.0, %v885
      %v887 = vpop.f32.mrb[0].mxu0
      %v888 = vpop.f32.mrb[0].mxu0
      %v889 = vadd.f32 0.0, %v888
      %v890 = vpop.f32.mrb[0].mxu0
      %891 = vmatprep.mubr.bf16.mxu0 0
      %892 = vmatmul.mubr.bf16.gmra.mrb[0].mxu0 %v789
      %v893 = vpop.f32.mrb[0].mxu0
      %v894 = vadd.f32 0.0, %v893
      %v895 = vpop.f32.mrb[0].mxu0
      %v896 = vpop.f32.mrb[0].mxu0
      %v897 = vadd.f32 0.0, %v896
      %v898 = vpop.f32.mrb[0].mxu0
      %899 = vmatprep.mubr.bf16.mxu0 0
      %900 = vmatmul.mubr.bf16.gmra.mrb[0].mxu0 %v790
      %v901 = vpop.f32.mrb[0].mxu0
      %v902 = vadd.f32 0.0, %v901
      %v903 = vpop.f32.mrb[0].mxu0
      %v904 = vpop.f32.mrb[0].mxu0
      %v905 = vadd.f32 0.0, %v904
      %v906 = vpop.f32.mrb[0].mxu0
      %907 = vdwg.mxu0
      %v908 = vadd.f32 %v673, %v878
      %v909 = vadd.f32 %v676, %v881
      %v910 = vadd.f32 %v681, %v886
      %v911 = vadd.f32 %v684, %v889
      %v912 = vadd.f32 %v689, %v894
      %v913 = vadd.f32 %v692, %v897
      %v914 = vadd.f32 %v697, %v902
      %v915 = vadd.f32 %v700, %v905
      %s916 = scalar_lea.vmem %s250, 8
      %v917 = vld [vmem:[%s916] sm:$0xf]
      %v918 = vld [vmem:[%s916 + $0x8] sm:$0xf]
      %v919 = vld [vmem:[%s916 + $0x10] sm:$0xf]
      %v920 = vld [vmem:[%s916 + $0x18] sm:$0xf]
      %v921 = vld [vmem:[%s916 + $0x20] sm:$0xf]
      %v922 = vld [vmem:[%s916 + $0x28] sm:$0xf]
      %v923 = vld [vmem:[%s916 + $0x30] sm:$0xf]
      %v924 = vld [vmem:[%s916 + $0x38] sm:$0xf]
      %s925 = scalar_lea.vmem %s254, 192
      %v926 = vld [vmem:[%s925] sm:$0xf]
      %v927 = vld [vmem:[%s925 + $0x4] sm:$0xf]
      %v928 = vld [vmem:[%s925 + $0x8] sm:$0xf]
      %v929 = vld [vmem:[%s925 + $0xc] sm:$0xf]
      %v930 = vld [vmem:[%s925 + $0x10] sm:$0xf]
      %v931 = vld [vmem:[%s925 + $0x14] sm:$0xf]
      %v932 = vld [vmem:[%s925 + $0x18] sm:$0xf]
      %v933 = vld [vmem:[%s925 + $0x1c] sm:$0xf]
      %v934 = vld [vmem:[%s925 + $0x20] sm:$0xf]
      %v935 = vld [vmem:[%s925 + $0x24] sm:$0xf]
      %v936 = vld [vmem:[%s925 + $0x28] sm:$0xf]
      %v937 = vld [vmem:[%s925 + $0x2c] sm:$0xf]
      %v938 = vld [vmem:[%s925 + $0x30] sm:$0xf]
      %v939 = vld [vmem:[%s925 + $0x34] sm:$0xf]
      %v940 = vld [vmem:[%s925 + $0x38] sm:$0xf]
      %v941 = vld [vmem:[%s925 + $0x3c] sm:$0xf]
      %v950 = vunpack.c.l.b16 %v917
      %v951 = vunpack.c.l.b16 %v918
      %v952 = vunpack.c.l.b16 %v919
      %v953 = vunpack.c.l.b16 %v920
      %v954 = vunpack.c.l.b16 %v921
      %v955 = vunpack.c.l.b16 %v922
      %v956 = vunpack.c.l.b16 %v923
      %v957 = vunpack.c.l.b16 %v924
      %v958 = vpack.c.b16 %v951, %v950
      %v959 = vpack.c.b16 %v953, %v952
      %v960 = vpack.c.b16 %v955, %v954
      %v961 = vpack.c.b16 %v957, %v956
      %v982 = vunpack.c.l.b16 %v926
      %v983 = vunpack.c.l.b16 %v927
      %v984 = vunpack.c.l.b16 %v928
      %v985 = vunpack.c.l.b16 %v929
      %v986 = vunpack.c.l.b16 %v930
      %v987 = vunpack.c.l.b16 %v931
      %v988 = vunpack.c.l.b16 %v932
      %v989 = vunpack.c.l.b16 %v933
      %v990 = vunpack.c.l.b16 %v934
      %v991 = vunpack.c.l.b16 %v935
      %v992 = vunpack.c.l.b16 %v936
      %v993 = vunpack.c.l.b16 %v937
      %v994 = vunpack.c.l.b16 %v938
      %v995 = vunpack.c.l.b16 %v939
      %v996 = vunpack.c.l.b16 %v940
      %v997 = vunpack.c.l.b16 %v941
      %v998 = vpack.c.b16 %v983, %v982
      %v999 = vpack.c.b16 %v985, %v984
      %v1000 = vpack.c.b16 %v987, %v986
      %v1001 = vpack.c.b16 %v989, %v988
      %v1002 = vpack.c.b16 %v991, %v990
      %v1003 = vpack.c.b16 %v993, %v992
      %v1004 = vpack.c.b16 %v995, %v994
      %v1005 = vpack.c.b16 %v997, %v996
      %1014 = vmatprep.subr.bf16.mxu0 0
      %1015 = vmatpush1.bf16.msra.mxu0 %v998
      %1016 = vmatprep.subr.bf16.mxu0 0
      %1017 = vmatpush1.bf16.msra.mxu0 %v999
      %1018 = vmatprep.subr.bf16.mxu0 0
      %1019 = vmatpush1.bf16.msra.mxu0 %v1000
      %1020 = vmatprep.subr.bf16.mxu0 0
      %1021 = vmatpush1.bf16.msra.mxu0 %v1001
      %1022 = vmatprep.subr.bf16.mxu0 0
      %1023 = vmatpush1.bf16.msra.mxu0 %v1002
      %1024 = vmatprep.subr.bf16.mxu0 0
      %1025 = vmatpush1.bf16.msra.mxu0 %v1003
      %1026 = vmatprep.subr.bf16.mxu0 0
      %1027 = vmatpush1.bf16.msra.mxu0 %v1004
      %1028 = vmatprep.subr.bf16.mxu0 0
      %1029 = vmatpush1.bf16.msra.mxu0 %v1005
      %1030 = vmatprep.subr.bf16.mxu0 0
      %1031 = vmatpush1.bf16.msra.mxu0 0
      %1032 = vmatprep.subr.bf16.mxu0 0
      %1033 = vmatpush1.bf16.msra.mxu0 0
      %1034 = vmatprep.subr.bf16.mxu0 0
      %1035 = vmatpush1.bf16.msra.mxu0 0
      %1036 = vmatprep.subr.bf16.mxu0 0
      %1037 = vmatpush1.bf16.msra.mxu0 0
      %1038 = vmatprep.subr.bf16.mxu0 0
      %1039 = vmatpush1.bf16.msra.mxu0 0
      %1040 = vmatprep.subr.bf16.mxu0 0
      %1041 = vmatpush1.bf16.msra.mxu0 0
      %1042 = vmatprep.subr.bf16.mxu0 0
      %1043 = vmatpush1.bf16.msra.mxu0 0
      %1044 = vmatprep.subr.bf16.mxu0 0
      %1045 = vmatpush1.bf16.msra.mxu0 0
      %1046 = vmatprep.mubr.bf16.mxu0 0
      %1047 = vmatmul.mubr.bf16.gmra.mrb[0].mxu0 %v958
      %v1048 = vpop.f32.mrb[0].mxu0
      %v1049 = vadd.f32 0.0, %v1048
      %v1050 = vpop.f32.mrb[0].mxu0
      %v1051 = vpop.f32.mrb[0].mxu0
      %v1052 = vadd.f32 0.0, %v1051
      %v1053 = vpop.f32.mrb[0].mxu0
      %1054 = vmatprep.mubr.bf16.mxu0 0
      %1055 = vmatmul.mubr.bf16.gmra.mrb[0].mxu0 %v959
      %v1056 = vpop.f32.mrb[0].mxu0
      %v1057 = vadd.f32 0.0, %v1056
      %v1058 = vpop.f32.mrb[0].mxu0
      %v1059 = vpop.f32.mrb[0].mxu0
      %v1060 = vadd.f32 0.0, %v1059
      %v1061 = vpop.f32.mrb[0].mxu0
      %1062 = vmatprep.mubr.bf16.mxu0 0
      %1063 = vmatmul.mubr.bf16.gmra.mrb[0].mxu0 %v960
      %v1064 = vpop.f32.mrb[0].mxu0
      %v1065 = vadd.f32 0.0, %v1064
      %v1066 = vpop.f32.mrb[0].mxu0
      %v1067 = vpop.f32.mrb[0].mxu0
      %v1068 = vadd.f32 0.0, %v1067
      %v1069 = vpop.f32.mrb[0].mxu0
      %1070 = vmatprep.mubr.bf16.mxu0 0
      %1071 = vmatmul.mubr.bf16.gmra.mrb[0].mxu0 %v961
      %v1072 = vpop.f32.mrb[0].mxu0
      %v1073 = vadd.f32 0.0, %v1072
      %v1074 = vpop.f32.mrb[0].mxu0
      %v1075 = vpop.f32.mrb[0].mxu0
      %v1076 = vadd.f32 0.0, %v1075
      %v1077 = vpop.f32.mrb[0].mxu0
      %1078 = vdwg.mxu0
      %v1079 = vadd.f32 %v908, %v1049
      %v1080 = vadd.f32 %v909, %v1052
      %v1081 = vadd.f32 %v910, %v1057
      %v1082 = vadd.f32 %v911, %v1060
      %v1083 = vadd.f32 %v912, %v1065
      %v1084 = vadd.f32 %v913, %v1068
      %v1085 = vadd.f32 %v914, %v1073
      %v1086 = vadd.f32 %v915, %v1076
      %v1087 = vld [vmem:[%s916] sm:$0xf]
      %v1088 = vld [vmem:[%s916 + $0x4] sm:$0x1]
      %v1089 = vld [vmem:[%s916 + $0x8] sm:$0xf]
      %v1090 = vld [vmem:[%s916 + $0xc] sm:$0x1]
      %v1091 = vld [vmem:[%s916 + $0x10] sm:$0xf]
      %v1092 = vld [vmem:[%s916 + $0x14] sm:$0x1]
      %v1093 = vld [vmem:[%s916 + $0x18] sm:$0xf]
      %v1094 = vld [vmem:[%s916 + $0x1c] sm:$0x1]
      %v1095 = vld [vmem:[%s916 + $0x20] sm:$0xf]
      %v1096 = vld [vmem:[%s916 + $0x24] sm:$0x1]
      %v1097 = vld [vmem:[%s916 + $0x28] sm:$0xf]
      %v1098 = vld [vmem:[%s916 + $0x2c] sm:$0x1]
      %v1099 = vld [vmem:[%s916 + $0x30] sm:$0xf]
      %v1100 = vld [vmem:[%s916 + $0x34] sm:$0x1]
      %v1101 = vld [vmem:[%s916 + $0x38] sm:$0xf]
      %v1102 = vld [vmem:[%s916 + $0x3c] sm:$0x1]
      %v1104 = vshrl.u32 %v1087, 16
      %v1106 = vrot.slane %v1104, 4
      %v1107 = vshll.u32 %v1087, 16
      %v1109 = vrot.slane %v1107, 5
      %v1110 = vor.u32 %v1106, %v1109
      %v1111 = vrot.slane %v1110, 4
      %v1113 = vshll.u32 %v1088, 16
      %v1115 = vrot.slane %v1113, 5
      %v1116 = vsel %vm307, %v1111, %v1115
      %v1118 = vshrl.u32 %v1089, 16
      %v1120 = vrot.slane %v1118, 4
      %v1121 = vshll.u32 %v1089, 16
      %v1123 = vrot.slane %v1121, 5
      %v1124 = vor.u32 %v1120, %v1123
      %v1125 = vrot.slane %v1124, 4
      %v1127 = vshll.u32 %v1090, 16
      %v1129 = vrot.slane %v1127, 5
      %v1130 = vsel %vm307, %v1125, %v1129
      %v1132 = vshrl.u32 %v1091, 16
      %v1134 = vrot.slane %v1132, 4
      %v1135 = vshll.u32 %v1091, 16
      %v1137 = vrot.slane %v1135, 5
      %v1138 = vor.u32 %v1134, %v1137
      %v1139 = vrot.slane %v1138, 4
      %v1141 = vshll.u32 %v1092, 16
      %v1143 = vrot.slane %v1141, 5
      %v1144 = vsel %vm307, %v1139, %v1143
      %v1146 = vshrl.u32 %v1093, 16
      %v1148 = vrot.slane %v1146, 4
      %v1149 = vshll.u32 %v1093, 16
      %v1151 = vrot.slane %v1149, 5
      %v1152 = vor.u32 %v1148, %v1151
      %v1153 = vrot.slane %v1152, 4
      %v1155 = vshll.u32 %v1094, 16
      %v1157 = vrot.slane %v1155, 5
      %v1158 = vsel %vm307, %v1153, %v1157
      %v1160 = vshrl.u32 %v1095, 16
      %v1162 = vrot.slane %v1160, 4
      %v1163 = vshll.u32 %v1095, 16
      %v1165 = vrot.slane %v1163, 5
      %v1166 = vor.u32 %v1162, %v1165
      %v1167 = vrot.slane %v1166, 4
      %v1169 = vshll.u32 %v1096, 16
      %v1171 = vrot.slane %v1169, 5
      %v1172 = vsel %vm307, %v1167, %v1171
      %v1174 = vshrl.u32 %v1097, 16
      %v1176 = vrot.slane %v1174, 4
      %v1177 = vshll.u32 %v1097, 16
      %v1179 = vrot.slane %v1177, 5
      %v1180 = vor.u32 %v1176, %v1179
      %v1181 = vrot.slane %v1180, 4
      %v1183 = vshll.u32 %v1098, 16
      %v1185 = vrot.slane %v1183, 5
      %v1186 = vsel %vm307, %v1181, %v1185
      %v1188 = vshrl.u32 %v1099, 16
      %v1190 = vrot.slane %v1188, 4
      %v1191 = vshll.u32 %v1099, 16
      %v1193 = vrot.slane %v1191, 5
      %v1194 = vor.u32 %v1190, %v1193
      %v1195 = vrot.slane %v1194, 4
      %v1197 = vshll.u32 %v1100, 16
      %v1199 = vrot.slane %v1197, 5
      %v1200 = vsel %vm307, %v1195, %v1199
      %v1202 = vshrl.u32 %v1101, 16
      %v1204 = vrot.slane %v1202, 4
      %v1205 = vshll.u32 %v1101, 16
      %v1207 = vrot.slane %v1205, 5
      %v1208 = vor.u32 %v1204, %v1207
      %v1209 = vrot.slane %v1208, 4
      %v1211 = vshll.u32 %v1102, 16
      %v1213 = vrot.slane %v1211, 5
      %v1214 = vsel %vm307, %v1209, %v1213
      %s1215 = scalar_lea.vmem %s254, 256
      %v1216 = vld [vmem:[%s1215] sm:$0xf]
      %v1217 = vld [vmem:[%s1215 + $0x4] sm:$0xf]
      %v1218 = vld [vmem:[%s1215 + $0x8] sm:$0xf]
      %v1219 = vld [vmem:[%s1215 + $0xc] sm:$0xf]
      %v1220 = vld [vmem:[%s1215 + $0x10] sm:$0xf]
      %v1221 = vld [vmem:[%s1215 + $0x14] sm:$0xf]
      %v1222 = vld [vmem:[%s1215 + $0x18] sm:$0xf]
      %v1223 = vld [vmem:[%s1215 + $0x1c] sm:$0xf]
      %v1224 = vld [vmem:[%s1215 + $0x20] sm:$0xf]
      %v1225 = vld [vmem:[%s1215 + $0x24] sm:$0xf]
      %v1226 = vld [vmem:[%s1215 + $0x28] sm:$0xf]
      %v1227 = vld [vmem:[%s1215 + $0x2c] sm:$0xf]
      %v1228 = vld [vmem:[%s1215 + $0x30] sm:$0xf]
      %v1229 = vld [vmem:[%s1215 + $0x34] sm:$0xf]
      %v1230 = vld [vmem:[%s1215 + $0x38] sm:$0xf]
      %v1231 = vld [vmem:[%s1215 + $0x3c] sm:$0xf]
      %v1232 = vunpack.c.l.b16 %v1116
      %v1233 = vunpack.c.l.b16 %v1130
      %v1234 = vunpack.c.l.b16 %v1144
      %v1235 = vunpack.c.l.b16 %v1158
      %v1236 = vunpack.c.l.b16 %v1172
      %v1237 = vunpack.c.l.b16 %v1186
      %v1238 = vunpack.c.l.b16 %v1200
      %v1239 = vunpack.c.l.b16 %v1214
      %v1240 = vpack.c.b16 %v1233, %v1232
      %v1241 = vpack.c.b16 %v1235, %v1234
      %v1242 = vpack.c.b16 %v1237, %v1236
      %v1243 = vpack.c.b16 %v1239, %v1238
      %v1264 = vunpack.c.l.b16 %v1216
      %v1265 = vunpack.c.l.b16 %v1217
      %v1266 = vunpack.c.l.b16 %v1218
      %v1267 = vunpack.c.l.b16 %v1219
      %v1268 = vunpack.c.l.b16 %v1220
      %v1269 = vunpack.c.l.b16 %v1221
      %v1270 = vunpack.c.l.b16 %v1222
      %v1271 = vunpack.c.l.b16 %v1223
      %v1272 = vunpack.c.l.b16 %v1224
      %v1273 = vunpack.c.l.b16 %v1225
      %v1274 = vunpack.c.l.b16 %v1226
      %v1275 = vunpack.c.l.b16 %v1227
      %v1276 = vunpack.c.l.b16 %v1228
      %v1277 = vunpack.c.l.b16 %v1229
      %v1278 = vunpack.c.l.b16 %v1230
      %v1279 = vunpack.c.l.b16 %v1231
      %v1280 = vpack.c.b16 %v1265, %v1264
      %v1281 = vpack.c.b16 %v1267, %v1266
      %v1282 = vpack.c.b16 %v1269, %v1268
      %v1283 = vpack.c.b16 %v1271, %v1270
      %v1284 = vpack.c.b16 %v1273, %v1272
      %v1285 = vpack.c.b16 %v1275, %v1274
      %v1286 = vpack.c.b16 %v1277, %v1276
      %v1287 = vpack.c.b16 %v1279, %v1278
      %1296 = vmatprep.subr.bf16.mxu0 0
      %1297 = vmatpush1.bf16.msra.mxu0 %v1280
      %1298 = vmatprep.subr.bf16.mxu0 0
      %1299 = vmatpush1.bf16.msra.mxu0 %v1281
      %1300 = vmatprep.subr.bf16.mxu0 0
      %1301 = vmatpush1.bf16.msra.mxu0 %v1282
      %1302 = vmatprep.subr.bf16.mxu0 0
      %1303 = vmatpush1.bf16.msra.mxu0 %v1283
      %1304 = vmatprep.subr.bf16.mxu0 0
      %1305 = vmatpush1.bf16.msra.mxu0 %v1284
      %1306 = vmatprep.subr.bf16.mxu0 0
      %1307 = vmatpush1.bf16.msra.mxu0 %v1285
      %1308 = vmatprep.subr.bf16.mxu0 0
      %1309 = vmatpush1.bf16.msra.mxu0 %v1286
      %1310 = vmatprep.subr.bf16.mxu0 0
      %1311 = vmatpush1.bf16.msra.mxu0 %v1287
      %1312 = vmatprep.subr.bf16.mxu0 0
      %1313 = vmatpush1.bf16.msra.mxu0 0
      %1314 = vmatprep.subr.bf16.mxu0 0
      %1315 = vmatpush1.bf16.msra.mxu0 0
      %1316 = vmatprep.subr.bf16.mxu0 0
      %1317 = vmatpush1.bf16.msra.mxu0 0
      %1318 = vmatprep.subr.bf16.mxu0 0
      %1319 = vmatpush1.bf16.msra.mxu0 0
      %1320 = vmatprep.subr.bf16.mxu0 0
      %1321 = vmatpush1.bf16.msra.mxu0 0
      %1322 = vmatprep.subr.bf16.mxu0 0
      %1323 = vmatpush1.bf16.msra.mxu0 0
      %1324 = vmatprep.subr.bf16.mxu0 0
      %1325 = vmatpush1.bf16.msra.mxu0 0
      %1326 = vmatprep.subr.bf16.mxu0 0
      %1327 = vmatpush1.bf16.msra.mxu0 0
      %1328 = vmatprep.mubr.bf16.mxu0 0
      %1329 = vmatmul.mubr.bf16.gmra.mrb[0].mxu0 %v1240
      %v1330 = vpop.f32.mrb[0].mxu0
      %v1331 = vadd.f32 0.0, %v1330
      %v1332 = vpop.f32.mrb[0].mxu0
      %v1333 = vpop.f32.mrb[0].mxu0
      %v1334 = vadd.f32 0.0, %v1333
      %v1335 = vpop.f32.mrb[0].mxu0
      %1336 = vmatprep.mubr.bf16.mxu0 0
      %1337 = vmatmul.mubr.bf16.gmra.mrb[0].mxu0 %v1241
      %v1338 = vpop.f32.mrb[0].mxu0
      %v1339 = vadd.f32 0.0, %v1338
      %v1340 = vpop.f32.mrb[0].mxu0
      %v1341 = vpop.f32.mrb[0].mxu0
      %v1342 = vadd.f32 0.0, %v1341
      %v1343 = vpop.f32.mrb[0].mxu0
      %1344 = vmatprep.mubr.bf16.mxu0 0
      %1345 = vmatmul.mubr.bf16.gmra.mrb[0].mxu0 %v1242
      %v1346 = vpop.f32.mrb[0].mxu0
      %v1347 = vadd.f32 0.0, %v1346
      %v1348 = vpop.f32.mrb[0].mxu0
      %v1349 = vpop.f32.mrb[0].mxu0
      %v1350 = vadd.f32 0.0, %v1349
      %v1351 = vpop.f32.mrb[0].mxu0
      %1352 = vmatprep.mubr.bf16.mxu0 0
      %1353 = vmatmul.mubr.bf16.gmra.mrb[0].mxu0 %v1243
      %v1354 = vpop.f32.mrb[0].mxu0
      %v1355 = vadd.f32 0.0, %v1354
      %v1356 = vpop.f32.mrb[0].mxu0
      %v1357 = vpop.f32.mrb[0].mxu0
      %v1358 = vadd.f32 0.0, %v1357
      %v1359 = vpop.f32.mrb[0].mxu0
      %1360 = vdwg.mxu0
      %v1361 = vadd.f32 %v1079, %v1331
      %v1362 = vadd.f32 %v1080, %v1334
      %v1363 = vadd.f32 %v1081, %v1339
      %v1364 = vadd.f32 %v1082, %v1342
      %v1365 = vadd.f32 %v1083, %v1347
      %v1366 = vadd.f32 %v1084, %v1350
      %v1367 = vadd.f32 %v1085, %v1355
      %v1368 = vadd.f32 %v1086, %v1358
      %v1369 = vld [vmem:[%s916] sm:$0xe]
      %v1370 = vld [vmem:[%s916 + $0x8] sm:$0xe]
      %v1371 = vld [vmem:[%s916 + $0x10] sm:$0xe]
      %v1372 = vld [vmem:[%s916 + $0x18] sm:$0xe]
      %v1373 = vld [vmem:[%s916 + $0x20] sm:$0xe]
      %v1374 = vld [vmem:[%s916 + $0x28] sm:$0xe]
      %v1375 = vld [vmem:[%s916 + $0x30] sm:$0xe]
      %v1376 = vld [vmem:[%s916 + $0x38] sm:$0xe]
      %v1393 = vrot.slane %v1369, 5
      %v1394 = vrot.slane %v1393, 4
      %v1395 = vrot.slane %v1088, 5
      %v1396 = vsel %vm729, %v1394, %v1395
      %v1397 = vrot.slane %v1370, 5
      %v1398 = vrot.slane %v1397, 4
      %v1399 = vrot.slane %v1090, 5
      %v1400 = vsel %vm729, %v1398, %v1399
      %v1401 = vrot.slane %v1371, 5
      %v1402 = vrot.slane %v1401, 4
      %v1403 = vrot.slane %v1092, 5
      %v1404 = vsel %vm729, %v1402, %v1403
      %v1405 = vrot.slane %v1372, 5
      %v1406 = vrot.slane %v1405, 4
      %v1407 = vrot.slane %v1094, 5
      %v1408 = vsel %vm729, %v1406, %v1407
      %v1409 = vrot.slane %v1373, 5
      %v1410 = vrot.slane %v1409, 4
      %v1411 = vrot.slane %v1096, 5
      %v1412 = vsel %vm729, %v1410, %v1411
      %v1413 = vrot.slane %v1374, 5
      %v1414 = vrot.slane %v1413, 4
      %v1415 = vrot.slane %v1098, 5
      %v1416 = vsel %vm729, %v1414, %v1415
      %v1417 = vrot.slane %v1375, 5
      %v1418 = vrot.slane %v1417, 4
      %v1419 = vrot.slane %v1100, 5
      %v1420 = vsel %vm729, %v1418, %v1419
      %v1421 = vrot.slane %v1376, 5
      %v1422 = vrot.slane %v1421, 4
      %v1423 = vrot.slane %v1102, 5
      %v1424 = vsel %vm729, %v1422, %v1423
      %s1425 = scalar_lea.vmem %s254, 320
      %v1426 = vld [vmem:[%s1425] sm:$0xf]
      %v1427 = vld [vmem:[%s1425 + $0x4] sm:$0xf]
      %v1428 = vld [vmem:[%s1425 + $0x8] sm:$0xf]
      %v1429 = vld [vmem:[%s1425 + $0xc] sm:$0xf]
      %v1430 = vld [vmem:[%s1425 + $0x10] sm:$0xf]
      %v1431 = vld [vmem:[%s1425 + $0x14] sm:$0xf]
      %v1432 = vld [vmem:[%s1425 + $0x18] sm:$0xf]
      %v1433 = vld [vmem:[%s1425 + $0x1c] sm:$0xf]
      %v1434 = vld [vmem:[%s1425 + $0x20] sm:$0xf]
      %v1435 = vld [vmem:[%s1425 + $0x24] sm:$0xf]
      %v1436 = vld [vmem:[%s1425 + $0x28] sm:$0xf]
      %v1437 = vld [vmem:[%s1425 + $0x2c] sm:$0xf]
      %v1438 = vld [vmem:[%s1425 + $0x30] sm:$0xf]
      %v1439 = vld [vmem:[%s1425 + $0x34] sm:$0xf]
      %v1440 = vld [vmem:[%s1425 + $0x38] sm:$0xf]
      %v1441 = vld [vmem:[%s1425 + $0x3c] sm:$0xf]
      %v1442 = vunpack.c.l.b16 %v1396
      %v1443 = vunpack.c.l.b16 %v1400
      %v1444 = vunpack.c.l.b16 %v1404
      %v1445 = vunpack.c.l.b16 %v1408
      %v1446 = vunpack.c.l.b16 %v1412
      %v1447 = vunpack.c.l.b16 %v1416
      %v1448 = vunpack.c.l.b16 %v1420
      %v1449 = vunpack.c.l.b16 %v1424
      %v1450 = vpack.c.b16 %v1443, %v1442
      %v1451 = vpack.c.b16 %v1445, %v1444
      %v1452 = vpack.c.b16 %v1447, %v1446
      %v1453 = vpack.c.b16 %v1449, %v1448
      %v1474 = vunpack.c.l.b16 %v1426
      %v1475 = vunpack.c.l.b16 %v1427
      %v1476 = vunpack.c.l.b16 %v1428
      %v1477 = vunpack.c.l.b16 %v1429
      %v1478 = vunpack.c.l.b16 %v1430
      %v1479 = vunpack.c.l.b16 %v1431
      %v1480 = vunpack.c.l.b16 %v1432
      %v1481 = vunpack.c.l.b16 %v1433
      %v1482 = vunpack.c.l.b16 %v1434
      %v1483 = vunpack.c.l.b16 %v1435
      %v1484 = vunpack.c.l.b16 %v1436
      %v1485 = vunpack.c.l.b16 %v1437
      %v1486 = vunpack.c.l.b16 %v1438
      %v1487 = vunpack.c.l.b16 %v1439
      %v1488 = vunpack.c.l.b16 %v1440
      %v1489 = vunpack.c.l.b16 %v1441
      %v1490 = vpack.c.b16 %v1475, %v1474
      %v1491 = vpack.c.b16 %v1477, %v1476
      %v1492 = vpack.c.b16 %v1479, %v1478
      %v1493 = vpack.c.b16 %v1481, %v1480
      %v1494 = vpack.c.b16 %v1483, %v1482
      %v1495 = vpack.c.b16 %v1485, %v1484
      %v1496 = vpack.c.b16 %v1487, %v1486
      %v1497 = vpack.c.b16 %v1489, %v1488
      %1506 = vmatprep.subr.bf16.mxu0 0
      %1507 = vmatpush1.bf16.msra.mxu0 %v1490
      %1508 = vmatprep.subr.bf16.mxu0 0
      %1509 = vmatpush1.bf16.msra.mxu0 %v1491
      %1510 = vmatprep.subr.bf16.mxu0 0
      %1511 = vmatpush1.bf16.msra.mxu0 %v1492
      %1512 = vmatprep.subr.bf16.mxu0 0
      %1513 = vmatpush1.bf16.msra.mxu0 %v1493
      %1514 = vmatprep.subr.bf16.mxu0 0
      %1515 = vmatpush1.bf16.msra.mxu0 %v1494
      %1516 = vmatprep.subr.bf16.mxu0 0
      %1517 = vmatpush1.bf16.msra.mxu0 %v1495
      %1518 = vmatprep.subr.bf16.mxu0 0
      %1519 = vmatpush1.bf16.msra.mxu0 %v1496
      %1520 = vmatprep.subr.bf16.mxu0 0
      %1521 = vmatpush1.bf16.msra.mxu0 %v1497
      %1522 = vmatprep.subr.bf16.mxu0 0
      %1523 = vmatpush1.bf16.msra.mxu0 0
      %1524 = vmatprep.subr.bf16.mxu0 0
      %1525 = vmatpush1.bf16.msra.mxu0 0
      %1526 = vmatprep.subr.bf16.mxu0 0
      %1527 = vmatpush1.bf16.msra.mxu0 0
      %1528 = vmatprep.subr.bf16.mxu0 0
      %1529 = vmatpush1.bf16.msra.mxu0 0
      %1530 = vmatprep.subr.bf16.mxu0 0
      %1531 = vmatpush1.bf16.msra.mxu0 0
      %1532 = vmatprep.subr.bf16.mxu0 0
      %1533 = vmatpush1.bf16.msra.mxu0 0
      %1534 = vmatprep.subr.bf16.mxu0 0
      %1535 = vmatpush1.bf16.msra.mxu0 0
      %1536 = vmatprep.subr.bf16.mxu0 0
      %1537 = vmatpush1.bf16.msra.mxu0 0
      %1538 = vmatprep.mubr.bf16.mxu0 0
      %1539 = vmatmul.mubr.bf16.gmra.mrb[0].mxu0 %v1450
      %v1540 = vpop.f32.mrb[0].mxu0
      %v1541 = vadd.f32 0.0, %v1540
      %v1542 = vpop.f32.mrb[0].mxu0
      %v1543 = vpop.f32.mrb[0].mxu0
      %v1544 = vadd.f32 0.0, %v1543
      %v1545 = vpop.f32.mrb[0].mxu0
      %1546 = vmatprep.mubr.bf16.mxu0 0
      %1547 = vmatmul.mubr.bf16.gmra.mrb[0].mxu0 %v1451
      %v1548 = vpop.f32.mrb[0].mxu0
      %v1549 = vadd.f32 0.0, %v1548
      %v1550 = vpop.f32.mrb[0].mxu0
      %v1551 = vpop.f32.mrb[0].mxu0
      %v1552 = vadd.f32 0.0, %v1551
      %v1553 = vpop.f32.mrb[0].mxu0
      %1554 = vmatprep.mubr.bf16.mxu0 0
      %1555 = vmatmul.mubr.bf16.gmra.mrb[0].mxu0 %v1452
      %v1556 = vpop.f32.mrb[0].mxu0
      %v1557 = vadd.f32 0.0, %v1556
      %v1558 = vpop.f32.mrb[0].mxu0
      %v1559 = vpop.f32.mrb[0].mxu0
      %v1560 = vadd.f32 0.0, %v1559
      %v1561 = vpop.f32.mrb[0].mxu0
      %1562 = vmatprep.mubr.bf16.mxu0 0
      %1563 = vmatmul.mubr.bf16.gmra.mrb[0].mxu0 %v1453
      %v1564 = vpop.f32.mrb[0].mxu0
      %v1565 = vadd.f32 0.0, %v1564
      %v1566 = vpop.f32.mrb[0].mxu0
      %v1567 = vpop.f32.mrb[0].mxu0
      %v1568 = vadd.f32 0.0, %v1567
      %v1569 = vpop.f32.mrb[0].mxu0
      %1570 = vdwg.mxu0
      %v1571 = vadd.f32 %v1361, %v1541
      %v1572 = vadd.f32 %v1362, %v1544
      %v1573 = vadd.f32 %v1363, %v1549
      %v1574 = vadd.f32 %v1364, %v1552
      %v1575 = vadd.f32 %v1365, %v1557
      %v1576 = vadd.f32 %v1366, %v1560
      %v1577 = vadd.f32 %v1367, %v1565
      %v1578 = vadd.f32 %v1368, %v1568
      %s1579 = scalar_lea.vmem %s250, 16
      %v1580 = vld [vmem:[%s1579] sm:$0xf]
      %v1581 = vld [vmem:[%s1579 + $0x8] sm:$0xf]
      %v1582 = vld [vmem:[%s1579 + $0x10] sm:$0xf]
      %v1583 = vld [vmem:[%s1579 + $0x18] sm:$0xf]
      %v1584 = vld [vmem:[%s1579 + $0x20] sm:$0xf]
      %v1585 = vld [vmem:[%s1579 + $0x28] sm:$0xf]
      %v1586 = vld [vmem:[%s1579 + $0x30] sm:$0xf]
      %v1587 = vld [vmem:[%s1579 + $0x38] sm:$0xf]
      %s1588 = scalar_lea.vmem %s254, 384
      %v1589 = vld [vmem:[%s1588] sm:$0xf]
      %v1590 = vld [vmem:[%s1588 + $0x4] sm:$0xf]
      %v1591 = vld [vmem:[%s1588 + $0x8] sm:$0xf]
      %v1592 = vld [vmem:[%s1588 + $0xc] sm:$0xf]
      %v1593 = vld [vmem:[%s1588 + $0x10] sm:$0xf]
      %v1594 = vld [vmem:[%s1588 + $0x14] sm:$0xf]
      %v1595 = vld [vmem:[%s1588 + $0x18] sm:$0xf]
      %v1596 = vld [vmem:[%s1588 + $0x1c] sm:$0xf]
      %v1597 = vld [vmem:[%s1588 + $0x20] sm:$0xf]
      %v1598 = vld [vmem:[%s1588 + $0x24] sm:$0xf]
      %v1599 = vld [vmem:[%s1588 + $0x28] sm:$0xf]
      %v1600 = vld [vmem:[%s1588 + $0x2c] sm:$0xf]
      %v1601 = vld [vmem:[%s1588 + $0x30] sm:$0xf]
      %v1602 = vld [vmem:[%s1588 + $0x34] sm:$0xf]
      %v1603 = vld [vmem:[%s1588 + $0x38] sm:$0xf]
      %v1604 = vld [vmem:[%s1588 + $0x3c] sm:$0xf]
      %v1613 = vunpack.c.l.b16 %v1580
      %v1614 = vunpack.c.l.b16 %v1581
      %v1615 = vunpack.c.l.b16 %v1582
      %v1616 = vunpack.c.l.b16 %v1583
      %v1617 = vunpack.c.l.b16 %v1584
      %v1618 = vunpack.c.l.b16 %v1585
      %v1619 = vunpack.c.l.b16 %v1586
      %v1620 = vunpack.c.l.b16 %v1587
      %v1621 = vpack.c.b16 %v1614, %v1613
      %v1622 = vpack.c.b16 %v1616, %v1615
      %v1623 = vpack.c.b16 %v1618, %v1617
      %v1624 = vpack.c.b16 %v1620, %v1619
      %v1645 = vunpack.c.l.b16 %v1589
      %v1646 = vunpack.c.l.b16 %v1590
      %v1647 = vunpack.c.l.b16 %v1591
      %v1648 = vunpack.c.l.b16 %v1592
      %v1649 = vunpack.c.l.b16 %v1593
      %v1650 = vunpack.c.l.b16 %v1594
      %v1651 = vunpack.c.l.b16 %v1595
      %v1652 = vunpack.c.l.b16 %v1596
      %v1653 = vunpack.c.l.b16 %v1597
      %v1654 = vunpack.c.l.b16 %v1598
      %v1655 = vunpack.c.l.b16 %v1599
      %v1656 = vunpack.c.l.b16 %v1600
      %v1657 = vunpack.c.l.b16 %v1601
      %v1658 = vunpack.c.l.b16 %v1602
      %v1659 = vunpack.c.l.b16 %v1603
      %v1660 = vunpack.c.l.b16 %v1604
      %v1661 = vpack.c.b16 %v1646, %v1645
      %v1662 = vpack.c.b16 %v1648, %v1647
      %v1663 = vpack.c.b16 %v1650, %v1649
      %v1664 = vpack.c.b16 %v1652, %v1651
      %v1665 = vpack.c.b16 %v1654, %v1653
      %v1666 = vpack.c.b16 %v1656, %v1655
      %v1667 = vpack.c.b16 %v1658, %v1657
      %v1668 = vpack.c.b16 %v1660, %v1659
      %1677 = vmatprep.subr.bf16.mxu0 0
      %1678 = vmatpush1.bf16.msra.mxu0 %v1661
      %1679 = vmatprep.subr.bf16.mxu0 0
      %1680 = vmatpush1.bf16.msra.mxu0 %v1662
      %1681 = vmatprep.subr.bf16.mxu0 0
      %1682 = vmatpush1.bf16.msra.mxu0 %v1663
      %1683 = vmatprep.subr.bf16.mxu0 0
      %1684 = vmatpush1.bf16.msra.mxu0 %v1664
      %1685 = vmatprep.subr.bf16.mxu0 0
      %1686 = vmatpush1.bf16.msra.mxu0 %v1665
      %1687 = vmatprep.subr.bf16.mxu0 0
      %1688 = vmatpush1.bf16.msra.mxu0 %v1666
      %1689 = vmatprep.subr.bf16.mxu0 0
      %1690 = vmatpush1.bf16.msra.mxu0 %v1667
      %1691 = vmatprep.subr.bf16.mxu0 0
      %1692 = vmatpush1.bf16.msra.mxu0 %v1668
      %1693 = vmatprep.subr.bf16.mxu0 0
      %1694 = vmatpush1.bf16.msra.mxu0 0
      %1695 = vmatprep.subr.bf16.mxu0 0
      %1696 = vmatpush1.bf16.msra.mxu0 0
      %1697 = vmatprep.subr.bf16.mxu0 0
      %1698 = vmatpush1.bf16.msra.mxu0 0
      %1699 = vmatprep.subr.bf16.mxu0 0
      %1700 = vmatpush1.bf16.msra.mxu0 0
      %1701 = vmatprep.subr.bf16.mxu0 0
      %1702 = vmatpush1.bf16.msra.mxu0 0
      %1703 = vmatprep.subr.bf16.mxu0 0
      %1704 = vmatpush1.bf16.msra.mxu0 0
      %1705 = vmatprep.subr.bf16.mxu0 0
      %1706 = vmatpush1.bf16.msra.mxu0 0
      %1707 = vmatprep.subr.bf16.mxu0 0
      %1708 = vmatpush1.bf16.msra.mxu0 0
      %1709 = vmatprep.mubr.bf16.mxu0 0
      %1710 = vmatmul.mubr.bf16.gmra.mrb[0].mxu0 %v1621
      %v1711 = vpop.f32.mrb[0].mxu0
      %v1712 = vadd.f32 0.0, %v1711
      %v1713 = vpop.f32.mrb[0].mxu0
      %v1714 = vpop.f32.mrb[0].mxu0
      %v1715 = vadd.f32 0.0, %v1714
      %v1716 = vpop.f32.mrb[0].mxu0
      %1717 = vmatprep.mubr.bf16.mxu0 0
      %1718 = vmatmul.mubr.bf16.gmra.mrb[0].mxu0 %v1622
      %v1719 = vpop.f32.mrb[0].mxu0
      %v1720 = vadd.f32 0.0, %v1719
      %v1721 = vpop.f32.mrb[0].mxu0
      %v1722 = vpop.f32.mrb[0].mxu0
      %v1723 = vadd.f32 0.0, %v1722
      %v1724 = vpop.f32.mrb[0].mxu0
      %1725 = vmatprep.mubr.bf16.mxu0 0
      %1726 = vmatmul.mubr.bf16.gmra.mrb[0].mxu0 %v1623
      %v1727 = vpop.f32.mrb[0].mxu0
      %v1728 = vadd.f32 0.0, %v1727
      %v1729 = vpop.f32.mrb[0].mxu0
      %v1730 = vpop.f32.mrb[0].mxu0
      %v1731 = vadd.f32 0.0, %v1730
      %v1732 = vpop.f32.mrb[0].mxu0
      %1733 = vmatprep.mubr.bf16.mxu0 0
      %1734 = vmatmul.mubr.bf16.gmra.mrb[0].mxu0 %v1624
      %v1735 = vpop.f32.mrb[0].mxu0
      %v1736 = vadd.f32 0.0, %v1735
      %v1737 = vpop.f32.mrb[0].mxu0
      %v1738 = vpop.f32.mrb[0].mxu0
      %v1739 = vadd.f32 0.0, %v1738
      %v1740 = vpop.f32.mrb[0].mxu0
      %1741 = vdwg.mxu0
      %v1742 = vadd.f32 %v1571, %v1712
      %v1743 = vadd.f32 %v1572, %v1715
      %v1744 = vadd.f32 %v1573, %v1720
      %v1745 = vadd.f32 %v1574, %v1723
      %v1746 = vadd.f32 %v1575, %v1728
      %v1747 = vadd.f32 %v1576, %v1731
      %v1748 = vadd.f32 %v1577, %v1736
      %v1749 = vadd.f32 %v1578, %v1739
      %v1750 = vld [vmem:[%s1579] sm:$0xf]
      %v1751 = vld [vmem:[%s1579 + $0x4] sm:$0x1]
      %v1752 = vld [vmem:[%s1579 + $0x8] sm:$0xf]
      %v1753 = vld [vmem:[%s1579 + $0xc] sm:$0x1]
      %v1754 = vld [vmem:[%s1579 + $0x10] sm:$0xf]
      %v1755 = vld [vmem:[%s1579 + $0x14] sm:$0x1]
      %v1756 = vld [vmem:[%s1579 + $0x18] sm:$0xf]
      %v1757 = vld [vmem:[%s1579 + $0x1c] sm:$0x1]
      %v1758 = vld [vmem:[%s1579 + $0x20] sm:$0xf]
      %v1759 = vld [vmem:[%s1579 + $0x24] sm:$0x1]
      %v1760 = vld [vmem:[%s1579 + $0x28] sm:$0xf]
      %v1761 = vld [vmem:[%s1579 + $0x2c] sm:$0x1]
      %v1762 = vld [vmem:[%s1579 + $0x30] sm:$0xf]
      %v1763 = vld [vmem:[%s1579 + $0x34] sm:$0x1]
      %v1764 = vld [vmem:[%s1579 + $0x38] sm:$0xf]
      %v1765 = vld [vmem:[%s1579 + $0x3c] sm:$0x1]
      %v1767 = vshrl.u32 %v1750, 16
      %v1769 = vrot.slane %v1767, 4
      %v1770 = vshll.u32 %v1750, 16
      %v1772 = vrot.slane %v1770, 5
      %v1773 = vor.u32 %v1769, %v1772
      %v1774 = vrot.slane %v1773, 4
      %v1776 = vshll.u32 %v1751, 16
      %v1778 = vrot.slane %v1776, 5
      %v1779 = vsel %vm307, %v1774, %v1778
      %v1781 = vshrl.u32 %v1752, 16
      %v1783 = vrot.slane %v1781, 4
      %v1784 = vshll.u32 %v1752, 16
      %v1786 = vrot.slane %v1784, 5
      %v1787 = vor.u32 %v1783, %v1786
      %v1788 = vrot.slane %v1787, 4
      %v1790 = vshll.u32 %v1753, 16
      %v1792 = vrot.slane %v1790, 5
      %v1793 = vsel %vm307, %v1788, %v1792
      %v1795 = vshrl.u32 %v1754, 16
      %v1797 = vrot.slane %v1795, 4
      %v1798 = vshll.u32 %v1754, 16
      %v1800 = vrot.slane %v1798, 5
      %v1801 = vor.u32 %v1797, %v1800
      %v1802 = vrot.slane %v1801, 4
      %v1804 = vshll.u32 %v1755, 16
      %v1806 = vrot.slane %v1804, 5
      %v1807 = vsel %vm307, %v1802, %v1806
      %v1809 = vshrl.u32 %v1756, 16
      %v1811 = vrot.slane %v1809, 4
      %v1812 = vshll.u32 %v1756, 16
      %v1814 = vrot.slane %v1812, 5
      %v1815 = vor.u32 %v1811, %v1814
      %v1816 = vrot.slane %v1815, 4
      %v1818 = vshll.u32 %v1757, 16
      %v1820 = vrot.slane %v1818, 5
      %v1821 = vsel %vm307, %v1816, %v1820
      %v1823 = vshrl.u32 %v1758, 16
      %v1825 = vrot.slane %v1823, 4
      %v1826 = vshll.u32 %v1758, 16
      %v1828 = vrot.slane %v1826, 5
      %v1829 = vor.u32 %v1825, %v1828
      %v1830 = vrot.slane %v1829, 4
      %v1832 = vshll.u32 %v1759, 16
      %v1834 = vrot.slane %v1832, 5
      %v1835 = vsel %vm307, %v1830, %v1834
      %v1837 = vshrl.u32 %v1760, 16
      %v1839 = vrot.slane %v1837, 4
      %v1840 = vshll.u32 %v1760, 16
      %v1842 = vrot.slane %v1840, 5
      %v1843 = vor.u32 %v1839, %v1842
      %v1844 = vrot.slane %v1843, 4
      %v1846 = vshll.u32 %v1761, 16
      %v1848 = vrot.slane %v1846, 5
      %v1849 = vsel %vm307, %v1844, %v1848
      %v1851 = vshrl.u32 %v1762, 16
      %v1853 = vrot.slane %v1851, 4
      %v1854 = vshll.u32 %v1762, 16
      %v1856 = vrot.slane %v1854, 5
      %v1857 = vor.u32 %v1853, %v1856
      %v1858 = vrot.slane %v1857, 4
      %v1860 = vshll.u32 %v1763, 16
      %v1862 = vrot.slane %v1860, 5
      %v1863 = vsel %vm307, %v1858, %v1862
      %v1865 = vshrl.u32 %v1764, 16
      %v1867 = vrot.slane %v1865, 4
      %v1868 = vshll.u32 %v1764, 16
      %v1870 = vrot.slane %v1868, 5
      %v1871 = vor.u32 %v1867, %v1870
      %v1872 = vrot.slane %v1871, 4
      %v1874 = vshll.u32 %v1765, 16
      %v1876 = vrot.slane %v1874, 5
      %v1877 = vsel %vm307, %v1872, %v1876
      %s1878 = scalar_lea.vmem %s254, 448
      %v1879 = vld [vmem:[%s1878] sm:$0xf]
      %v1880 = vld [vmem:[%s1878 + $0x4] sm:$0xf]
      %v1881 = vld [vmem:[%s1878 + $0x8] sm:$0xf]
      %v1882 = vld [vmem:[%s1878 + $0xc] sm:$0xf]
      %v1883 = vld [vmem:[%s1878 + $0x10] sm:$0xf]
      %v1884 = vld [vmem:[%s1878 + $0x14] sm:$0xf]
      %v1885 = vld [vmem:[%s1878 + $0x18] sm:$0xf]
      %v1886 = vld [vmem:[%s1878 + $0x1c] sm:$0xf]
      %v1887 = vld [vmem:[%s1878 + $0x20] sm:$0xf]
      %v1888 = vld [vmem:[%s1878 + $0x24] sm:$0xf]
      %v1889 = vld [vmem:[%s1878 + $0x28] sm:$0xf]
      %v1890 = vld [vmem:[%s1878 + $0x2c] sm:$0xf]
      %v1891 = vld [vmem:[%s1878 + $0x30] sm:$0xf]
      %v1892 = vld [vmem:[%s1878 + $0x34] sm:$0xf]
      %v1893 = vld [vmem:[%s1878 + $0x38] sm:$0xf]
      %v1894 = vld [vmem:[%s1878 + $0x3c] sm:$0xf]
      %v1895 = vunpack.c.l.b16 %v1779
      %v1896 = vunpack.c.l.b16 %v1793
      %v1897 = vunpack.c.l.b16 %v1807
      %v1898 = vunpack.c.l.b16 %v1821
      %v1899 = vunpack.c.l.b16 %v1835
      %v1900 = vunpack.c.l.b16 %v1849
      %v1901 = vunpack.c.l.b16 %v1863
      %v1902 = vunpack.c.l.b16 %v1877
      %v1903 = vpack.c.b16 %v1896, %v1895
      %v1904 = vpack.c.b16 %v1898, %v1897
      %v1905 = vpack.c.b16 %v1900, %v1899
      %v1906 = vpack.c.b16 %v1902, %v1901
      %v1927 = vunpack.c.l.b16 %v1879
      %v1928 = vunpack.c.l.b16 %v1880
      %v1929 = vunpack.c.l.b16 %v1881
      %v1930 = vunpack.c.l.b16 %v1882
      %v1931 = vunpack.c.l.b16 %v1883
      %v1932 = vunpack.c.l.b16 %v1884
      %v1933 = vunpack.c.l.b16 %v1885
      %v1934 = vunpack.c.l.b16 %v1886
      %v1935 = vunpack.c.l.b16 %v1887
      %v1936 = vunpack.c.l.b16 %v1888
      %v1937 = vunpack.c.l.b16 %v1889
      %v1938 = vunpack.c.l.b16 %v1890
      %v1939 = vunpack.c.l.b16 %v1891
      %v1940 = vunpack.c.l.b16 %v1892
      %v1941 = vunpack.c.l.b16 %v1893
      %v1942 = vunpack.c.l.b16 %v1894
      %v1943 = vpack.c.b16 %v1928, %v1927
      %v1944 = vpack.c.b16 %v1930, %v1929
      %v1945 = vpack.c.b16 %v1932, %v1931
      %v1946 = vpack.c.b16 %v1934, %v1933
      %v1947 = vpack.c.b16 %v1936, %v1935
      %v1948 = vpack.c.b16 %v1938, %v1937
      %v1949 = vpack.c.b16 %v1940, %v1939
      %v1950 = vpack.c.b16 %v1942, %v1941
      %1959 = vmatprep.subr.bf16.mxu0 0
      %1960 = vmatpush1.bf16.msra.mxu0 %v1943
      %1961 = vmatprep.subr.bf16.mxu0 0
      %1962 = vmatpush1.bf16.msra.mxu0 %v1944
      %1963 = vmatprep.subr.bf16.mxu0 0
      %1964 = vmatpush1.bf16.msra.mxu0 %v1945
      %1965 = vmatprep.subr.bf16.mxu0 0
      %1966 = vmatpush1.bf16.msra.mxu0 %v1946
      %1967 = vmatprep.subr.bf16.mxu0 0
      %1968 = vmatpush1.bf16.msra.mxu0 %v1947
      %1969 = vmatprep.subr.bf16.mxu0 0
      %1970 = vmatpush1.bf16.msra.mxu0 %v1948
      %1971 = vmatprep.subr.bf16.mxu0 0
      %1972 = vmatpush1.bf16.msra.mxu0 %v1949
      %1973 = vmatprep.subr.bf16.mxu0 0
      %1974 = vmatpush1.bf16.msra.mxu0 %v1950
      %1975 = vmatprep.subr.bf16.mxu0 0
      %1976 = vmatpush1.bf16.msra.mxu0 0
      %1977 = vmatprep.subr.bf16.mxu0 0
      %1978 = vmatpush1.bf16.msra.mxu0 0
      %1979 = vmatprep.subr.bf16.mxu0 0
      %1980 = vmatpush1.bf16.msra.mxu0 0
      %1981 = vmatprep.subr.bf16.mxu0 0
      %1982 = vmatpush1.bf16.msra.mxu0 0
      %1983 = vmatprep.subr.bf16.mxu0 0
      %1984 = vmatpush1.bf16.msra.mxu0 0
      %1985 = vmatprep.subr.bf16.mxu0 0
      %1986 = vmatpush1.bf16.msra.mxu0 0
      %1987 = vmatprep.subr.bf16.mxu0 0
      %1988 = vmatpush1.bf16.msra.mxu0 0
      %1989 = vmatprep.subr.bf16.mxu0 0
      %1990 = vmatpush1.bf16.msra.mxu0 0
      %1991 = vmatprep.mubr.bf16.mxu0 0
      %1992 = vmatmul.mubr.bf16.gmra.mrb[0].mxu0 %v1903
      %v1993 = vpop.f32.mrb[0].mxu0
      %v1994 = vadd.f32 0.0, %v1993
      %v1995 = vpop.f32.mrb[0].mxu0
      %v1996 = vpop.f32.mrb[0].mxu0
      %v1997 = vadd.f32 0.0, %v1996
      %v1998 = vpop.f32.mrb[0].mxu0
      %1999 = vmatprep.mubr.bf16.mxu0 0
      %2000 = vmatmul.mubr.bf16.gmra.mrb[0].mxu0 %v1904
      %v2001 = vpop.f32.mrb[0].mxu0
      %v2002 = vadd.f32 0.0, %v2001
      %v2003 = vpop.f32.mrb[0].mxu0
      %v2004 = vpop.f32.mrb[0].mxu0
      %v2005 = vadd.f32 0.0, %v2004
      %v2006 = vpop.f32.mrb[0].mxu0
      %2007 = vmatprep.mubr.bf16.mxu0 0
      %2008 = vmatmul.mubr.bf16.gmra.mrb[0].mxu0 %v1905
      %v2009 = vpop.f32.mrb[0].mxu0
      %v2010 = vadd.f32 0.0, %v2009
      %v2011 = vpop.f32.mrb[0].mxu0
      %v2012 = vpop.f32.mrb[0].mxu0
      %v2013 = vadd.f32 0.0, %v2012
      %v2014 = vpop.f32.mrb[0].mxu0
      %2015 = vmatprep.mubr.bf16.mxu0 0
      %2016 = vmatmul.mubr.bf16.gmra.mrb[0].mxu0 %v1906
      %v2017 = vpop.f32.mrb[0].mxu0
      %v2018 = vadd.f32 0.0, %v2017
      %v2019 = vpop.f32.mrb[0].mxu0
      %v2020 = vpop.f32.mrb[0].mxu0
      %v2021 = vadd.f32 0.0, %v2020
      %v2022 = vpop.f32.mrb[0].mxu0
      %2023 = vdwg.mxu0
      %v2024 = vadd.f32 %v1742, %v1994
      %v2025 = vadd.f32 %v1743, %v1997
      %v2026 = vadd.f32 %v1744, %v2002
      %v2027 = vadd.f32 %v1745, %v2005
      %v2028 = vadd.f32 %v1746, %v2010
      %v2029 = vadd.f32 %v1747, %v2013
      %v2030 = vadd.f32 %v1748, %v2018
      %v2031 = vadd.f32 %v1749, %v2021
      %v2032 = vld [vmem:[%s1579] sm:$0xe]
      %v2033 = vld [vmem:[%s1579 + $0x8] sm:$0xe]
      %v2034 = vld [vmem:[%s1579 + $0x10] sm:$0xe]
      %v2035 = vld [vmem:[%s1579 + $0x18] sm:$0xe]
      %v2036 = vld [vmem:[%s1579 + $0x20] sm:$0xe]
      %v2037 = vld [vmem:[%s1579 + $0x28] sm:$0xe]
      %v2038 = vld [vmem:[%s1579 + $0x30] sm:$0xe]
      %v2039 = vld [vmem:[%s1579 + $0x38] sm:$0xe]
      %v2056 = vrot.slane %v2032, 5
      %v2057 = vrot.slane %v2056, 4
      %v2058 = vrot.slane %v1751, 5
      %v2059 = vsel %vm729, %v2057, %v2058
      %v2060 = vrot.slane %v2033, 5
      %v2061 = vrot.slane %v2060, 4
      %v2062 = vrot.slane %v1753, 5
      %v2063 = vsel %vm729, %v2061, %v2062
      %v2064 = vrot.slane %v2034, 5
      %v2065 = vrot.slane %v2064, 4
      %v2066 = vrot.slane %v1755, 5
      %v2067 = vsel %vm729, %v2065, %v2066
      %v2068 = vrot.slane %v2035, 5
      %v2069 = vrot.slane %v2068, 4
      %v2070 = vrot.slane %v1757, 5
      %v2071 = vsel %vm729, %v2069, %v2070
      %v2072 = vrot.slane %v2036, 5
      %v2073 = vrot.slane %v2072, 4
      %v2074 = vrot.slane %v1759, 5
      %v2075 = vsel %vm729, %v2073, %v2074
      %v2076 = vrot.slane %v2037, 5
      %v2077 = vrot.slane %v2076, 4
      %v2078 = vrot.slane %v1761, 5
      %v2079 = vsel %vm729, %v2077, %v2078
      %v2080 = vrot.slane %v2038, 5
      %v2081 = vrot.slane %v2080, 4
      %v2082 = vrot.slane %v1763, 5
      %v2083 = vsel %vm729, %v2081, %v2082
      %v2084 = vrot.slane %v2039, 5
      %v2085 = vrot.slane %v2084, 4
      %v2086 = vrot.slane %v1765, 5
      %v2087 = vsel %vm729, %v2085, %v2086
      %s2088 = scalar_lea.vmem %s254, 512
      %v2089 = vld [vmem:[%s2088] sm:$0xf]
      %v2090 = vld [vmem:[%s2088 + $0x4] sm:$0xf]
      %v2091 = vld [vmem:[%s2088 + $0x8] sm:$0xf]
      %v2092 = vld [vmem:[%s2088 + $0xc] sm:$0xf]
      %v2093 = vld [vmem:[%s2088 + $0x10] sm:$0xf]
      %v2094 = vld [vmem:[%s2088 + $0x14] sm:$0xf]
      %v2095 = vld [vmem:[%s2088 + $0x18] sm:$0xf]
      %v2096 = vld [vmem:[%s2088 + $0x1c] sm:$0xf]
      %v2097 = vld [vmem:[%s2088 + $0x20] sm:$0xf]
      %v2098 = vld [vmem:[%s2088 + $0x24] sm:$0xf]
      %v2099 = vld [vmem:[%s2088 + $0x28] sm:$0xf]
      %v2100 = vld [vmem:[%s2088 + $0x2c] sm:$0xf]
      %v2101 = vld [vmem:[%s2088 + $0x30] sm:$0xf]
      %v2102 = vld [vmem:[%s2088 + $0x34] sm:$0xf]
      %v2103 = vld [vmem:[%s2088 + $0x38] sm:$0xf]
      %v2104 = vld [vmem:[%s2088 + $0x3c] sm:$0xf]
      %v2105 = vunpack.c.l.b16 %v2059
      %v2106 = vunpack.c.l.b16 %v2063
      %v2107 = vunpack.c.l.b16 %v2067
      %v2108 = vunpack.c.l.b16 %v2071
      %v2109 = vunpack.c.l.b16 %v2075
      %v2110 = vunpack.c.l.b16 %v2079
      %v2111 = vunpack.c.l.b16 %v2083
      %v2112 = vunpack.c.l.b16 %v2087
      %v2113 = vpack.c.b16 %v2106, %v2105
      %v2114 = vpack.c.b16 %v2108, %v2107
      %v2115 = vpack.c.b16 %v2110, %v2109
      %v2116 = vpack.c.b16 %v2112, %v2111
      %v2137 = vunpack.c.l.b16 %v2089
      %v2138 = vunpack.c.l.b16 %v2090
      %v2139 = vunpack.c.l.b16 %v2091
      %v2140 = vunpack.c.l.b16 %v2092
      %v2141 = vunpack.c.l.b16 %v2093
      %v2142 = vunpack.c.l.b16 %v2094
      %v2143 = vunpack.c.l.b16 %v2095
      %v2144 = vunpack.c.l.b16 %v2096
      %v2145 = vunpack.c.l.b16 %v2097
      %v2146 = vunpack.c.l.b16 %v2098
      %v2147 = vunpack.c.l.b16 %v2099
      %v2148 = vunpack.c.l.b16 %v2100
      %v2149 = vunpack.c.l.b16 %v2101
      %v2150 = vunpack.c.l.b16 %v2102
      %v2151 = vunpack.c.l.b16 %v2103
      %v2152 = vunpack.c.l.b16 %v2104
      %v2153 = vpack.c.b16 %v2138, %v2137
      %v2154 = vpack.c.b16 %v2140, %v2139
      %v2155 = vpack.c.b16 %v2142, %v2141
      %v2156 = vpack.c.b16 %v2144, %v2143
      %v2157 = vpack.c.b16 %v2146, %v2145
      %v2158 = vpack.c.b16 %v2148, %v2147
      %v2159 = vpack.c.b16 %v2150, %v2149
      %v2160 = vpack.c.b16 %v2152, %v2151
      %2169 = vmatprep.subr.bf16.mxu0 0
      %2170 = vmatpush1.bf16.msra.mxu0 %v2153
      %2171 = vmatprep.subr.bf16.mxu0 0
      %2172 = vmatpush1.bf16.msra.mxu0 %v2154
      %2173 = vmatprep.subr.bf16.mxu0 0
      %2174 = vmatpush1.bf16.msra.mxu0 %v2155
      %2175 = vmatprep.subr.bf16.mxu0 0
      %2176 = vmatpush1.bf16.msra.mxu0 %v2156
      %2177 = vmatprep.subr.bf16.mxu0 0
      %2178 = vmatpush1.bf16.msra.mxu0 %v2157
      %2179 = vmatprep.subr.bf16.mxu0 0
      %2180 = vmatpush1.bf16.msra.mxu0 %v2158
      %2181 = vmatprep.subr.bf16.mxu0 0
      %2182 = vmatpush1.bf16.msra.mxu0 %v2159
      %2183 = vmatprep.subr.bf16.mxu0 0
      %2184 = vmatpush1.bf16.msra.mxu0 %v2160
      %2185 = vmatprep.subr.bf16.mxu0 0
      %2186 = vmatpush1.bf16.msra.mxu0 0
      %2187 = vmatprep.subr.bf16.mxu0 0
      %2188 = vmatpush1.bf16.msra.mxu0 0
      %2189 = vmatprep.subr.bf16.mxu0 0
      %2190 = vmatpush1.bf16.msra.mxu0 0
      %2191 = vmatprep.subr.bf16.mxu0 0
      %2192 = vmatpush1.bf16.msra.mxu0 0
      %2193 = vmatprep.subr.bf16.mxu0 0
      %2194 = vmatpush1.bf16.msra.mxu0 0
      %2195 = vmatprep.subr.bf16.mxu0 0
      %2196 = vmatpush1.bf16.msra.mxu0 0
      %2197 = vmatprep.subr.bf16.mxu0 0
      %2198 = vmatpush1.bf16.msra.mxu0 0
      %2199 = vmatprep.subr.bf16.mxu0 0
      %2200 = vmatpush1.bf16.msra.mxu0 0
      %2201 = vmatprep.mubr.bf16.mxu0 0
      %2202 = vmatmul.mubr.bf16.gmra.mrb[0].mxu0 %v2113
      %v2203 = vpop.f32.mrb[0].mxu0
      %v2204 = vadd.f32 0.0, %v2203
      %v2205 = vpop.f32.mrb[0].mxu0
      %v2206 = vpop.f32.mrb[0].mxu0
      %v2207 = vadd.f32 0.0, %v2206
      %v2208 = vpop.f32.mrb[0].mxu0
      %2209 = vmatprep.mubr.bf16.mxu0 0
      %2210 = vmatmul.mubr.bf16.gmra.mrb[0].mxu0 %v2114
      %v2211 = vpop.f32.mrb[0].mxu0
      %v2212 = vadd.f32 0.0, %v2211
      %v2213 = vpop.f32.mrb[0].mxu0
      %v2214 = vpop.f32.mrb[0].mxu0
      %v2215 = vadd.f32 0.0, %v2214
      %v2216 = vpop.f32.mrb[0].mxu0
      %2217 = vmatprep.mubr.bf16.mxu0 0
      %2218 = vmatmul.mubr.bf16.gmra.mrb[0].mxu0 %v2115
      %v2219 = vpop.f32.mrb[0].mxu0
      %v2220 = vadd.f32 0.0, %v2219
      %v2221 = vpop.f32.mrb[0].mxu0
      %v2222 = vpop.f32.mrb[0].mxu0
      %v2223 = vadd.f32 0.0, %v2222
      %v2224 = vpop.f32.mrb[0].mxu0
      %2225 = vmatprep.mubr.bf16.mxu0 0
      %2226 = vmatmul.mubr.bf16.gmra.mrb[0].mxu0 %v2116
      %v2227 = vpop.f32.mrb[0].mxu0
      %v2228 = vadd.f32 0.0, %v2227
      %v2229 = vpop.f32.mrb[0].mxu0
      %v2230 = vpop.f32.mrb[0].mxu0
      %v2231 = vadd.f32 0.0, %v2230
      %v2232 = vpop.f32.mrb[0].mxu0
      %2233 = vdwg.mxu0
      %v2234 = vadd.f32 %v2024, %v2204
      %v2235 = vadd.f32 %v2025, %v2207
      %v2236 = vadd.f32 %v2026, %v2212
      %v2237 = vadd.f32 %v2027, %v2215
      %v2238 = vadd.f32 %v2028, %v2220
      %v2239 = vadd.f32 %v2029, %v2223
      %v2240 = vadd.f32 %v2030, %v2228
      %v2241 = vadd.f32 %v2031, %v2231
      %s2242 = scalar_lea.vmem %s259, 216
      %v2243 = vld [vmem:[%s2242] sm:$0xf]
      %v2244 = vld [vmem:[%s2242 + $0x8] sm:$0xf]
      %v2245 = vld [vmem:[%s2242 + $0x10] sm:$0xf]
      %v2246 = vld [vmem:[%s2242 + $0x18] sm:$0xf]
      %v2247 = vld [vmem:[%s2242 + $0x20] sm:$0xf]
      %v2248 = vld [vmem:[%s2242 + $0x28] sm:$0xf]
      %v2249 = vld [vmem:[%s2242 + $0x30] sm:$0xf]
      %v2250 = vld [vmem:[%s2242 + $0x38] sm:$0xf]
      %v2251 = vld [vmem:[%s263] sm:$0xf]
      %v2252 = vld [vmem:[%s263 + $0x4] sm:$0xf]
      %v2253 = vld [vmem:[%s263 + $0x8] sm:$0xf]
      %v2254 = vld [vmem:[%s263 + $0xc] sm:$0xf]
      %v2255 = vld [vmem:[%s263 + $0x10] sm:$0xf]
      %v2256 = vld [vmem:[%s263 + $0x14] sm:$0xf]
      %v2257 = vld [vmem:[%s263 + $0x18] sm:$0xf]
      %v2258 = vld [vmem:[%s263 + $0x1c] sm:$0xf]
      %v2259 = vld [vmem:[%s263 + $0x20] sm:$0xf]
      %v2260 = vld [vmem:[%s263 + $0x24] sm:$0xf]
      %v2261 = vld [vmem:[%s263 + $0x28] sm:$0xf]
      %v2262 = vld [vmem:[%s263 + $0x2c] sm:$0xf]
      %v2263 = vld [vmem:[%s263 + $0x30] sm:$0xf]
      %v2264 = vld [vmem:[%s263 + $0x34] sm:$0xf]
      %v2265 = vld [vmem:[%s263 + $0x38] sm:$0xf]
      %v2266 = vld [vmem:[%s263 + $0x3c] sm:$0xf]
      %v2275 = vunpack.c.l.b16 %v2243
      %v2276 = vunpack.c.l.b16 %v2244
      %v2277 = vunpack.c.l.b16 %v2245
      %v2278 = vunpack.c.l.b16 %v2246
      %v2279 = vunpack.c.l.b16 %v2247
      %v2280 = vunpack.c.l.b16 %v2248
      %v2281 = vunpack.c.l.b16 %v2249
      %v2282 = vunpack.c.l.b16 %v2250
      %v2283 = vpack.c.b16 %v2276, %v2275
      %v2284 = vpack.c.b16 %v2278, %v2277
      %v2285 = vpack.c.b16 %v2280, %v2279
      %v2286 = vpack.c.b16 %v2282, %v2281
      %v2307 = vunpack.c.l.b16 %v2251
      %v2308 = vunpack.c.l.b16 %v2252
      %v2309 = vunpack.c.l.b16 %v2253
      %v2310 = vunpack.c.l.b16 %v2254
      %v2311 = vunpack.c.l.b16 %v2255
      %v2312 = vunpack.c.l.b16 %v2256
      %v2313 = vunpack.c.l.b16 %v2257
      %v2314 = vunpack.c.l.b16 %v2258
      %v2315 = vunpack.c.l.b16 %v2259
      %v2316 = vunpack.c.l.b16 %v2260
      %v2317 = vunpack.c.l.b16 %v2261
      %v2318 = vunpack.c.l.b16 %v2262
      %v2319 = vunpack.c.l.b16 %v2263
      %v2320 = vunpack.c.l.b16 %v2264
      %v2321 = vunpack.c.l.b16 %v2265
      %v2322 = vunpack.c.l.b16 %v2266
      %v2323 = vpack.c.b16 %v2308, %v2307
      %v2324 = vpack.c.b16 %v2310, %v2309
      %v2325 = vpack.c.b16 %v2312, %v2311
      %v2326 = vpack.c.b16 %v2314, %v2313
      %v2327 = vpack.c.b16 %v2316, %v2315
      %v2328 = vpack.c.b16 %v2318, %v2317
      %v2329 = vpack.c.b16 %v2320, %v2319
      %v2330 = vpack.c.b16 %v2322, %v2321
      %2339 = vmatprep.subr.bf16.mxu0 0
      %2340 = vmatpush1.bf16.msra.mxu0 %v2323
      %2341 = vmatprep.subr.bf16.mxu0 0
      %2342 = vmatpush1.bf16.msra.mxu0 %v2324
      %2343 = vmatprep.subr.bf16.mxu0 0
      %2344 = vmatpush1.bf16.msra.mxu0 %v2325
      %2345 = vmatprep.subr.bf16.mxu0 0
      %2346 = vmatpush1.bf16.msra.mxu0 %v2326
      %2347 = vmatprep.subr.bf16.mxu0 0
      %2348 = vmatpush1.bf16.msra.mxu0 %v2327
      %2349 = vmatprep.subr.bf16.mxu0 0
      %2350 = vmatpush1.bf16.msra.mxu0 %v2328
      %2351 = vmatprep.subr.bf16.mxu0 0
      %2352 = vmatpush1.bf16.msra.mxu0 %v2329
      %2353 = vmatprep.subr.bf16.mxu0 0
      %2354 = vmatpush1.bf16.msra.mxu0 %v2330
      %2355 = vmatprep.subr.bf16.mxu0 0
      %2356 = vmatpush1.bf16.msra.mxu0 0
      %2357 = vmatprep.subr.bf16.mxu0 0
      %2358 = vmatpush1.bf16.msra.mxu0 0
      %2359 = vmatprep.subr.bf16.mxu0 0
      %2360 = vmatpush1.bf16.msra.mxu0 0
      %2361 = vmatprep.subr.bf16.mxu0 0
      %2362 = vmatpush1.bf16.msra.mxu0 0
      %2363 = vmatprep.subr.bf16.mxu0 0
      %2364 = vmatpush1.bf16.msra.mxu0 0
      %2365 = vmatprep.subr.bf16.mxu0 0
      %2366 = vmatpush1.bf16.msra.mxu0 0
      %2367 = vmatprep.subr.bf16.mxu0 0
      %2368 = vmatpush1.bf16.msra.mxu0 0
      %2369 = vmatprep.subr.bf16.mxu0 0
      %2370 = vmatpush1.bf16.msra.mxu0 0
      %2371 = vmatprep.mubr.bf16.mxu0 0
      %2372 = vmatmul.mubr.bf16.gmra.mrb[0].mxu0 %v2283
      %v2373 = vpop.f32.mrb[0].mxu0
      %v2374 = vadd.f32 0.0, %v2373
      %v2375 = vpop.f32.mrb[0].mxu0
      %v2376 = vpop.f32.mrb[0].mxu0
      %v2377 = vadd.f32 0.0, %v2376
      %v2378 = vpop.f32.mrb[0].mxu0
      %2379 = vmatprep.mubr.bf16.mxu0 0
      %2380 = vmatmul.mubr.bf16.gmra.mrb[0].mxu0 %v2284
      %v2381 = vpop.f32.mrb[0].mxu0
      %v2382 = vadd.f32 0.0, %v2381
      %v2383 = vpop.f32.mrb[0].mxu0
      %v2384 = vpop.f32.mrb[0].mxu0
      %v2385 = vadd.f32 0.0, %v2384
      %v2386 = vpop.f32.mrb[0].mxu0
      %2387 = vmatprep.mubr.bf16.mxu0 0
      %2388 = vmatmul.mubr.bf16.gmra.mrb[0].mxu0 %v2285
      %v2389 = vpop.f32.mrb[0].mxu0
      %v2390 = vadd.f32 0.0, %v2389
      %v2391 = vpop.f32.mrb[0].mxu0
      %v2392 = vpop.f32.mrb[0].mxu0
      %v2393 = vadd.f32 0.0, %v2392
      %v2394 = vpop.f32.mrb[0].mxu0
      %2395 = vmatprep.mubr.bf16.mxu0 0
      %2396 = vmatmul.mubr.bf16.gmra.mrb[0].mxu0 %v2286
      %v2397 = vpop.f32.mrb[0].mxu0
      %v2398 = vadd.f32 0.0, %v2397
      %v2399 = vpop.f32.mrb[0].mxu0
      %v2400 = vpop.f32.mrb[0].mxu0
      %v2401 = vadd.f32 0.0, %v2400
      %v2402 = vpop.f32.mrb[0].mxu0
      %2403 = vdwg.mxu0
      %v2404 = vadd.f32 %v2234, %v2374
      %v2405 = vadd.f32 %v2235, %v2377
      %v2406 = vadd.f32 %v2236, %v2382
      %v2407 = vadd.f32 %v2237, %v2385
      %v2408 = vadd.f32 %v2238, %v2390
      %v2409 = vadd.f32 %v2239, %v2393
      %v2410 = vadd.f32 %v2240, %v2398
      %v2411 = vadd.f32 %v2241, %v2401
      %2412 = vst [vmem:[%s271] sm:$0xff] %v2404
      %2413 = vst [vmem:[%s271 + $0x8] sm:$0xff] %v2405
      %2414 = vst [vmem:[%s271 + $0x10] sm:$0xff] %v2406
      %2415 = vst [vmem:[%s271 + $0x18] sm:$0xff] %v2407
      %2416 = vst [vmem:[%s271 + $0x20] sm:$0xff] %v2408
      %2417 = vst [vmem:[%s271 + $0x28] sm:$0xff] %v2409
      %2418 = vst [vmem:[%s271 + $0x30] sm:$0xff] %v2410
      %2419 = vst [vmem:[%s271 + $0x38] sm:$0xff] %v2411
      %p2420 = scmp.lt.s32.totalorder %s19, 1
      %s2421 = scalar_select %p2420, %s19, 1
      %p2422 = scmp.lt.s32.totalorder %s20, 0
      %s2423 = scalar_select %p2422, %s20, 0
      %s2424 = smul.addr %s2421, 8
      %s2425 = sadd.s32 %s2423, %s2424
      %s2426 = smul.addr %s2425, 8
      %s2427 = scalar_lea.vmem %s4, %s2426
      // Predicated region
      $region37: #{preact_block_forward.5} parent=35 // pred_check
        %p2428 = pneg %p151
      $region38: #{preact_block_forward.5} parent=35 // pred_check_branch
        %2430 = sbr.rel (%p2428) target = $region40
      $region39: #{preact_block_forward.5} parent=35 // pred_region
        _
      $region40: #{preact_block_forward.5} parent=35 // pred_fallthru
        _
    $region36: #{preact_block_forward.5} parent=5 // pred_fallthru
      _
    %p2431 = scmp.le.s32.totalorder 2, %s10
    // Predicated region
    $region41: #{preact_block_forward.5} parent=5 // pred_check
      %p2432 = pneg %p2431
    $region42: #{preact_block_forward.5} parent=5 // pred_check_branch
      %2434 = sbr.rel (%p2432) target = $region44
    $region43: #{preact_block_forward.5} parent=5 // pred_region
      %s2435 = ssub.s32 %s10, 2
      // Predicated region
      $region45: #{preact_block_forward.5} parent=43 // pred_check
        %p2436 = pneg %p157
      $region46: #{preact_block_forward.5} parent=43 // pred_check_branch
        %2438 = sbr.rel (%p2436) target = $region48
      $region47: #{preact_block_forward.5} parent=43 // pred_region
        %p2439 = scmp.lt.s32.totalorder %s21, 1
        %s2440 = scalar_select %p2439, %s21, 1
        %p2441 = scmp.lt.s32.totalorder %s22, 0
        %s2442 = scalar_select %p2441, %s22, 0
        %s2443 = smul.addr %s2440, 8
        %s2444 = sadd.s32 %s2442, %s2443
        %s2445 = smul.addr %s2444, 8
        %s2446 = scalar_lea.vmem %s4, %s2445
      $region48: #{preact_block_forward.5} parent=43 // pred_fallthru
        _
    $region44: #{preact_block_forward.5} parent=5 // pred_fallthru
      _
  $region6: #{preact_block_forward.5} parent=0 // loop_footer
    %s14 = sadd.s32 1, %s10
  $region7: #{preact_block_forward.5} parent=0 // loop_footer_branch
    %9 = sbr.rel target = $region3
  $region8: #{preact_block_forward.5} parent=0 // loop_exit
    _

</llo_original>
